<compile_context>
chip_gen: v6e
topology: v6e:2x2x1
jax: 0.10.0
libtpu: 0.0.40
codegen_flags: <defaults>
</compile_context>

<pallas_src>
import jax
import jax.numpy as jnp
from jax.experimental import pallas as pl
from jax.experimental.pallas import tpu as pltpu


def _make_kernel(num_layers: int, S: int, matmul_dtype):
    """Per-(batch, N-tile) kernel body. num_layers and S are static."""

    def kernel(xyz1_ref, xyz2_ref, p1_ref, p2_ref, *rest):
        out_ref = rest[-1]
        wb = rest[:-1]  # (W0a, W0b, b0, W1, b1, W2, b2, ...)

        p1 = p1_ref[...]              # (D1, TN) float32
        p2 = p2_ref[...]              # (D2, S)  float32
        tn = p1.shape[1]
        d2ch = p2.shape[0]

        if S == 1:
            # points2.repeat(1, 1, N): broadcast the single sampled point
            # along the lane dimension (no MXU round trip).
            interp = jnp.broadcast_to(p2, (d2ch, tn))
        else:
            xyz1 = xyz1_ref[...]      # (C, TN) float32, channels-first
            xyz2 = xyz2_ref[...]      # (C, S)  float32
            cdim = xyz1.shape[0]

            # Squared-distance pieces.  |x1|^2 is constant along S, so it is
            # NOT needed for the argmin -- selection runs on
            #   e2[n, s] = |x2_s|^2 - 2 <x1_n, x2_s>
            # and |x1|^2 is only added back on the selected minima.
            sq2 = jnp.sum(xyz2 * xyz2, axis=0, keepdims=True)          # (1, S)
            cross = jax.lax.dot_general(                               # (TN, S)
                xyz1, xyz2, (((0,), (0,)), ((), ())),
                preferred_element_type=jnp.float32)
            # |x1|^2 as a column via an MXU mat-vec with ones (avoids an XLU
            # transpose of a (1, TN) vector).
            ones_c = jnp.ones((cdim, 1), jnp.float32)
            sq1 = jax.lax.dot_general(                                 # (TN, 1)
                xyz1 * xyz1, ones_c, (((0,), (0,)), ((), ())),
                preferred_element_type=jnp.float32)

            e2 = sq2 - 2.0 * cross                                     # (TN, S)
            iota = jax.lax.broadcasted_iota(jnp.int32, (tn, S), 1)
            big = jnp.float32(3.0e38)

            # 3-NN without gather: three masked-min passes; e2 is overwritten
            # in place and the unnormalized dense weight matrix is accumulated
            # directly (ties broken by smallest index, like torch.topk).
            # NOTE: assumes S >= 3 (torch.topk(k=3) would error otherwise).
            wfull = jnp.zeros((tn, S), jnp.float32)
            wsum = jnp.zeros((tn, 1), jnp.float32)
            for _ in range(3):
                mk = jnp.min(e2, axis=1, keepdims=True)                # (TN, 1)
                cand = jnp.where(e2 == mk, iota, S)
                arg = jnp.min(cand, axis=1, keepdims=True)             # (TN, 1)
                sel = iota == arg                                      # (TN, S)
                dk = jnp.sqrt(jnp.maximum(mk + sq1, 0.0))              # (TN, 1)
                wk = 1.0 / (dk + 1e-10)                                # (TN, 1)
                wfull = wfull + jnp.where(sel, wk, 0.0)
                wsum = wsum + wk
                e2 = jnp.where(sel, big, e2)                           # mask out
            wfull = wfull * (1.0 / wsum)                               # normalize

            # interpolated_points: (D2, TN) = points2 (D2, S) . wfull^T (S, TN)
            interp = jax.lax.dot_general(
                p2.astype(matmul_dtype), wfull.astype(matmul_dtype),
                (((1,), (1,)), ((), ())),
                preferred_element_type=jnp.float32)

        # MLP: relu(BN(conv1x1(x))) with eval-mode BN folded into (W, b).
        # The channel concat is replaced by the split first-layer weight.
        w0a = wb[0][...]              # (C0, D1)  matmul_dtype
        w0b = wb[1][...]              # (C0, D2)  matmul_dtype
        b0 = wb[2][...]               # (C0, 1)   float32
        x = (jax.lax.dot_general(w0a, p1.astype(matmul_dtype),
                                 (((1,), (0,)), ((), ())),
                                 preferred_element_type=jnp.float32)
             + jax.lax.dot_general(w0b, interp.astype(matmul_dtype),
                                   (((1,), (0,)), ((), ())),
                                   preferred_element_type=jnp.float32)
             + b0)
        x = jnp.maximum(x, 0.0)
        for i in range(1, num_layers):
            w = wb[1 + 2 * i][...]    # (Ci, Ci-1) matmul_dtype
            b = wb[2 + 2 * i][...]    # (Ci, 1)    float32
            x = jax.lax.dot_general(w, x.astype(matmul_dtype),
                                    (((1,), (0,)), ((), ())),
                                    preferred_element_type=jnp.float32) + b
            x = jnp.maximum(x, 0.0)

        out_ref[...] = x

    return kernel


def _choose_tile_n(N: int, tile_n):
    if tile_n is not None:
        return tile_n
    if N <= 256:
        return N      # single tile; lane dim equals the full array dim
    return 256        # multiple of 128; conservative enough for v7x VMEM


def pointnet_fp_forward(xyz1, xyz2, points1, points2, Ws, bs, *,
                        matmul_dtype=jnp.bfloat16, tile_n=None,
                        vmem_limit_bytes=48 * 1024 * 1024):
    """Pallas implementation of PointNetFeaturePropagation.forward (eval BN).

    Ws/bs: per-layer effective (out, in) weights and (out,)/(out, 1) biases of
    Conv1d(kernel=1) with eval-mode BatchNorm1d folded in.

    Assumes S >= 3 or S == 1 (torch.topk(k=3) would error for 1 < S < 3).
    TODO(synk): points1=None branch of the reference module is not implemented;
    this wrapper requires points1.
    """
    B, C, N = xyz1.shape
    S = xyz2.shape[2]
    D1 = points1.shape[1]
    D2 = points2.shape[1]
    num_layers = len(Ws)
    Co = Ws[-1].shape[0]

    xyz1 = xyz1.astype(jnp.float32)
    xyz2 = xyz2.astype(jnp.float32)
    points1 = points1.astype(jnp.float32)
    points2 = points2.astype(jnp.float32)

    tile = _choose_tile_n(N, tile_n)
    n_tiles = pl.cdiv(N, tile)
    n_pad = tile * n_tiles
    if n_pad != N:
        pad = ((0, 0), (0, 0), (0, n_pad - N))
        xyz1 = jnp.pad(xyz1, pad)
        points1 = jnp.pad(points1, pad)

    # N-tiled blocks (per batch, per tile); everything else stays resident
    # across the N axis (constant index maps -> no re-DMA).
    in_specs = [
        pl.BlockSpec((None, C, tile), lambda b, t: (b, 0, t)),
        pl.BlockSpec((None, C, S), lambda b, t: (b, 0, 0)),
        pl.BlockSpec((None, D1, tile), lambda b, t: (b, 0, t)),
        pl.BlockSpec((None, D2, S), lambda b, t: (b, 0, 0)),
    ]
    args = [xyz1, xyz2, points1, points2]

    # Split the first-layer weight to avoid the channel concat in the kernel.
    w0 = jnp.asarray(Ws[0])
    w0a = w0[:, :D1].astype(matmul_dtype)
    w0b = w0[:, D1:D1 + D2].astype(matmul_dtype)
    b0 = jnp.reshape(jnp.asarray(bs[0]), (-1, 1)).astype(jnp.float32)
    for arr in (w0a, w0b, b0):
        in_specs.append(pl.BlockSpec(arr.shape, lambda b, t: (0, 0)))
        args.append(arr)
    for wmat, bvec in zip(Ws[1:], bs[1:]):
        wmat = jnp.asarray(wmat).astype(matmul_dtype)
        bvec = jnp.reshape(jnp.asarray(bvec), (-1, 1)).astype(jnp.float32)
        in_specs.append(pl.BlockSpec(wmat.shape, lambda b, t: (0, 0)))
        args.append(wmat)
        in_specs.append(pl.BlockSpec(bvec.shape, lambda b, t: (0, 0)))
        args.append(bvec)

    # Advisory cost hint for XLA scheduling around the custom call.
    flops = 0
    if S > 1:
        flops += 2 * B * n_pad * S * C          # cross-term matmul
        flops += 24 * B * n_pad * S             # 3 masked-min selection passes
        flops += 2 * B * n_pad * S * D2         # interpolation matmul
    last = D1 + D2
    mlp_flops = 0
    for wmat in Ws:
        oc = wmat.shape[0]
        mlp_flops += 2 * last * oc + 2 * oc     # matmul + bias/relu
        last = oc
    flops += B * n_pad * mlp_flops
    transcendentals = 3 * B * n_pad if S > 1 else 0
    bytes_accessed = sum(int(a.size) * a.dtype.itemsize for a in args)
    bytes_accessed += B * Co * n_pad * 4

    out = pl.pallas_call(
        _make_kernel(num_layers, S, matmul_dtype),
        out_shape=jax.ShapeDtypeStruct((B, Co, n_pad), jnp.float32),
        grid=(B, n_tiles),
        in_specs=in_specs,
        out_specs=pl.BlockSpec((None, Co, tile), lambda b, t: (b, 0, t)),
        compiler_params=pltpu.CompilerParams(
            dimension_semantics=("parallel", "parallel"),
            vmem_limit_bytes=vmem_limit_bytes),
        cost_estimate=pl.CostEstimate(
            flops=int(flops), transcendentals=int(transcendentals),
            bytes_accessed=int(bytes_accessed)),
    )(*args)

    if n_pad != N:
        out = out[:, :, :N]
    return out


def _reference(xyz1, xyz2, points1, points2, Ws, bs,
               matmul_dtype=jnp.float32):
    """Pure-JAX reference mirroring the PyTorch forward (eval-mode BN folded).

    matmul_dtype emulates the kernel's MXU operand precision: matmul operands
    are rounded to matmul_dtype, products/accumulation stay float32.
    """
    def q(a):
        return a.astype(matmul_dtype).astype(jnp.float32)

    x1 = jnp.transpose(xyz1, (0, 2, 1)).astype(jnp.float32)   # (B, N, C)
    x2 = jnp.transpose(xyz2, (0, 2, 1)).astype(jnp.float32)   # (B, S, C)
    B, N, _ = x1.shape
    S = x2.shape[1]
    D2 = points2.shape[1]
    p1 = points1.astype(jnp.float32)
    p2 = points2.astype(jnp.float32)
    if S == 1:
        interp = jnp.broadcast_to(p2, (B, D2, N))
    else:
        diff = x1[:, :, None, :] - x2[:, None, :, :]
        d = jnp.sqrt(jnp.maximum(jnp.sum(diff * diff, axis=-1), 0.0))  # (B,N,S)
        neg_d, idx = jax.lax.top_k(-d, 3)
        dk = -neg_d
        w = 1.0 / (dk + 1e-10)
        w = w / jnp.sum(w, axis=-1, keepdims=True)                     # (B,N,3)
        p2t = jnp.transpose(p2, (0, 2, 1))                             # (B,S,D2)
        gathered = jnp.take_along_axis(
            p2t[:, None, :, :], idx[..., None], axis=2)                # (B,N,3,D2)
        interp_nd = jnp.sum(q(w)[..., None] * q(gathered), axis=2)     # (B,N,D2)
        interp = jnp.transpose(interp_nd, (0, 2, 1))                   # (B,D2,N)
    x = jnp.concatenate([p1, interp], axis=1)
    for wmat, bvec in zip(Ws, bs):
        bcol = jnp.reshape(jnp.asarray(bvec), (-1, 1)).astype(jnp.float32)
        x = jnp.einsum("oc,bcn->bon", q(jnp.asarray(wmat)), q(x),
                       precision=jax.lax.Precision.HIGHEST) + bcol[None]
        x = jnp.maximum(x, 0.0)
    return x


if __name__ == "__main__":
    B, C = 2, 3
    N, S = 250, 16          # N not a multiple of the tile -> exercises padding
    D1, D2 = 8, 8
    in_channel = D1 + D2
    mlp = [32, 16]

    key = jax.random.PRNGKey(0)
    k0, k1, k2, k3, kw = jax.random.split(key, 5)
    xyz1 = jax.random.normal(k0, (B, C, N), jnp.float32)
    xyz2 = jax.random.normal(k1, (B, C, S), jnp.float32)
    points1 = jax.random.normal(k2, (B, D1, N), jnp.float32)
    points2 = jax.random.normal(k3, (B, D2, S), jnp.float32)

    # Deterministic parameters: Conv1d(kernel=1) weight/bias + eval-mode
    # BatchNorm1d params, folded into effective (W, b) per layer.
    eps = 1e-5
    Ws, bs = [], []
    last = in_channel
    wkeys = jax.random.split(kw, len(mlp))
    for li, oc in enumerate(mlp):
        w_conv = 0.1 * jax.random.normal(wkeys[li], (oc, last), jnp.float32)
        b_conv = 0.01 * jnp.arange(oc, dtype=jnp.float32)
        gamma = 1.0 + 0.1 * jnp.cos(jnp.arange(oc, dtype=jnp.float32))
        beta = 0.02 * jnp.arange(oc, dtype=jnp.float32)
        run_mean = 0.01 * jnp.arange(oc, dtype=jnp.float32)
        run_var = 1.0 + 0.05 * jnp.arange(oc, dtype=jnp.float32)
        scale = gamma / jnp.sqrt(run_var + eps)
        Ws.append((scale[:, None] * w_conv).astype(jnp.float32))
        bs.append((scale * (b_conv - run_mean) + beta).reshape(oc, 1))
        last = oc

    # 1) f32 MXU operands: exact module semantics.  Tolerance 1e-3 because the
    #    kernel uses the |a|^2+|b|^2-2ab expansion (same as torch.cdist's
    #    default matmul path) while the reference uses explicit differences.
    out_f32 = pointnet_fp_forward(xyz1, xyz2, points1, points2, Ws, bs,
                                  matmul_dtype=jnp.float32, tile_n=128)
    out_f32 = jax.block_until_ready(out_f32)
    ref_f32 = _reference(xyz1, xyz2, points1, points2, Ws, bs)
    assert out_f32.shape == (B, mlp[-1], N), out_f32.shape
    assert jnp.allclose(out_f32, ref_f32, atol=1e-3, rtol=1e-3), (
        float(jnp.max(jnp.abs(out_f32 - ref_f32))))

    # 2) bf16 MXU operands (the performance configuration), checked against a
    #    reference emulating the same operand rounding.
    out_bf16 = pointnet_fp_forward(xyz1, xyz2, points1, points2, Ws, bs,
                                   matmul_dtype=jnp.bfloat16, tile_n=128)
    out_bf16 = jax.block_until_ready(out_bf16)
    ref_bf16 = _reference(xyz1, xyz2, points1, points2, Ws, bs,
                          matmul_dtype=jnp.bfloat16)
    assert jnp.allclose(out_bf16, ref_bf16, atol=2e-2, rtol=2e-2), (
        float(jnp.max(jnp.abs(out_bf16 - ref_bf16))))

    # 3) S == 1 broadcast path.
    out_s1 = pointnet_fp_forward(xyz1, xyz2[:, :, :1], points1,
                                 points2[:, :, :1], Ws, bs,
                                 matmul_dtype=jnp.float32, tile_n=128)
    out_s1 = jax.block_until_ready(out_s1)
    ref_s1 = _reference(xyz1, xyz2[:, :, :1], points1, points2[:, :, :1],
                        Ws, bs)
    assert jnp.allclose(out_s1, ref_s1, atol=1e-3, rtol=1e-3), (
        float(jnp.max(jnp.abs(out_s1 - ref_s1))))

    print("KERNEL_OK")
</pallas_src>

<mosaic_0001>
module attributes {stable_mosaic.version = 11 : i64} {
  func.func @kernel(%arg0: i32, %arg1: i32, %arg2: memref<1x3x128xf32, #tpu.memory_space<vmem>>, %arg3: memref<1x3x16xf32, #tpu.memory_space<vmem>>, %arg4: memref<1x8x128xf32, #tpu.memory_space<vmem>>, %arg5: memref<1x8x16xf32, #tpu.memory_space<vmem>>, %arg6: memref<32x8xf32, #tpu.memory_space<vmem>>, %arg7: memref<32x8xf32, #tpu.memory_space<vmem>>, %arg8: memref<32x1xf32, #tpu.memory_space<vmem>>, %arg9: memref<16x32xf32, #tpu.memory_space<vmem>>, %arg10: memref<16x1xf32, #tpu.memory_space<vmem>>, %arg11: memref<1x16x128xf32, #tpu.memory_space<vmem>>) attributes {dimension_semantics = [#tpu.dimension_semantics<parallel>, #tpu.dimension_semantics<parallel>], iteration_bounds = array<i64: 2, 2>, scalar_prefetch = 0 : i64, scratch_operands = 0 : i64, tpu.core_type = #tpu.core_type<tc>, window_params = [{transform_indices = @transform_0, window_bounds = array<i64: 1, 3, 128>}, {transform_indices = @transform_1, window_bounds = array<i64: 1, 3, 16>}, {transform_indices = @transform_2, window_bounds = array<i64: 1, 8, 128>}, {transform_indices = @transform_3, window_bounds = array<i64: 1, 8, 16>}, {pipeline_mode = #tpu.pipeline_mode<synchronous>, transform_indices = @transform_4, window_bounds = array<i64: 32, 8>}, {pipeline_mode = #tpu.pipeline_mode<synchronous>, transform_indices = @transform_5, window_bounds = array<i64: 32, 8>}, {pipeline_mode = #tpu.pipeline_mode<synchronous>, transform_indices = @transform_6, window_bounds = array<i64: 32, 1>}, {pipeline_mode = #tpu.pipeline_mode<synchronous>, transform_indices = @transform_7, window_bounds = array<i64: 16, 32>}, {pipeline_mode = #tpu.pipeline_mode<synchronous>, transform_indices = @transform_8, window_bounds = array<i64: 16, 1>}, {transform_indices = @transform_9, window_bounds = array<i64: 1, 16, 128>}]} {
    %c0 = arith.constant 0 : index
    %c0_0 = arith.constant 0 : index
    %c0_1 = arith.constant 0 : index
    %0 = vector.load %arg4[%c0, %c0_0, %c0_1] : memref<1x8x128xf32, #tpu.memory_space<vmem>>, vector<1x8x128xf32>
    %1 = vector.shape_cast %0 : vector<1x8x128xf32> to vector<8x128xf32>
    %c0_2 = arith.constant 0 : index
    %c0_3 = arith.constant 0 : index
    %c0_4 = arith.constant 0 : index
    %2 = vector.load %arg5[%c0_2, %c0_3, %c0_4] : memref<1x8x16xf32, #tpu.memory_space<vmem>>, vector<1x8x16xf32>
    %3 = vector.shape_cast %2 : vector<1x8x16xf32> to vector<8x16xf32>
    %c0_5 = arith.constant 0 : index
    %c0_6 = arith.constant 0 : index
    %c0_7 = arith.constant 0 : index
    %4 = vector.load %arg2[%c0_5, %c0_6, %c0_7] : memref<1x3x128xf32, #tpu.memory_space<vmem>>, vector<1x3x128xf32>
    %5 = vector.shape_cast %4 : vector<1x3x128xf32> to vector<3x128xf32>
    %c0_8 = arith.constant 0 : index
    %c0_9 = arith.constant 0 : index
    %c0_10 = arith.constant 0 : index
    %6 = vector.load %arg3[%c0_8, %c0_9, %c0_10] : memref<1x3x16xf32, #tpu.memory_space<vmem>>, vector<1x3x16xf32>
    %7 = vector.shape_cast %6 : vector<1x3x16xf32> to vector<3x16xf32>
    %8 = arith.mulf %7, %7 : vector<3x16xf32>
    %cst = arith.constant dense<0.000000e+00> : vector<16xf32>
    %9 = vector.multi_reduction <add>, %8, %cst [0] : vector<3x16xf32> to vector<16xf32>
    %10 = vector.shape_cast %9 : vector<16xf32> to vector<1x16xf32>
    %cst_11 = arith.constant dense<0.000000e+00> : vector<128x16xf32>
    %11 = tpu.matmul %5, %7, %cst_11 {dimension_numbers = #tpu.dot_dimension_numbers<[0], [0], [1], [1], [0, 1, 1, 1], [], []>} : vector<3x128xf32>, vector<3x16xf32>, vector<128x16xf32> -> vector<128x16xf32>
    %cst_12 = arith.constant 1.000000e+00 : f32
    %12 = vector.broadcast %cst_12 : f32 to vector<3x1xf32>
    %13 = arith.mulf %5, %5 : vector<3x128xf32>
    %cst_13 = arith.constant dense<0.000000e+00> : vector<128x1xf32>
    %14 = tpu.matmul %13, %12, %cst_13 {dimension_numbers = #tpu.dot_dimension_numbers<[0], [0], [1], [1], [0, 1, 1, 1], [], []>} : vector<3x128xf32>, vector<3x1xf32>, vector<128x1xf32> -> vector<128x1xf32>
    %cst_14 = arith.constant 2.000000e+00 : f32
    %15 = vector.broadcast %cst_14 : f32 to vector<128x16xf32>
    %16 = arith.mulf %15, %11 : vector<128x16xf32>
    %17 = vector.broadcast %10 : vector<1x16xf32> to vector<128x16xf32>
    %18 = arith.subf %17, %16 : vector<128x16xf32>
    %19 = tpu.iota {dimensions = array<i32: 1>} : vector<128x16xi32>
    %cst_15 = arith.constant 0.000000e+00 : f32
    %20 = vector.broadcast %cst_15 : f32 to vector<128x16xf32>
    %cst_16 = arith.constant 0.000000e+00 : f32
    %21 = vector.broadcast %cst_16 : f32 to vector<128x1xf32>
    %cst_17 = arith.constant dense<0x7F800000> : vector<128xf32>
    %22 = vector.multi_reduction <minimumf>, %18, %cst_17 [1] : vector<128x16xf32> to vector<128xf32>
    %23 = vector.shape_cast %22 : vector<128xf32> to vector<128x1xf32>
    %24 = vector.broadcast %23 : vector<128x1xf32> to vector<128x16xf32>
    %25 = arith.cmpf oeq, %18, %24 : vector<128x16xf32>
    %c16_i32 = arith.constant 16 : i32
    %26 = vector.broadcast %c16_i32 : i32 to vector<128x16xi32>
    %27 = arith.select %25, %19, %26 : vector<128x16xi1>, vector<128x16xi32>
    %cst_18 = arith.constant dense<2147483647> : vector<128xi32>
    %28 = vector.multi_reduction <minsi>, %27, %cst_18 [1] : vector<128x16xi32> to vector<128xi32>
    %29 = vector.shape_cast %28 : vector<128xi32> to vector<128x1xi32>
    %30 = vector.broadcast %29 : vector<128x1xi32> to vector<128x16xi32>
    %31 = arith.cmpi eq, %19, %30 : vector<128x16xi32>
    %32 = arith.addf %23, %14 : vector<128x1xf32>
    %cst_19 = arith.constant 0.000000e+00 : f32
    %33 = vector.broadcast %cst_19 : f32 to vector<128x1xf32>
    %34 = arith.maximumf %32, %33 : vector<128x1xf32>
    %35 = math.sqrt %34 : vector<128x1xf32>
    %cst_20 = arith.constant 1.000000e-10 : f32
    %36 = vector.broadcast %cst_20 : f32 to vector<128x1xf32>
    %37 = arith.addf %35, %36 : vector<128x1xf32>
    %cst_21 = arith.constant 1.000000e+00 : f32
    %38 = vector.broadcast %cst_21 : f32 to vector<128x1xf32>
    %39 = arith.divf %38, %37 : vector<128x1xf32>
    %cst_22 = arith.constant 0.000000e+00 : f32
    %40 = vector.shape_cast %39 : vector<128x1xf32> to vector<128x1xf32>
    %41 = vector.broadcast %40 : vector<128x1xf32> to vector<128x16xf32>
    %42 = vector.broadcast %cst_22 : f32 to vector<128x16xf32>
    %43 = arith.select %31, %41, %42 : vector<128x16xi1>, vector<128x16xf32>
    %44 = arith.addf %20, %43 : vector<128x16xf32>
    %45 = arith.addf %21, %39 : vector<128x1xf32>
    %cst_23 = arith.constant 3.000000e+38 : f32
    %46 = vector.broadcast %cst_23 : f32 to vector<128x16xf32>
    %47 = arith.select %31, %46, %18 : vector<128x16xi1>, vector<128x16xf32>
    %cst_24 = arith.constant dense<0x7F800000> : vector<128xf32>
    %48 = vector.multi_reduction <minimumf>, %47, %cst_24 [1] : vector<128x16xf32> to vector<128xf32>
    %49 = vector.shape_cast %48 : vector<128xf32> to vector<128x1xf32>
    %50 = vector.broadcast %49 : vector<128x1xf32> to vector<128x16xf32>
    %51 = arith.cmpf oeq, %47, %50 : vector<128x16xf32>
    %c16_i32_25 = arith.constant 16 : i32
    %52 = vector.broadcast %c16_i32_25 : i32 to vector<128x16xi32>
    %53 = arith.select %51, %19, %52 : vector<128x16xi1>, vector<128x16xi32>
    %cst_26 = arith.constant dense<2147483647> : vector<128xi32>
    %54 = vector.multi_reduction <minsi>, %53, %cst_26 [1] : vector<128x16xi32> to vector<128xi32>
    %55 = vector.shape_cast %54 : vector<128xi32> to vector<128x1xi32>
    %56 = vector.broadcast %55 : vector<128x1xi32> to vector<128x16xi32>
    %57 = arith.cmpi eq, %19, %56 : vector<128x16xi32>
    %58 = arith.addf %49, %14 : vector<128x1xf32>
    %cst_27 = arith.constant 0.000000e+00 : f32
    %59 = vector.broadcast %cst_27 : f32 to vector<128x1xf32>
    %60 = arith.maximumf %58, %59 : vector<128x1xf32>
    %61 = math.sqrt %60 : vector<128x1xf32>
    %cst_28 = arith.constant 1.000000e-10 : f32
    %62 = vector.broadcast %cst_28 : f32 to vector<128x1xf32>
    %63 = arith.addf %61, %62 : vector<128x1xf32>
    %cst_29 = arith.constant 1.000000e+00 : f32
    %64 = vector.broadcast %cst_29 : f32 to vector<128x1xf32>
    %65 = arith.divf %64, %63 : vector<128x1xf32>
    %cst_30 = arith.constant 0.000000e+00 : f32
    %66 = vector.shape_cast %65 : vector<128x1xf32> to vector<128x1xf32>
    %67 = vector.broadcast %66 : vector<128x1xf32> to vector<128x16xf32>
    %68 = vector.broadcast %cst_30 : f32 to vector<128x16xf32>
    %69 = arith.select %57, %67, %68 : vector<128x16xi1>, vector<128x16xf32>
    %70 = arith.addf %44, %69 : vector<128x16xf32>
    %71 = arith.addf %45, %65 : vector<128x1xf32>
    %cst_31 = arith.constant 3.000000e+38 : f32
    %72 = vector.broadcast %cst_31 : f32 to vector<128x16xf32>
    %73 = arith.select %57, %72, %47 : vector<128x16xi1>, vector<128x16xf32>
    %cst_32 = arith.constant dense<0x7F800000> : vector<128xf32>
    %74 = vector.multi_reduction <minimumf>, %73, %cst_32 [1] : vector<128x16xf32> to vector<128xf32>
    %75 = vector.shape_cast %74 : vector<128xf32> to vector<128x1xf32>
    %76 = vector.broadcast %75 : vector<128x1xf32> to vector<128x16xf32>
    %77 = arith.cmpf oeq, %73, %76 : vector<128x16xf32>
    %c16_i32_33 = arith.constant 16 : i32
    %78 = vector.broadcast %c16_i32_33 : i32 to vector<128x16xi32>
    %79 = arith.select %77, %19, %78 : vector<128x16xi1>, vector<128x16xi32>
    %cst_34 = arith.constant dense<2147483647> : vector<128xi32>
    %80 = vector.multi_reduction <minsi>, %79, %cst_34 [1] : vector<128x16xi32> to vector<128xi32>
    %81 = vector.shape_cast %80 : vector<128xi32> to vector<128x1xi32>
    %82 = vector.broadcast %81 : vector<128x1xi32> to vector<128x16xi32>
    %83 = arith.cmpi eq, %19, %82 : vector<128x16xi32>
    %84 = arith.addf %75, %14 : vector<128x1xf32>
    %cst_35 = arith.constant 0.000000e+00 : f32
    %85 = vector.broadcast %cst_35 : f32 to vector<128x1xf32>
    %86 = arith.maximumf %84, %85 : vector<128x1xf32>
    %87 = math.sqrt %86 : vector<128x1xf32>
    %cst_36 = arith.constant 1.000000e-10 : f32
    %88 = vector.broadcast %cst_36 : f32 to vector<128x1xf32>
    %89 = arith.addf %87, %88 : vector<128x1xf32>
    %cst_37 = arith.constant 1.000000e+00 : f32
    %90 = vector.broadcast %cst_37 : f32 to vector<128x1xf32>
    %91 = arith.divf %90, %89 : vector<128x1xf32>
    %cst_38 = arith.constant 0.000000e+00 : f32
    %92 = vector.shape_cast %91 : vector<128x1xf32> to vector<128x1xf32>
    %93 = vector.broadcast %92 : vector<128x1xf32> to vector<128x16xf32>
    %94 = vector.broadcast %cst_38 : f32 to vector<128x16xf32>
    %95 = arith.select %83, %93, %94 : vector<128x16xi1>, vector<128x16xf32>
    %96 = arith.addf %70, %95 : vector<128x16xf32>
    %97 = arith.addf %71, %91 : vector<128x1xf32>
    %cst_39 = arith.constant 1.000000e+00 : f32
    %98 = vector.broadcast %cst_39 : f32 to vector<128x1xf32>
    %99 = arith.divf %98, %97 : vector<128x1xf32>
    %100 = vector.broadcast %99 : vector<128x1xf32> to vector<128x16xf32>
    %101 = arith.mulf %96, %100 : vector<128x16xf32>
    %cst_40 = arith.constant dense<0.000000e+00> : vector<8x128xf32>
    %102 = tpu.matmul %3, %101, %cst_40 {dimension_numbers = #tpu.dot_dimension_numbers<[1], [1], [0], [0], [0, 0, 1, 0], [], []>} : vector<8x16xf32>, vector<128x16xf32>, vector<8x128xf32> -> vector<8x128xf32>
    %c0_41 = arith.constant 0 : index
    %c0_42 = arith.constant 0 : index
    %103 = vector.load %arg6[%c0_41, %c0_42] : memref<32x8xf32, #tpu.memory_space<vmem>>, vector<32x8xf32>
    %c0_43 = arith.constant 0 : index
    %c0_44 = arith.constant 0 : index
    %104 = vector.load %arg7[%c0_43, %c0_44] : memref<32x8xf32, #tpu.memory_space<vmem>>, vector<32x8xf32>
    %c0_45 = arith.constant 0 : index
    %c0_46 = arith.constant 0 : index
    %105 = vector.load %arg8[%c0_45, %c0_46] : memref<32x1xf32, #tpu.memory_space<vmem>>, vector<32x1xf32>
    %cst_47 = arith.constant dense<0.000000e+00> : vector<32x128xf32>
    %106 = tpu.matmul %103, %1, %cst_47 {dimension_numbers = #tpu.dot_dimension_numbers<[1], [0], [0], [1], [0, 0, 1, 1], [], []>} : vector<32x8xf32>, vector<8x128xf32>, vector<32x128xf32> -> vector<32x128xf32>
    %cst_48 = arith.constant dense<0.000000e+00> : vector<32x128xf32>
    %107 = tpu.matmul %104, %102, %cst_48 {dimension_numbers = #tpu.dot_dimension_numbers<[1], [0], [0], [1], [0, 0, 1, 1], [], []>} : vector<32x8xf32>, vector<8x128xf32>, vector<32x128xf32> -> vector<32x128xf32>
    %108 = arith.addf %106, %107 : vector<32x128xf32>
    %109 = vector.broadcast %105 : vector<32x1xf32> to vector<32x128xf32>
    %110 = arith.addf %108, %109 : vector<32x128xf32>
    %cst_49 = arith.constant 0.000000e+00 : f32
    %111 = vector.broadcast %cst_49 : f32 to vector<32x128xf32>
    %112 = arith.maximumf %110, %111 : vector<32x128xf32>
    %c0_50 = arith.constant 0 : index
    %c0_51 = arith.constant 0 : index
    %113 = vector.load %arg9[%c0_50, %c0_51] : memref<16x32xf32, #tpu.memory_space<vmem>>, vector<16x32xf32>
    %c0_52 = arith.constant 0 : index
    %c0_53 = arith.constant 0 : index
    %114 = vector.load %arg10[%c0_52, %c0_53] : memref<16x1xf32, #tpu.memory_space<vmem>>, vector<16x1xf32>
    %cst_54 = arith.constant dense<0.000000e+00> : vector<16x128xf32>
    %115 = tpu.matmul %113, %112, %cst_54 {dimension_numbers = #tpu.dot_dimension_numbers<[1], [0], [0], [1], [0, 0, 1, 1], [], []>} : vector<16x32xf32>, vector<32x128xf32>, vector<16x128xf32> -> vector<16x128xf32>
    %116 = vector.broadcast %114 : vector<16x1xf32> to vector<16x128xf32>
    %117 = arith.addf %115, %116 : vector<16x128xf32>
    %cst_55 = arith.constant 0.000000e+00 : f32
    %118 = vector.broadcast %cst_55 : f32 to vector<16x128xf32>
    %119 = arith.maximumf %117, %118 : vector<16x128xf32>
    %c0_56 = arith.constant 0 : index
    %c0_57 = arith.constant 0 : index
    %c0_58 = arith.constant 0 : index
    %120 = vector.load %arg11[%c0_56, %c0_57, %c0_58] : memref<1x16x128xf32, #tpu.memory_space<vmem>>, vector<1x16x128xf32>
    %121 = vector.shape_cast %120 : vector<1x16x128xf32> to vector<16x128xf32>
    %122 = vector.shape_cast %119 : vector<16x128xf32> to vector<1x16x128xf32>
    tpu.vector_store %arg11[%c0_56, %c0_57, %c0_58], %122 {strides = array<i32>} : memref<1x16x128xf32, #tpu.memory_space<vmem>>, vector<1x16x128xf32>,
    return
  }
  func.func @transform_0(%arg0: i32, %arg1: i32) -> (i32, i32, i32) {
    %c0_i32 = arith.constant 0 : i32
    %c0_i32_0 = arith.constant 0 : i32
    return %arg0, %c0_i32, %arg1 : i32, i32, i32
  }
  func.func @transform_1(%arg0: i32, %arg1: i32) -> (i32, i32, i32) {
    %c0_i32 = arith.constant 0 : i32
    %c0_i32_0 = arith.constant 0 : i32
    %c0_i32_1 = arith.constant 0 : i32
    return %arg0, %c0_i32, %c0_i32_0 : i32, i32, i32
  }
  func.func @transform_2(%arg0: i32, %arg1: i32) -> (i32, i32, i32) {
    %c0_i32 = arith.constant 0 : i32
    %c0_i32_0 = arith.constant 0 : i32
    return %arg0, %c0_i32, %arg1 : i32, i32, i32
  }
  func.func @transform_3(%arg0: i32, %arg1: i32) -> (i32, i32, i32) {
    %c0_i32 = arith.constant 0 : i32
    %c0_i32_0 = arith.constant 0 : i32
    %c0_i32_1 = arith.constant 0 : i32
    return %arg0, %c0_i32, %c0_i32_0 : i32, i32, i32
  }
  func.func @transform_4(%arg0: i32, %arg1: i32) -> (i32, i32) {
    %c0_i32 = arith.constant 0 : i32
    %c0_i32_0 = arith.constant 0 : i32
    %c0_i32_1 = arith.constant 0 : i32
    return %c0_i32, %c0_i32_0 : i32, i32
  }
  func.func @transform_5(%arg0: i32, %arg1: i32) -> (i32, i32) {
    %c0_i32 = arith.constant 0 : i32
    %c0_i32_0 = arith.constant 0 : i32
    %c0_i32_1 = arith.constant 0 : i32
    return %c0_i32, %c0_i32_0 : i32, i32
  }
  func.func @transform_6(%arg0: i32, %arg1: i32) -> (i32, i32) {
    %c0_i32 = arith.constant 0 : i32
    %c0_i32_0 = arith.constant 0 : i32
    %c0_i32_1 = arith.constant 0 : i32
    return %c0_i32, %c0_i32_0 : i32, i32
  }
  func.func @transform_7(%arg0: i32, %arg1: i32) -> (i32, i32) {
    %c0_i32 = arith.constant 0 : i32
    %c0_i32_0 = arith.constant 0 : i32
    %c0_i32_1 = arith.constant 0 : i32
    return %c0_i32, %c0_i32_0 : i32, i32
  }
  func.func @transform_8(%arg0: i32, %arg1: i32) -> (i32, i32) {
    %c0_i32 = arith.constant 0 : i32
    %c0_i32_0 = arith.constant 0 : i32
    %c0_i32_1 = arith.constant 0 : i32
    return %c0_i32, %c0_i32_0 : i32, i32
  }
  func.func @transform_9(%arg0: i32, %arg1: i32) -> (i32, i32, i32) {
    %c0_i32 = arith.constant 0 : i32
    %c0_i32_0 = arith.constant 0 : i32
    return %arg0, %c0_i32, %arg1 : i32, i32, i32
  }
}

</mosaic_0001>

<llo_original>
// kernel: tpu_custom_call.1
$region0: #{tpu_custom_call.1}
  #allocation0 [shape = 'u32[]', space=smem, size = 0x4, offset = 0x4, fixed_abs, tag = 'smem constant byte address 0x4 - core index']
  #allocation1 [shape = 'u32[144,128]{1,0:T(1,128)}', space=vmem, size = 0x12000, scoped, tag = 'internal scratch']
  %s0 = inlined_call_operand.vmem [shape: f32[2,3,256], index: 0, kind: input, shape index: {}]
  %s1 = inlined_call_operand.vmem [shape: f32[2,3,16], index: 1, kind: input, shape index: {}]
  %s2 = inlined_call_operand.vmem [shape: f32[2,8,256], index: 2, kind: input, shape index: {}]
  %s3 = inlined_call_operand.vmem [shape: f32[2,8,16], index: 3, kind: input, shape index: {}]
  %s4 = inlined_call_operand.vmem [shape: f32[32,8], index: 4, kind: input, shape index: {}]
  %s5 = inlined_call_operand.vmem [shape: f32[32,8], index: 5, kind: input, shape index: {}]
  %s6 = inlined_call_operand.vmem [shape: f32[32,1], index: 6, kind: input, shape index: {}]
  %s7 = inlined_call_operand.vmem [shape: f32[16,32], index: 7, kind: input, shape index: {}]
  %s8 = inlined_call_operand.vmem [shape: f32[16,1], index: 8, kind: input, shape index: {}]
  %s9 = inlined_call_operand.hbm [shape: f32[2,16,256], index: 9, kind: output, shape index: {}]
  %s10 = sld [smem:[#allocation0]]
  $region69: #{tpu_custom_call.1} parent=0
    _
  %s12 = ssub.s32 1, %s10
  %s13 = scalar_select 0, %s12, %s10
  $region1: #{tpu_custom_call.1} parent=0
    #allocation2 [shape = 'u8[16384]{0}', space=vmem, size = 0x4000, scoped, tag = 'output window, operand 0']
    #allocation3 [shape = 's32[2]{0}', space=sflag, size = 0x8, scoped, tag = 'scoped memory for tpu_custom_call.1']
    %14 = vsyncpa [#allocation3], 0
    %s15 = scalar_lea.sflag [#allocation3], 1
    %16 = vsyncpa %s15, 0
    loop: start=0, step=1, limit=6
    $region2: #{tpu_custom_call.1} parent=1 // loop_pre_header
      _
    $region3: #{tpu_custom_call.1} parent=1 // loop_header
      %s18 = sphi 0, %s22
      %p19 = scmp.ge.s32.totalorder %s18, 6
      %s25 = sphi 0, %s37
      %s26 = sphi 0, %s33
      %s27 = sphi 0, %s25
      %s28 = sphi 0, %s26
      %s29 = sphi 0, %s27
      %s30 = sphi 0, %s28
      %s42 = sphi 0, %s44
      %s45 = sphi 0, %s42
      %s46 = sphi 0, %s45
      %s62 = sphi 0, %s46
      %s68 = sphi 0, %s70
      %s71 = sphi 0, %s68
      %s72 = sphi 0, %s71
      %s88 = sphi 0, %s72
      %s96 = sphi 0, %s98
      %s99 = sphi 0, %s96
      %s100 = sphi 0, %s99
      %s116 = sphi 0, %s100
      %s122 = sphi 0, %s124
      %s125 = sphi 0, %s122
      %s126 = sphi 0, %s125
      %s142 = sphi 0, %s126
      %s146 = sphi 0, %s146
      %s148 = sphi 0, %s146
      %s149 = sphi 0, %s148
      %s163 = sphi 0, %s149
      %s167 = sphi 0, %s167
      %s169 = sphi 0, %s167
      %s170 = sphi 0, %s169
      %s184 = sphi 0, %s170
      %s188 = sphi 0, %s188
      %s190 = sphi 0, %s188
      %s191 = sphi 0, %s190
      %s205 = sphi 0, %s191
      %s209 = sphi 0, %s209
      %s211 = sphi 0, %s209
      %s212 = sphi 0, %s211
      %s226 = sphi 0, %s212
      %s230 = sphi 0, %s230
      %s232 = sphi 0, %s230
      %s233 = sphi 0, %s232
      %s247 = sphi 0, %s233
      %s255 = sphi 0, %s257
      %s258 = sphi 0, %s255
      %s259 = sphi 0, %s258
      %s275 = sphi 0, %s259
    $region4: #{tpu_custom_call.1} parent=1 // loop_header_branch
      %21 = sbr.rel (%p19) target = $region8
    $region5: #{tpu_custom_call.1} parent=1 // loop_body
      %s23 = ssub.s32 %s18, 1
      %s24 = ssub.s32 %s18, 2
      %s31 = sadd.s32 1, %s26
      %p32 = scmp.ge.s32.totalorder %s31, 2
      %s33 = scalar_select %p32, 0, %s31
      %s34 = sadd.s32 1, %s25
      %s35 = scalar_select %p32, %s34, %s25
      %p36 = scmp.ge.s32.totalorder %s35, 2
      %s37 = scalar_select %p36, 0, %s35
      %s38 = ssub.s32 %s25, %s37
      %s39 = ssub.s32 %s26, %s33
      %s40 = sor.u32 %s38, %s39
      %p41 = scmp.eq.s32.totalorder %s40, 0
      %s43 = sadd.s32 %s42, 1
      %s44 = scalar_select %p41, %s42, %s43
      %p47 = pneg %p41
      %p48 = scmp.eq.s32.totalorder %s18, 3
      %p49 = por %p47, %p48
      %p50 = scmp.ne.s32.totalorder %s42, %s45
      %p51 = scmp.eq.s32.totalorder %s18, 0
      %p52 = por %p50, %p51
      %p53 = scmp.ne.s32.totalorder %s42, %s45
      %p54 = scmp.eq.s32.totalorder %s23, 3
      %p55 = por %p53, %p54
      %p56 = scmp.ne.s32.totalorder %s45, %s46
      %p57 = scmp.eq.s32.totalorder %s23, 0
      %p58 = por %p56, %p57
      %p59 = scmp.ne.s32.totalorder %s45, %s46
      %p60 = scmp.eq.s32.totalorder %s24, 3
      %p61 = por %p59, %p60
      %p63 = scmp.ne.s32.totalorder %s46, %s62
      %p64 = scmp.eq.s32.totalorder %s24, 0
      %p65 = por %p63, %p64
      %s66 = ssub.s32 %s25, %s37
      %p67 = scmp.eq.s32.totalorder %s66, 0
      %s69 = sadd.s32 %s68, 1
      %s70 = scalar_select %p67, %s68, %s69
      %p73 = pneg %p67
      %p74 = scmp.eq.s32.totalorder %s18, 3
      %p75 = por %p73, %p74
      %p76 = scmp.ne.s32.totalorder %s68, %s71
      %p77 = scmp.eq.s32.totalorder %s18, 0
      %p78 = por %p76, %p77
      %p79 = scmp.ne.s32.totalorder %s68, %s71
      %p80 = scmp.eq.s32.totalorder %s23, 3
      %p81 = por %p79, %p80
      %p82 = scmp.ne.s32.totalorder %s71, %s72
      %p83 = scmp.eq.s32.totalorder %s23, 0
      %p84 = por %p82, %p83
      %p85 = scmp.ne.s32.totalorder %s71, %s72
      %p86 = scmp.eq.s32.totalorder %s24, 3
      %p87 = por %p85, %p86
      %p89 = scmp.ne.s32.totalorder %s72, %s88
      %p90 = scmp.eq.s32.totalorder %s24, 0
      %p91 = por %p89, %p90
      %s92 = ssub.s32 %s25, %s37
      %s93 = ssub.s32 %s26, %s33
      %s94 = sor.u32 %s92, %s93
      %p95 = scmp.eq.s32.totalorder %s94, 0
      %s97 = sadd.s32 %s96, 1
      %s98 = scalar_select %p95, %s96, %s97
      %p101 = pneg %p95
      %p102 = scmp.eq.s32.totalorder %s18, 3
      %p103 = por %p101, %p102
      %p104 = scmp.ne.s32.totalorder %s96, %s99
      %p105 = scmp.eq.s32.totalorder %s18, 0
      %p106 = por %p104, %p105
      %p107 = scmp.ne.s32.totalorder %s96, %s99
      %p108 = scmp.eq.s32.totalorder %s23, 3
      %p109 = por %p107, %p108
      %p110 = scmp.ne.s32.totalorder %s99, %s100
      %p111 = scmp.eq.s32.totalorder %s23, 0
      %p112 = por %p110, %p111
      %p113 = scmp.ne.s32.totalorder %s99, %s100
      %p114 = scmp.eq.s32.totalorder %s24, 3
      %p115 = por %p113, %p114
      %p117 = scmp.ne.s32.totalorder %s100, %s116
      %p118 = scmp.eq.s32.totalorder %s24, 0
      %p119 = por %p117, %p118
      %s120 = ssub.s32 %s25, %s37
      %p121 = scmp.eq.s32.totalorder %s120, 0
      %s123 = sadd.s32 %s122, 1
      %s124 = scalar_select %p121, %s122, %s123
      %p127 = pneg %p121
      %p128 = scmp.eq.s32.totalorder %s18, 3
      %p129 = por %p127, %p128
      %p130 = scmp.ne.s32.totalorder %s122, %s125
      %p131 = scmp.eq.s32.totalorder %s18, 0
      %p132 = por %p130, %p131
      %p133 = scmp.ne.s32.totalorder %s122, %s125
      %p134 = scmp.eq.s32.totalorder %s23, 3
      %p135 = por %p133, %p134
      %p136 = scmp.ne.s32.totalorder %s125, %s126
      %p137 = scmp.eq.s32.totalorder %s23, 0
      %p138 = por %p136, %p137
      %p139 = scmp.ne.s32.totalorder %s125, %s126
      %p140 = scmp.eq.s32.totalorder %s24, 3
      %p141 = por %p139, %p140
      %p143 = scmp.ne.s32.totalorder %s126, %s142
      %p144 = scmp.eq.s32.totalorder %s24, 0
      %p145 = por %p143, %p144
      %s147 = sadd.s32 %s146, 1
      %p150 = scmp.eq.s32.totalorder %s18, 3
      %p151 = scmp.ne.s32.totalorder %s146, %s148
      %p152 = scmp.eq.s32.totalorder %s18, 0
      %p153 = por %p151, %p152
      %p154 = scmp.ne.s32.totalorder %s146, %s148
      %p155 = scmp.eq.s32.totalorder %s23, 3
      %p156 = por %p154, %p155
      %p157 = scmp.ne.s32.totalorder %s148, %s149
      %p158 = scmp.eq.s32.totalorder %s23, 0
      %p159 = por %p157, %p158
      %p160 = scmp.ne.s32.totalorder %s148, %s149
      %p161 = scmp.eq.s32.totalorder %s24, 3
      %p162 = por %p160, %p161
      %p164 = scmp.ne.s32.totalorder %s149, %s163
      %p165 = scmp.eq.s32.totalorder %s24, 0
      %p166 = por %p164, %p165
      %s168 = sadd.s32 %s167, 1
      %p171 = scmp.eq.s32.totalorder %s18, 3
      %p172 = scmp.ne.s32.totalorder %s167, %s169
      %p173 = scmp.eq.s32.totalorder %s18, 0
      %p174 = por %p172, %p173
      %p175 = scmp.ne.s32.totalorder %s167, %s169
      %p176 = scmp.eq.s32.totalorder %s23, 3
      %p177 = por %p175, %p176
      %p178 = scmp.ne.s32.totalorder %s169, %s170
      %p179 = scmp.eq.s32.totalorder %s23, 0
      %p180 = por %p178, %p179
      %p181 = scmp.ne.s32.totalorder %s169, %s170
      %p182 = scmp.eq.s32.totalorder %s24, 3
      %p183 = por %p181, %p182
      %p185 = scmp.ne.s32.totalorder %s170, %s184
      %p186 = scmp.eq.s32.totalorder %s24, 0
      %p187 = por %p185, %p186
      %s189 = sadd.s32 %s188, 1
      %p192 = scmp.eq.s32.totalorder %s18, 3
      %p193 = scmp.ne.s32.totalorder %s188, %s190
      %p194 = scmp.eq.s32.totalorder %s18, 0
      %p195 = por %p193, %p194
      %p196 = scmp.ne.s32.totalorder %s188, %s190
      %p197 = scmp.eq.s32.totalorder %s23, 3
      %p198 = por %p196, %p197
      %p199 = scmp.ne.s32.totalorder %s190, %s191
      %p200 = scmp.eq.s32.totalorder %s23, 0
      %p201 = por %p199, %p200
      %p202 = scmp.ne.s32.totalorder %s190, %s191
      %p203 = scmp.eq.s32.totalorder %s24, 3
      %p204 = por %p202, %p203
      %p206 = scmp.ne.s32.totalorder %s191, %s205
      %p207 = scmp.eq.s32.totalorder %s24, 0
      %p208 = por %p206, %p207
      %s210 = sadd.s32 %s209, 1
      %p213 = scmp.eq.s32.totalorder %s18, 3
      %p214 = scmp.ne.s32.totalorder %s209, %s211
      %p215 = scmp.eq.s32.totalorder %s18, 0
      %p216 = por %p214, %p215
      %p217 = scmp.ne.s32.totalorder %s209, %s211
      %p218 = scmp.eq.s32.totalorder %s23, 3
      %p219 = por %p217, %p218
      %p220 = scmp.ne.s32.totalorder %s211, %s212
      %p221 = scmp.eq.s32.totalorder %s23, 0
      %p222 = por %p220, %p221
      %p223 = scmp.ne.s32.totalorder %s211, %s212
      %p224 = scmp.eq.s32.totalorder %s24, 3
      %p225 = por %p223, %p224
      %p227 = scmp.ne.s32.totalorder %s212, %s226
      %p228 = scmp.eq.s32.totalorder %s24, 0
      %p229 = por %p227, %p228
      %s231 = sadd.s32 %s230, 1
      %p234 = scmp.eq.s32.totalorder %s18, 3
      %p235 = scmp.ne.s32.totalorder %s230, %s232
      %p236 = scmp.eq.s32.totalorder %s18, 0
      %p237 = por %p235, %p236
      %p238 = scmp.ne.s32.totalorder %s230, %s232
      %p239 = scmp.eq.s32.totalorder %s23, 3
      %p240 = por %p238, %p239
      %p241 = scmp.ne.s32.totalorder %s232, %s233
      %p242 = scmp.eq.s32.totalorder %s23, 0
      %p243 = por %p241, %p242
      %p244 = scmp.ne.s32.totalorder %s232, %s233
      %p245 = scmp.eq.s32.totalorder %s24, 3
      %p246 = por %p244, %p245
      %p248 = scmp.ne.s32.totalorder %s233, %s247
      %p249 = scmp.eq.s32.totalorder %s24, 0
      %p250 = por %p248, %p249
      %s251 = ssub.s32 %s25, %s37
      %s252 = ssub.s32 %s26, %s33
      %s253 = sor.u32 %s251, %s252
      %p254 = scmp.eq.s32.totalorder %s253, 0
      %s256 = sadd.s32 %s255, 1
      %s257 = scalar_select %p254, %s255, %s256
      %p260 = pneg %p254
      %p261 = scmp.eq.s32.totalorder %s18, 3
      %p262 = por %p260, %p261
      %p263 = scmp.ne.s32.totalorder %s255, %s258
      %p264 = scmp.eq.s32.totalorder %s18, 0
      %p265 = por %p263, %p264
      %p266 = scmp.ne.s32.totalorder %s255, %s258
      %p267 = scmp.eq.s32.totalorder %s23, 3
      %p268 = por %p266, %p267
      %p269 = scmp.ne.s32.totalorder %s258, %s259
      %p270 = scmp.eq.s32.totalorder %s23, 0
      %p271 = por %p269, %p270
      %p272 = scmp.ne.s32.totalorder %s258, %s259
      %p273 = scmp.eq.s32.totalorder %s24, 3
      %p274 = por %p272, %p273
      %p276 = scmp.ne.s32.totalorder %s259, %s275
      %p277 = scmp.eq.s32.totalorder %s24, 0
      %p278 = por %p276, %p277
      %p279 = scmp.le.s32.totalorder 1, %s18
      %p280 = scmp.lt.s32.totalorder %s18, 5
      %p281 = pnand %p279, %p280
      %p282 = pneg %p281
      // Predicated region
      $region9: #{tpu_custom_call.1} parent=5 // pred_check
        _
      $region10: #{tpu_custom_call.1} parent=5 // pred_check_branch
        %284 = sbr.rel (%p281) target = $region12
      $region11: #{tpu_custom_call.1} parent=5 // pred_region
        %s285 = ssub.s32 %s18, 1
        // Predicated region
        $region13: #{tpu_custom_call.1} parent=11 // pred_check
          %p286 = pneg %p159
        $region14: #{tpu_custom_call.1} parent=11 // pred_check_branch
          %288 = sbr.rel (%p286) target = $region16
        $region15: #{tpu_custom_call.1} parent=11 // pred_region
          _
        $region16: #{tpu_custom_call.1} parent=11 // pred_fallthru
          _
        // Predicated region
        $region17: #{tpu_custom_call.1} parent=11 // pred_check
          %p289 = pneg %p180
        $region18: #{tpu_custom_call.1} parent=11 // pred_check_branch
          %291 = sbr.rel (%p289) target = $region20
        $region19: #{tpu_custom_call.1} parent=11 // pred_region
          _
        $region20: #{tpu_custom_call.1} parent=11 // pred_fallthru
          _
        // Predicated region
        $region21: #{tpu_custom_call.1} parent=11 // pred_check
          %p292 = pneg %p201
        $region22: #{tpu_custom_call.1} parent=11 // pred_check_branch
          %294 = sbr.rel (%p292) target = $region24
        $region23: #{tpu_custom_call.1} parent=11 // pred_region
          _
        $region24: #{tpu_custom_call.1} parent=11 // pred_fallthru
          _
        // Predicated region
        $region25: #{tpu_custom_call.1} parent=11 // pred_check
          %p295 = pneg %p222
        $region26: #{tpu_custom_call.1} parent=11 // pred_check_branch
          %297 = sbr.rel (%p295) target = $region28
        $region27: #{tpu_custom_call.1} parent=11 // pred_region
          _
        $region28: #{tpu_custom_call.1} parent=11 // pred_fallthru
          _
        // Predicated region
        $region29: #{tpu_custom_call.1} parent=11 // pred_check
          %p298 = pneg %p243
        $region30: #{tpu_custom_call.1} parent=11 // pred_check_branch
          %300 = sbr.rel (%p298) target = $region32
        $region31: #{tpu_custom_call.1} parent=11 // pred_region
          _
        $region32: #{tpu_custom_call.1} parent=11 // pred_fallthru
          _
      $region12: #{tpu_custom_call.1} parent=5 // pred_fallthru
        _
      %p301 = scmp.lt.s32.totalorder %s18, 4
      // Predicated region
      $region33: #{tpu_custom_call.1} parent=5 // pred_check
        %p302 = pneg %p301
      $region34: #{tpu_custom_call.1} parent=5 // pred_check_branch
        %304 = sbr.rel (%p302) target = $region36
      $region35: #{tpu_custom_call.1} parent=5 // pred_region
        // Predicated region
        $region37: #{tpu_custom_call.1} parent=35 // pred_check
          %p305 = pneg %p52
        $region38: #{tpu_custom_call.1} parent=35 // pred_check_branch
          %307 = sbr.rel (%p305) target = $region40
        $region39: #{tpu_custom_call.1} parent=35 // pred_region
          %p308 = scmp.lt.s32.totalorder %s25, 1
          %s309 = scalar_select %p308, %s25, 1
          %p310 = scmp.lt.s32.totalorder %s26, 1
          %s311 = scalar_select %p310, %s26, 1
          %s312 = smul.addr %s309, 2
          %s313 = sadd.s32 %s311, %s312
          %s314 = smul.addr %s313, 4
          %s315 = scalar_lea.vmem %s0, %s314
        $region40: #{tpu_custom_call.1} parent=35 // pred_fallthru
          _
        // Predicated region
        $region41: #{tpu_custom_call.1} parent=35 // pred_check
          %p316 = pneg %p78
        $region42: #{tpu_custom_call.1} parent=35 // pred_check_branch
          %318 = sbr.rel (%p316) target = $region44
        $region43: #{tpu_custom_call.1} parent=35 // pred_region
          %p319 = scmp.lt.s32.totalorder %s25, 1
          %s320 = scalar_select %p319, %s25, 1
          %s321 = smul.addr %s320, 4
          %s322 = scalar_lea.vmem %s1, %s321
        $region44: #{tpu_custom_call.1} parent=35 // pred_fallthru
          _
        // Predicated region
        $region45: #{tpu_custom_call.1} parent=35 // pred_check
          %p323 = pneg %p106
        $region46: #{tpu_custom_call.1} parent=35 // pred_check_branch
          %325 = sbr.rel (%p323) target = $region48
        $region47: #{tpu_custom_call.1} parent=35 // pred_region
          %p326 = scmp.lt.s32.totalorder %s25, 1
          %s327 = scalar_select %p326, %s25, 1
          %p328 = scmp.lt.s32.totalorder %s26, 1
          %s329 = scalar_select %p328, %s26, 1
          %s330 = smul.addr %s327, 2
          %s331 = sadd.s32 %s329, %s330
          %s332 = smul.addr %s331, 8
          %s333 = scalar_lea.vmem %s2, %s332
        $region48: #{tpu_custom_call.1} parent=35 // pred_fallthru
          _
        // Predicated region
        $region49: #{tpu_custom_call.1} parent=35 // pred_check
          %p334 = pneg %p132
        $region50: #{tpu_custom_call.1} parent=35 // pred_check_branch
          %336 = sbr.rel (%p334) target = $region52
        $region51: #{tpu_custom_call.1} parent=35 // pred_region
          %p337 = scmp.lt.s32.totalorder %s25, 1
          %s338 = scalar_select %p337, %s25, 1
          %s339 = smul.addr %s338, 8
          %s340 = scalar_lea.vmem %s3, %s339
        $region52: #{tpu_custom_call.1} parent=35 // pred_fallthru
          _
      $region36: #{tpu_custom_call.1} parent=5 // pred_fallthru
        _
      %p341 = scmp.le.s32.totalorder 1, %s18
      %p342 = scmp.lt.s32.totalorder %s18, 5
      %p343 = pnand %p341, %p342
      %p344 = pneg %p343
      // Predicated region
      $region53: #{tpu_custom_call.1} parent=5 // pred_check
        _
      $region54: #{tpu_custom_call.1} parent=5 // pred_check_branch
        %346 = sbr.rel (%p343) target = $region56
      $region55: #{tpu_custom_call.1} parent=5 // pred_region
        %s347 = ssub.s32 %s18, 1
        %p348 = scmp.lt.s32.totalorder %s27, 1
        %s349 = scalar_select %p348, %s27, 1
        %p350 = scmp.lt.s32.totalorder %s28, 1
        %s351 = scalar_select %p350, %s28, 1
        %s352 = smul.addr %s349, 2
        %s353 = sadd.s32 %s351, %s352
        %s354 = smul.addr %s353, 4
        %s355 = scalar_lea.vmem %s0, %s354
        %p356 = pneg %p58
        %p357 = pneg %p55
        %p358 = scmp.lt.s32.totalorder %s27, 1
        %s359 = scalar_select %p358, %s27, 1
        %s360 = smul.addr %s359, 4
        %s361 = scalar_lea.vmem %s1, %s360
        %p362 = pneg %p84
        %p363 = pneg %p81
        %p364 = scmp.lt.s32.totalorder %s27, 1
        %s365 = scalar_select %p364, %s27, 1
        %p366 = scmp.lt.s32.totalorder %s28, 1
        %s367 = scalar_select %p366, %s28, 1
        %s368 = smul.addr %s365, 2
        %s369 = sadd.s32 %s367, %s368
        %s370 = smul.addr %s369, 8
        %s371 = scalar_lea.vmem %s2, %s370
        %p372 = pneg %p112
        %p373 = pneg %p109
        %p374 = scmp.lt.s32.totalorder %s27, 1
        %s375 = scalar_select %p374, %s27, 1
        %s376 = smul.addr %s375, 8
        %s377 = scalar_lea.vmem %s3, %s376
        %p378 = pneg %p138
        %p379 = pneg %p135
        %p380 = pneg %p159
        %p381 = pneg %p156
        %p382 = pneg %p180
        %p383 = pneg %p177
        %p384 = pneg %p201
        %p385 = pneg %p198
        %p386 = pneg %p222
        %p387 = pneg %p219
        %p388 = pneg %p243
        %p389 = pneg %p240
        %p390 = pneg %p271
        %p391 = pneg %p268
        %s392 = sand.u32 %s258, 1
        %s393 = scalar_lea.sflag [#allocation3], %s392
        %s394 = sand.u32 %s258, 1
        %s395 = smul.addr %s394, 16
        %s396 = scalar_lea.vmem [#allocation2], %s395
        %p397 = scmp.lt.s32.totalorder %s27, 1
        %s398 = scalar_select %p397, %s27, 1
        %p399 = scmp.lt.s32.totalorder %s28, 1
        %s400 = scalar_select %p399, %s28, 1
        %s401 = smul.addr %s398, 2
        %s402 = sadd.s32 %s400, %s401
        %s403 = smul.addr %s402, 4
        %s404 = scalar_lea.vmem %s0, %s403
        %p405 = scmp.lt.s32.totalorder %s27, 1
        %s406 = scalar_select %p405, %s27, 1
        %s407 = smul.addr %s406, 4
        %s408 = scalar_lea.vmem %s1, %s407
        %p409 = scmp.lt.s32.totalorder %s27, 1
        %s410 = scalar_select %p409, %s27, 1
        %p411 = scmp.lt.s32.totalorder %s28, 1
        %s412 = scalar_select %p411, %s28, 1
        %s413 = smul.addr %s410, 2
        %s414 = sadd.s32 %s412, %s413
        %s415 = smul.addr %s414, 8
        %s416 = scalar_lea.vmem %s2, %s415
        %p417 = scmp.lt.s32.totalorder %s27, 1
        %s418 = scalar_select %p417, %s27, 1
        %s419 = smul.addr %s418, 8
        %s420 = scalar_lea.vmem %s3, %s419
        %v421 = vld [vmem:[%s416] sm:$0xff]
        %v422 = vld [vmem:[%s420] sm:$0xff]
        %v423 = vld [vmem:[%s404] sm:$0x7]
        %v424 = vld [vmem:[%s408] sm:$0x7]
        %v425 = vmul.f32 %v424, %v424
        %vm426 = vcmask 124928
        %v427 = vsel %vm426, %v425, 0.0
        %v428 = vrot.slane %v427, 4
        %v429 = vadd.f32 %v427, %v428
        %v430 = vrot.slane %v429, 2
        %v431 = vadd.f32 %v429, %v430
        %v432 = vrot.slane %v431, 1
        %v433 = vadd.f32 %v431, %v432
        %434 = vxpose.xlu0.b32.start [1/16] %v423, 128
        %435 = vxpose.xlu0.b32.cont [2/16] 0.0, 128
        %436 = vxpose.xlu0.b32.cont [3/16] 0.0, 128
        %437 = vxpose.xlu0.b32.cont [4/16] 0.0, 128
        %438 = vxpose.xlu0.b32.cont [5/16] 0.0, 128
        %439 = vxpose.xlu0.b32.cont [6/16] 0.0, 128
        %440 = vxpose.xlu0.b32.cont [7/16] 0.0, 128
        %441 = vxpose.xlu0.b32.cont [8/16] 0.0, 128
        %442 = vxpose.xlu0.b32.cont [9/16] 0.0, 128
        %443 = vxpose.xlu0.b32.cont [10/16] 0.0, 128
        %444 = vxpose.xlu0.b32.cont [11/16] 0.0, 128
        %445 = vxpose.xlu0.b32.cont [12/16] 0.0, 128
        %446 = vxpose.xlu0.b32.cont [13/16] 0.0, 128
        %447 = vxpose.xlu0.b32.cont [14/16] 0.0, 128
        %448 = vxpose.xlu0.b32.cont [15/16] 0.0, 128
        %449 = vxpose.xlu0.b32.end [16/16] 0.0, 128
        %v450 = vpop.trf.xlu0
        %v451 = vpop.trf.xlu0
        %v452 = vpop.trf.xlu0
        %v453 = vpop.trf.xlu0
        %v454 = vpop.trf.xlu0
        %v455 = vpop.trf.xlu0
        %v456 = vpop.trf.xlu0
        %v457 = vpop.trf.xlu0
        %v458 = vpop.trf.xlu0
        %v459 = vpop.trf.xlu0
        %v460 = vpop.trf.xlu0
        %v461 = vpop.trf.xlu0
        %v462 = vpop.trf.xlu0
        %v463 = vpop.trf.xlu0
        %v464 = vpop.trf.xlu0
        %v465 = vpop.trf.xlu0
        %vm466 = vcmask 23552
        %v468 = vsel %vm466, %v450, 0
        %v471 = vsel %vm466, %v451, 0
        %v474 = vsel %vm466, %v452, 0
        %v477 = vsel %vm466, %v453, 0
        %v480 = vsel %vm466, %v454, 0
        %v483 = vsel %vm466, %v455, 0
        %v486 = vsel %vm466, %v456, 0
        %v489 = vsel %vm466, %v457, 0
        %v492 = vsel %vm466, %v458, 0
        %v495 = vsel %vm466, %v459, 0
        %v498 = vsel %vm466, %v460, 0
        %v501 = vsel %vm466, %v461, 0
        %v504 = vsel %vm466, %v462, 0
        %v507 = vsel %vm466, %v463, 0
        %v510 = vsel %vm466, %v464, 0
        %v513 = vsel %vm466, %v465, 0
        %vm515 = vcmask 1042432
        %v517 = vsel %vm515, %v424, 0
        %519 = vmatprep.subr.mxu0 0.0
        %520 = vmatpush1.msra.mxu0 0.0
        %521 = vmatprep.subr.mxu0 0.0
        %522 = vmatpush1.msra.mxu0 0.0
        %523 = vmatprep.subr.mxu0 0.0
        %524 = vmatpush1.msra.mxu0 0.0
        %525 = vmatprep.subr.mxu0 0.0
        %526 = vmatpush1.msra.mxu0 0.0
        %527 = vmatprep.subr.mxu0 0.0
        %528 = vmatpush1.msra.mxu0 0.0
        %529 = vmatprep.subr.mxu0 0.0
        %530 = vmatpush1.msra.mxu0 0.0
        %531 = vmatprep.subr.mxu0 0.0
        %532 = vmatpush1.msra.mxu0 0.0
        %533 = vmatprep.subr.mxu0 0.0
        %534 = vmatpush1.msra.mxu0 0.0
        %535 = vmatprep.subr.mxu0 0.0
        %536 = vmatpush1.msra.mxu0 0.0
        %537 = vmatprep.subr.mxu0 0.0
        %538 = vmatpush1.msra.mxu0 0.0
        %539 = vmatprep.subr.mxu0 0.0
        %540 = vmatpush1.msra.mxu0 0.0
        %541 = vmatprep.subr.mxu0 0.0
        %542 = vmatpush1.msra.mxu0 0.0
        %543 = vmatprep.subr.mxu0 0.0
        %544 = vmatpush1.msra.mxu0 0.0
        %545 = vmatprep.subr.mxu0 0.0
        %546 = vmatpush1.msra.mxu0 0.0
        %547 = vmatprep.subr.mxu0 0.0
        %548 = vmatpush1.msra.mxu0 0.0
        %549 = vmatprep.subr.mxu0 0.0
        %550 = vmatpush1.msra.mxu0 %v517
        %551 = vmatprep.subr.mxu0 0.0
        %552 = vmatpush2.msra.mxu0 0.0
        %553 = vmatprep.subr.mxu0 0.0
        %554 = vmatpush2.msra.mxu0 0.0
        %555 = vmatprep.subr.mxu0 0.0
        %556 = vmatpush2.msra.mxu0 0.0
        %557 = vmatprep.subr.mxu0 0.0
        %558 = vmatpush2.msra.mxu0 0.0
        %559 = vmatprep.subr.mxu0 0.0
        %560 = vmatpush2.msra.mxu0 0.0
        %561 = vmatprep.subr.mxu0 0.0
        %562 = vmatpush2.msra.mxu0 0.0
        %563 = vmatprep.subr.mxu0 0.0
        %564 = vmatpush2.msra.mxu0 0.0
        %565 = vmatprep.subr.mxu0 0.0
        %566 = vmatpush2.msra.mxu0 0.0
        %567 = vmatprep.subr.mxu0 0.0
        %568 = vmatpush2.msra.mxu0 0.0
        %569 = vmatprep.subr.mxu0 0.0
        %570 = vmatpush2.msra.mxu0 0.0
        %571 = vmatprep.subr.mxu0 0.0
        %572 = vmatpush2.msra.mxu0 0.0
        %573 = vmatprep.subr.mxu0 0.0
        %574 = vmatpush2.msra.mxu0 0.0
        %575 = vmatprep.subr.mxu0 0.0
        %576 = vmatpush2.msra.mxu0 0.0
        %577 = vmatprep.subr.mxu0 0.0
        %578 = vmatpush2.msra.mxu0 0.0
        %579 = vmatprep.subr.mxu0 0.0
        %580 = vmatpush2.msra.mxu0 0.0
        %581 = vmatprep.subr.mxu0 0.0
        %582 = vmatpush2.msra.mxu0 0.0
        %583 = vmatprep.mubr.f32.mxu0 0.0
        %584 = vmatmul.mubr.f32.gmra.mxu0 %v468
        %v585 = vpop.f32.mrf.mxu0
        %v586 = vadd.f32 0.0, %v585
        %v587 = vpop.f32.mrf.mxu0
        %588 = vmatprep.mubr.f32.mxu0 0.0
        %589 = vmatmul.mubr.f32.gmra.mxu0 %v471
        %v590 = vpop.f32.mrf.mxu0
        %v591 = vadd.f32 0.0, %v590
        %v592 = vpop.f32.mrf.mxu0
        %593 = vmatprep.mubr.f32.mxu0 0.0
        %594 = vmatmul.mubr.f32.gmra.mxu0 %v474
        %v595 = vpop.f32.mrf.mxu0
        %v596 = vadd.f32 0.0, %v595
        %v597 = vpop.f32.mrf.mxu0
        %598 = vmatprep.mubr.f32.mxu0 0.0
        %599 = vmatmul.mubr.f32.gmra.mxu0 %v477
        %v600 = vpop.f32.mrf.mxu0
        %v601 = vadd.f32 0.0, %v600
        %v602 = vpop.f32.mrf.mxu0
        %603 = vmatprep.mubr.f32.mxu0 0.0
        %604 = vmatmul.mubr.f32.gmra.mxu0 %v480
        %v605 = vpop.f32.mrf.mxu0
        %v606 = vadd.f32 0.0, %v605
        %v607 = vpop.f32.mrf.mxu0
        %608 = vmatprep.mubr.f32.mxu0 0.0
        %609 = vmatmul.mubr.f32.gmra.mxu0 %v483
        %v610 = vpop.f32.mrf.mxu0
        %v611 = vadd.f32 0.0, %v610
        %v612 = vpop.f32.mrf.mxu0
        %613 = vmatprep.mubr.f32.mxu0 0.0
        %614 = vmatmul.mubr.f32.gmra.mxu0 %v486
        %v615 = vpop.f32.mrf.mxu0
        %v616 = vadd.f32 0.0, %v615
        %v617 = vpop.f32.mrf.mxu0
        %618 = vmatprep.mubr.f32.mxu0 0.0
        %619 = vmatmul.mubr.f32.gmra.mxu0 %v489
        %v620 = vpop.f32.mrf.mxu0
        %v621 = vadd.f32 0.0, %v620
        %v622 = vpop.f32.mrf.mxu0
        %623 = vmatprep.mubr.f32.mxu0 0.0
        %624 = vmatmul.mubr.f32.gmra.mxu0 %v492
        %v625 = vpop.f32.mrf.mxu0
        %v626 = vadd.f32 0.0, %v625
        %v627 = vpop.f32.mrf.mxu0
        %628 = vmatprep.mubr.f32.mxu0 0.0
        %629 = vmatmul.mubr.f32.gmra.mxu0 %v495
        %v630 = vpop.f32.mrf.mxu0
        %v631 = vadd.f32 0.0, %v630
        %v632 = vpop.f32.mrf.mxu0
        %633 = vmatprep.mubr.f32.mxu0 0.0
        %634 = vmatmul.mubr.f32.gmra.mxu0 %v498
        %v635 = vpop.f32.mrf.mxu0
        %v636 = vadd.f32 0.0, %v635
        %v637 = vpop.f32.mrf.mxu0
        %638 = vmatprep.mubr.f32.mxu0 0.0
        %639 = vmatmul.mubr.f32.gmra.mxu0 %v501
        %v640 = vpop.f32.mrf.mxu0
        %v641 = vadd.f32 0.0, %v640
        %v642 = vpop.f32.mrf.mxu0
        %643 = vmatprep.mubr.f32.mxu0 0.0
        %644 = vmatmul.mubr.f32.gmra.mxu0 %v504
        %v645 = vpop.f32.mrf.mxu0
        %v646 = vadd.f32 0.0, %v645
        %v647 = vpop.f32.mrf.mxu0
        %648 = vmatprep.mubr.f32.mxu0 0.0
        %649 = vmatmul.mubr.f32.gmra.mxu0 %v507
        %v650 = vpop.f32.mrf.mxu0
        %v651 = vadd.f32 0.0, %v650
        %v652 = vpop.f32.mrf.mxu0
        %653 = vmatprep.mubr.f32.mxu0 0.0
        %654 = vmatmul.mubr.f32.gmra.mxu0 %v510
        %v655 = vpop.f32.mrf.mxu0
        %v656 = vadd.f32 0.0, %v655
        %v657 = vpop.f32.mrf.mxu0
        %658 = vmatprep.mubr.f32.mxu0 0.0
        %659 = vmatmul.mubr.f32.gmra.mxu0 %v513
        %v660 = vpop.f32.mrf.mxu0
        %v661 = vadd.f32 0.0, %v660
        %v662 = vpop.f32.mrf.mxu0
        %663 = vdwg.mxu0
        %v664 = vmul.f32 %v423, %v423
        %665 = vxpose.xlu0.b32.start [1/16] %v664, 128
        %666 = vxpose.xlu0.b32.cont [2/16] 0.0, 128
        %667 = vxpose.xlu0.b32.cont [3/16] 0.0, 128
        %668 = vxpose.xlu0.b32.cont [4/16] 0.0, 128
        %669 = vxpose.xlu0.b32.cont [5/16] 0.0, 128
        %670 = vxpose.xlu0.b32.cont [6/16] 0.0, 128
        %671 = vxpose.xlu0.b32.cont [7/16] 0.0, 128
        %672 = vxpose.xlu0.b32.cont [8/16] 0.0, 128
        %673 = vxpose.xlu0.b32.cont [9/16] 0.0, 128
        %674 = vxpose.xlu0.b32.cont [10/16] 0.0, 128
        %675 = vxpose.xlu0.b32.cont [11/16] 0.0, 128
        %676 = vxpose.xlu0.b32.cont [12/16] 0.0, 128
        %677 = vxpose.xlu0.b32.cont [13/16] 0.0, 128
        %678 = vxpose.xlu0.b32.cont [14/16] 0.0, 128
        %679 = vxpose.xlu0.b32.cont [15/16] 0.0, 128
        %680 = vxpose.xlu0.b32.end [16/16] 0.0, 128
        %v681 = vpop.trf.xlu0
        %v682 = vpop.trf.xlu0
        %v683 = vpop.trf.xlu0
        %v684 = vpop.trf.xlu0
        %v685 = vpop.trf.xlu0
        %v686 = vpop.trf.xlu0
        %v687 = vpop.trf.xlu0
        %v688 = vpop.trf.xlu0
        %v689 = vpop.trf.xlu0
        %v690 = vpop.trf.xlu0
        %v691 = vpop.trf.xlu0
        %v692 = vpop.trf.xlu0
        %v693 = vpop.trf.xlu0
        %v694 = vpop.trf.xlu0
        %v695 = vpop.trf.xlu0
        %v696 = vpop.trf.xlu0
        %v698 = vsel %vm466, %v681, 0
        %v701 = vsel %vm466, %v682, 0
        %v704 = vsel %vm466, %v683, 0
        %v707 = vsel %vm466, %v684, 0
        %v710 = vsel %vm466, %v685, 0
        %v713 = vsel %vm466, %v686, 0
        %v716 = vsel %vm466, %v687, 0
        %v719 = vsel %vm466, %v688, 0
        %v722 = vsel %vm466, %v689, 0
        %v725 = vsel %vm466, %v690, 0
        %v728 = vsel %vm466, %v691, 0
        %v731 = vsel %vm466, %v692, 0
        %v734 = vsel %vm466, %v693, 0
        %v737 = vsel %vm466, %v694, 0
        %v740 = vsel %vm466, %v695, 0
        %v743 = vsel %vm466, %v696, 0
        %v746 = vsel %vm515, 1.0, 0
        %748 = vmatprep.subr.mxu0 0.0
        %749 = vmatpush1.msra.mxu0 0.0
        %750 = vmatprep.subr.mxu0 0.0
        %751 = vmatpush1.msra.mxu0 0.0
        %752 = vmatprep.subr.mxu0 0.0
        %753 = vmatpush1.msra.mxu0 0.0
        %754 = vmatprep.subr.mxu0 0.0
        %755 = vmatpush1.msra.mxu0 0.0
        %756 = vmatprep.subr.mxu0 0.0
        %757 = vmatpush1.msra.mxu0 0.0
        %758 = vmatprep.subr.mxu0 0.0
        %759 = vmatpush1.msra.mxu0 0.0
        %760 = vmatprep.subr.mxu0 0.0
        %761 = vmatpush1.msra.mxu0 0.0
        %762 = vmatprep.subr.mxu0 0.0
        %763 = vmatpush1.msra.mxu0 0.0
        %764 = vmatprep.subr.mxu0 0.0
        %765 = vmatpush1.msra.mxu0 0.0
        %766 = vmatprep.subr.mxu0 0.0
        %767 = vmatpush1.msra.mxu0 0.0
        %768 = vmatprep.subr.mxu0 0.0
        %769 = vmatpush1.msra.mxu0 0.0
        %770 = vmatprep.subr.mxu0 0.0
        %771 = vmatpush1.msra.mxu0 0.0
        %772 = vmatprep.subr.mxu0 0.0
        %773 = vmatpush1.msra.mxu0 0.0
        %774 = vmatprep.subr.mxu0 0.0
        %775 = vmatpush1.msra.mxu0 0.0
        %776 = vmatprep.subr.mxu0 0.0
        %777 = vmatpush1.msra.mxu0 0.0
        %778 = vmatprep.subr.mxu0 0.0
        %779 = vmatpush1.msra.mxu0 %v746
        %780 = vmatprep.subr.mxu0 0.0
        %781 = vmatpush2.msra.mxu0 0.0
        %782 = vmatprep.subr.mxu0 0.0
        %783 = vmatpush2.msra.mxu0 0.0
        %784 = vmatprep.subr.mxu0 0.0
        %785 = vmatpush2.msra.mxu0 0.0
        %786 = vmatprep.subr.mxu0 0.0
        %787 = vmatpush2.msra.mxu0 0.0
        %788 = vmatprep.subr.mxu0 0.0
        %789 = vmatpush2.msra.mxu0 0.0
        %790 = vmatprep.subr.mxu0 0.0
        %791 = vmatpush2.msra.mxu0 0.0
        %792 = vmatprep.subr.mxu0 0.0
        %793 = vmatpush2.msra.mxu0 0.0
        %794 = vmatprep.subr.mxu0 0.0
        %795 = vmatpush2.msra.mxu0 0.0
        %796 = vmatprep.subr.mxu0 0.0
        %797 = vmatpush2.msra.mxu0 0.0
        %798 = vmatprep.subr.mxu0 0.0
        %799 = vmatpush2.msra.mxu0 0.0
        %800 = vmatprep.subr.mxu0 0.0
        %801 = vmatpush2.msra.mxu0 0.0
        %802 = vmatprep.subr.mxu0 0.0
        %803 = vmatpush2.msra.mxu0 0.0
        %804 = vmatprep.subr.mxu0 0.0
        %805 = vmatpush2.msra.mxu0 0.0
        %806 = vmatprep.subr.mxu0 0.0
        %807 = vmatpush2.msra.mxu0 0.0
        %808 = vmatprep.subr.mxu0 0.0
        %809 = vmatpush2.msra.mxu0 0.0
        %810 = vmatprep.subr.mxu0 0.0
        %811 = vmatpush2.msra.mxu0 0.0
        %812 = vmatprep.mubr.f32.mxu0 0.0
        %813 = vmatmul.mubr.f32.gmra.mxu0 %v698
        %v814 = vpop.f32.mrf.mxu0
        %v815 = vadd.f32 0.0, %v814
        %v816 = vpop.f32.mrf.mxu0
        %817 = vmatprep.mubr.f32.mxu0 0.0
        %818 = vmatmul.mubr.f32.gmra.mxu0 %v701
        %v819 = vpop.f32.mrf.mxu0
        %v820 = vadd.f32 0.0, %v819
        %v821 = vpop.f32.mrf.mxu0
        %822 = vmatprep.mubr.f32.mxu0 0.0
        %823 = vmatmul.mubr.f32.gmra.mxu0 %v704
        %v824 = vpop.f32.mrf.mxu0
        %v825 = vadd.f32 0.0, %v824
        %v826 = vpop.f32.mrf.mxu0
        %827 = vmatprep.mubr.f32.mxu0 0.0
        %828 = vmatmul.mubr.f32.gmra.mxu0 %v707
        %v829 = vpop.f32.mrf.mxu0
        %v830 = vadd.f32 0.0, %v829
        %v831 = vpop.f32.mrf.mxu0
        %832 = vmatprep.mubr.f32.mxu0 0.0
        %833 = vmatmul.mubr.f32.gmra.mxu0 %v710
        %v834 = vpop.f32.mrf.mxu0
        %v835 = vadd.f32 0.0, %v834
        %v836 = vpop.f32.mrf.mxu0
        %837 = vmatprep.mubr.f32.mxu0 0.0
        %838 = vmatmul.mubr.f32.gmra.mxu0 %v713
        %v839 = vpop.f32.mrf.mxu0
        %v840 = vadd.f32 0.0, %v839
        %v841 = vpop.f32.mrf.mxu0
        %842 = vmatprep.mubr.f32.mxu0 0.0
        %843 = vmatmul.mubr.f32.gmra.mxu0 %v716
        %v844 = vpop.f32.mrf.mxu0
        %v845 = vadd.f32 0.0, %v844
        %v846 = vpop.f32.mrf.mxu0
        %847 = vmatprep.mubr.f32.mxu0 0.0
        %848 = vmatmul.mubr.f32.gmra.mxu0 %v719
        %v849 = vpop.f32.mrf.mxu0
        %v850 = vadd.f32 0.0, %v849
        %v851 = vpop.f32.mrf.mxu0
        %852 = vmatprep.mubr.f32.mxu0 0.0
        %853 = vmatmul.mubr.f32.gmra.mxu0 %v722
        %v854 = vpop.f32.mrf.mxu0
        %v855 = vadd.f32 0.0, %v854
        %v856 = vpop.f32.mrf.mxu0
        %857 = vmatprep.mubr.f32.mxu0 0.0
        %858 = vmatmul.mubr.f32.gmra.mxu0 %v725
        %v859 = vpop.f32.mrf.mxu0
        %v860 = vadd.f32 0.0, %v859
        %v861 = vpop.f32.mrf.mxu0
        %862 = vmatprep.mubr.f32.mxu0 0.0
        %863 = vmatmul.mubr.f32.gmra.mxu0 %v728
        %v864 = vpop.f32.mrf.mxu0
        %v865 = vadd.f32 0.0, %v864
        %v866 = vpop.f32.mrf.mxu0
        %867 = vmatprep.mubr.f32.mxu0 0.0
        %868 = vmatmul.mubr.f32.gmra.mxu0 %v731
        %v869 = vpop.f32.mrf.mxu0
        %v870 = vadd.f32 0.0, %v869
        %v871 = vpop.f32.mrf.mxu0
        %872 = vmatprep.mubr.f32.mxu0 0.0
        %873 = vmatmul.mubr.f32.gmra.mxu0 %v734
        %v874 = vpop.f32.mrf.mxu0
        %v875 = vadd.f32 0.0, %v874
        %v876 = vpop.f32.mrf.mxu0
        %877 = vmatprep.mubr.f32.mxu0 0.0
        %878 = vmatmul.mubr.f32.gmra.mxu0 %v737
        %v879 = vpop.f32.mrf.mxu0
        %v880 = vadd.f32 0.0, %v879
        %v881 = vpop.f32.mrf.mxu0
        %882 = vmatprep.mubr.f32.mxu0 0.0
        %883 = vmatmul.mubr.f32.gmra.mxu0 %v740
        %v884 = vpop.f32.mrf.mxu0
        %v885 = vadd.f32 0.0, %v884
        %v886 = vpop.f32.mrf.mxu0
        %887 = vmatprep.mubr.f32.mxu0 0.0
        %888 = vmatmul.mubr.f32.gmra.mxu0 %v743
        %v889 = vpop.f32.mrf.mxu0
        %v890 = vadd.f32 0.0, %v889
        %v891 = vpop.f32.mrf.mxu0
        %892 = vdwg.mxu0
        %v893 = vmul.f32 %v586, 2.0
        %v894 = vmul.f32 %v591, 2.0
        %v895 = vmul.f32 %v596, 2.0
        %v896 = vmul.f32 %v601, 2.0
        %v897 = vmul.f32 %v606, 2.0
        %v898 = vmul.f32 %v611, 2.0
        %v899 = vmul.f32 %v616, 2.0
        %v900 = vmul.f32 %v621, 2.0
        %v901 = vmul.f32 %v626, 2.0
        %v902 = vmul.f32 %v631, 2.0
        %v903 = vmul.f32 %v636, 2.0
        %v904 = vmul.f32 %v641, 2.0
        %v905 = vmul.f32 %v646, 2.0
        %v906 = vmul.f32 %v651, 2.0
        %v907 = vmul.f32 %v656, 2.0
        %v908 = vmul.f32 %v661, 2.0
        %v909 = vsub.f32 %v433, %v893
        %v910 = vsub.f32 %v433, %v894
        %v911 = vsub.f32 %v433, %v895
        %v912 = vsub.f32 %v433, %v896
        %v913 = vsub.f32 %v433, %v897
        %v914 = vsub.f32 %v433, %v898
        %v915 = vsub.f32 %v433, %v899
        %v916 = vsub.f32 %v433, %v900
        %v917 = vsub.f32 %v433, %v901
        %v918 = vsub.f32 %v433, %v902
        %v919 = vsub.f32 %v433, %v903
        %v920 = vsub.f32 %v433, %v904
        %v921 = vsub.f32 %v433, %v905
        %v922 = vsub.f32 %v433, %v906
        %v923 = vsub.f32 %v433, %v907
        %v924 = vsub.f32 %v433, %v908
        %v925 = vlaneseq
        %v926 = vand.u32 %v925, 127
        %vm927 = vcmask 130048
        %v928 = vsel %vm927, %v909, inf
        %929 = vmin.xlane.f32.xlu0 %v928
        %v930 = vpop.xlane.xlu0 %929
        %v931 = vsel %vm927, %v910, inf
        %932 = vmin.xlane.f32.xlu0 %v931
        %v933 = vpop.xlane.xlu0 %932
        %v934 = vsel %vm927, %v911, inf
        %935 = vmin.xlane.f32.xlu0 %v934
        %v936 = vpop.xlane.xlu0 %935
        %v937 = vsel %vm927, %v912, inf
        %938 = vmin.xlane.f32.xlu0 %v937
        %v939 = vpop.xlane.xlu0 %938
        %v940 = vsel %vm927, %v913, inf
        %941 = vmin.xlane.f32.xlu0 %v940
        %v942 = vpop.xlane.xlu0 %941
        %v943 = vsel %vm927, %v914, inf
        %944 = vmin.xlane.f32.xlu0 %v943
        %v945 = vpop.xlane.xlu0 %944
        %v946 = vsel %vm927, %v915, inf
        %947 = vmin.xlane.f32.xlu0 %v946
        %v948 = vpop.xlane.xlu0 %947
        %v949 = vsel %vm927, %v916, inf
        %950 = vmin.xlane.f32.xlu0 %v949
        %v951 = vpop.xlane.xlu0 %950
        %v952 = vsel %vm927, %v917, inf
        %953 = vmin.xlane.f32.xlu0 %v952
        %v954 = vpop.xlane.xlu0 %953
        %v955 = vsel %vm927, %v918, inf
        %956 = vmin.xlane.f32.xlu0 %v955
        %v957 = vpop.xlane.xlu0 %956
        %v958 = vsel %vm927, %v919, inf
        %959 = vmin.xlane.f32.xlu0 %v958
        %v960 = vpop.xlane.xlu0 %959
        %v961 = vsel %vm927, %v920, inf
        %962 = vmin.xlane.f32.xlu0 %v961
        %v963 = vpop.xlane.xlu0 %962
        %v964 = vsel %vm927, %v921, inf
        %965 = vmin.xlane.f32.xlu0 %v964
        %v966 = vpop.xlane.xlu0 %965
        %v967 = vsel %vm927, %v922, inf
        %968 = vmin.xlane.f32.xlu0 %v967
        %v969 = vpop.xlane.xlu0 %968
        %v970 = vsel %vm927, %v923, inf
        %971 = vmin.xlane.f32.xlu0 %v970
        %v972 = vpop.xlane.xlu0 %971
        %v973 = vsel %vm927, %v924, inf
        %974 = vmin.xlane.f32.xlu0 %v973
        %v975 = vpop.xlane.xlu0 %974
        %vm976 = vcmp.eq.f32.partialorder %v909, %v930
        %vm977 = vcmp.eq.f32.partialorder %v910, %v933
        %vm978 = vcmp.eq.f32.partialorder %v911, %v936
        %vm979 = vcmp.eq.f32.partialorder %v912, %v939
        %vm980 = vcmp.eq.f32.partialorder %v913, %v942
        %vm981 = vcmp.eq.f32.partialorder %v914, %v945
        %vm982 = vcmp.eq.f32.partialorder %v915, %v948
        %vm983 = vcmp.eq.f32.partialorder %v916, %v951
        %vm984 = vcmp.eq.f32.partialorder %v917, %v954
        %vm985 = vcmp.eq.f32.partialorder %v918, %v957
        %vm986 = vcmp.eq.f32.partialorder %v919, %v960
        %vm987 = vcmp.eq.f32.partialorder %v920, %v963
        %vm988 = vcmp.eq.f32.partialorder %v921, %v966
        %vm989 = vcmp.eq.f32.partialorder %v922, %v969
        %vm990 = vcmp.eq.f32.partialorder %v923, %v972
        %vm991 = vcmp.eq.f32.partialorder %v924, %v975
        %v992 = vsel %vm976, %v926, 16
        %v993 = vsel %vm977, %v926, 16
        %v994 = vsel %vm978, %v926, 16
        %v995 = vsel %vm979, %v926, 16
        %v996 = vsel %vm980, %v926, 16
        %v997 = vsel %vm981, %v926, 16
        %v998 = vsel %vm982, %v926, 16
        %v999 = vsel %vm983, %v926, 16
        %v1000 = vsel %vm984, %v926, 16
        %v1001 = vsel %vm985, %v926, 16
        %v1002 = vsel %vm986, %v926, 16
        %v1003 = vsel %vm987, %v926, 16
        %v1004 = vsel %vm988, %v926, 16
        %v1005 = vsel %vm989, %v926, 16
        %v1006 = vsel %vm990, %v926, 16
        %v1007 = vsel %vm991, %v926, 16
        %v1008 = vsel %vm927, %v992, 2147483647
        %v1009 = vand.u32 %v1008, 65535
        %v1010 = vshra.s32 %v1008, 16
        %v1011 = vcvt.s32.f32 %v1009
        %v1012 = vcvt.s32.f32 %v1010
        %1013 = vmin.xlane.f32.xlu0 %v1012
        %v1014 = vpop.xlane.xlu0 %1013
        %vm1015 = vcmp.eq.f32.partialorder %v1012, %v1014
        %v1016 = vsel %vm1015, %v1011, inf
        %1017 = vmin.xlane.f32.xlu0 %v1016
        %v1018 = vpop.xlane.xlu0 %1017
        %v1019 = vcvt.f32.s32 %v1018
        %v1020 = vcvt.f32.s32 %v1014
        %v1021 = vshll.u32 %v1020, 16
        %v1022 = vadd.s32 %v1021, %v1019
        %v1023 = vsel %vm927, %v993, 2147483647
        %v1024 = vand.u32 %v1023, 65535
        %v1025 = vshra.s32 %v1023, 16
        %v1026 = vcvt.s32.f32 %v1024
        %v1027 = vcvt.s32.f32 %v1025
        %1028 = vmin.xlane.f32.xlu0 %v1027
        %v1029 = vpop.xlane.xlu0 %1028
        %vm1030 = vcmp.eq.f32.partialorder %v1027, %v1029
        %v1031 = vsel %vm1030, %v1026, inf
        %1032 = vmin.xlane.f32.xlu0 %v1031
        %v1033 = vpop.xlane.xlu0 %1032
        %v1034 = vcvt.f32.s32 %v1033
        %v1035 = vcvt.f32.s32 %v1029
        %v1036 = vshll.u32 %v1035, 16
        %v1037 = vadd.s32 %v1036, %v1034
        %v1038 = vsel %vm927, %v994, 2147483647
        %v1039 = vand.u32 %v1038, 65535
        %v1040 = vshra.s32 %v1038, 16
        %v1041 = vcvt.s32.f32 %v1039
        %v1042 = vcvt.s32.f32 %v1040
        %1043 = vmin.xlane.f32.xlu0 %v1042
        %v1044 = vpop.xlane.xlu0 %1043
        %vm1045 = vcmp.eq.f32.partialorder %v1042, %v1044
        %v1046 = vsel %vm1045, %v1041, inf
        %1047 = vmin.xlane.f32.xlu0 %v1046
        %v1048 = vpop.xlane.xlu0 %1047
        %v1049 = vcvt.f32.s32 %v1048
        %v1050 = vcvt.f32.s32 %v1044
        %v1051 = vshll.u32 %v1050, 16
        %v1052 = vadd.s32 %v1051, %v1049
        %v1053 = vsel %vm927, %v995, 2147483647
        %v1054 = vand.u32 %v1053, 65535
        %v1055 = vshra.s32 %v1053, 16
        %v1056 = vcvt.s32.f32 %v1054
        %v1057 = vcvt.s32.f32 %v1055
        %1058 = vmin.xlane.f32.xlu0 %v1057
        %v1059 = vpop.xlane.xlu0 %1058
        %vm1060 = vcmp.eq.f32.partialorder %v1057, %v1059
        %v1061 = vsel %vm1060, %v1056, inf
        %1062 = vmin.xlane.f32.xlu0 %v1061
        %v1063 = vpop.xlane.xlu0 %1062
        %v1064 = vcvt.f32.s32 %v1063
        %v1065 = vcvt.f32.s32 %v1059
        %v1066 = vshll.u32 %v1065, 16
        %v1067 = vadd.s32 %v1066, %v1064
        %v1068 = vsel %vm927, %v996, 2147483647
        %v1069 = vand.u32 %v1068, 65535
        %v1070 = vshra.s32 %v1068, 16
        %v1071 = vcvt.s32.f32 %v1069
        %v1072 = vcvt.s32.f32 %v1070
        %1073 = vmin.xlane.f32.xlu0 %v1072
        %v1074 = vpop.xlane.xlu0 %1073
        %vm1075 = vcmp.eq.f32.partialorder %v1072, %v1074
        %v1076 = vsel %vm1075, %v1071, inf
        %1077 = vmin.xlane.f32.xlu0 %v1076
        %v1078 = vpop.xlane.xlu0 %1077
        %v1079 = vcvt.f32.s32 %v1078
        %v1080 = vcvt.f32.s32 %v1074
        %v1081 = vshll.u32 %v1080, 16
        %v1082 = vadd.s32 %v1081, %v1079
        %v1083 = vsel %vm927, %v997, 2147483647
        %v1084 = vand.u32 %v1083, 65535
        %v1085 = vshra.s32 %v1083, 16
        %v1086 = vcvt.s32.f32 %v1084
        %v1087 = vcvt.s32.f32 %v1085
        %1088 = vmin.xlane.f32.xlu0 %v1087
        %v1089 = vpop.xlane.xlu0 %1088
        %vm1090 = vcmp.eq.f32.partialorder %v1087, %v1089
        %v1091 = vsel %vm1090, %v1086, inf
        %1092 = vmin.xlane.f32.xlu0 %v1091
        %v1093 = vpop.xlane.xlu0 %1092
        %v1094 = vcvt.f32.s32 %v1093
        %v1095 = vcvt.f32.s32 %v1089
        %v1096 = vshll.u32 %v1095, 16
        %v1097 = vadd.s32 %v1096, %v1094
        %v1098 = vsel %vm927, %v998, 2147483647
        %v1099 = vand.u32 %v1098, 65535
        %v1100 = vshra.s32 %v1098, 16
        %v1101 = vcvt.s32.f32 %v1099
        %v1102 = vcvt.s32.f32 %v1100
        %1103 = vmin.xlane.f32.xlu0 %v1102
        %v1104 = vpop.xlane.xlu0 %1103
        %vm1105 = vcmp.eq.f32.partialorder %v1102, %v1104
        %v1106 = vsel %vm1105, %v1101, inf
        %1107 = vmin.xlane.f32.xlu0 %v1106
        %v1108 = vpop.xlane.xlu0 %1107
        %v1109 = vcvt.f32.s32 %v1108
        %v1110 = vcvt.f32.s32 %v1104
        %v1111 = vshll.u32 %v1110, 16
        %v1112 = vadd.s32 %v1111, %v1109
        %v1113 = vsel %vm927, %v999, 2147483647
        %v1114 = vand.u32 %v1113, 65535
        %v1115 = vshra.s32 %v1113, 16
        %v1116 = vcvt.s32.f32 %v1114
        %v1117 = vcvt.s32.f32 %v1115
        %1118 = vmin.xlane.f32.xlu0 %v1117
        %v1119 = vpop.xlane.xlu0 %1118
        %vm1120 = vcmp.eq.f32.partialorder %v1117, %v1119
        %v1121 = vsel %vm1120, %v1116, inf
        %1122 = vmin.xlane.f32.xlu0 %v1121
        %v1123 = vpop.xlane.xlu0 %1122
        %v1124 = vcvt.f32.s32 %v1123
        %v1125 = vcvt.f32.s32 %v1119
        %v1126 = vshll.u32 %v1125, 16
        %v1127 = vadd.s32 %v1126, %v1124
        %v1128 = vsel %vm927, %v1000, 2147483647
        %v1129 = vand.u32 %v1128, 65535
        %v1130 = vshra.s32 %v1128, 16
        %v1131 = vcvt.s32.f32 %v1129
        %v1132 = vcvt.s32.f32 %v1130
        %1133 = vmin.xlane.f32.xlu0 %v1132
        %v1134 = vpop.xlane.xlu0 %1133
        %vm1135 = vcmp.eq.f32.partialorder %v1132, %v1134
        %v1136 = vsel %vm1135, %v1131, inf
        %1137 = vmin.xlane.f32.xlu0 %v1136
        %v1138 = vpop.xlane.xlu0 %1137
        %v1139 = vcvt.f32.s32 %v1138
        %v1140 = vcvt.f32.s32 %v1134
        %v1141 = vshll.u32 %v1140, 16
        %v1142 = vadd.s32 %v1141, %v1139
        %v1143 = vsel %vm927, %v1001, 2147483647
        %v1144 = vand.u32 %v1143, 65535
        %v1145 = vshra.s32 %v1143, 16
        %v1146 = vcvt.s32.f32 %v1144
        %v1147 = vcvt.s32.f32 %v1145
        %1148 = vmin.xlane.f32.xlu0 %v1147
        %v1149 = vpop.xlane.xlu0 %1148
        %vm1150 = vcmp.eq.f32.partialorder %v1147, %v1149
        %v1151 = vsel %vm1150, %v1146, inf
        %1152 = vmin.xlane.f32.xlu0 %v1151
        %v1153 = vpop.xlane.xlu0 %1152
        %v1154 = vcvt.f32.s32 %v1153
        %v1155 = vcvt.f32.s32 %v1149
        %v1156 = vshll.u32 %v1155, 16
        %v1157 = vadd.s32 %v1156, %v1154
        %v1158 = vsel %vm927, %v1002, 2147483647
        %v1159 = vand.u32 %v1158, 65535
        %v1160 = vshra.s32 %v1158, 16
        %v1161 = vcvt.s32.f32 %v1159
        %v1162 = vcvt.s32.f32 %v1160
        %1163 = vmin.xlane.f32.xlu0 %v1162
        %v1164 = vpop.xlane.xlu0 %1163
        %vm1165 = vcmp.eq.f32.partialorder %v1162, %v1164
        %v1166 = vsel %vm1165, %v1161, inf
        %1167 = vmin.xlane.f32.xlu0 %v1166
        %v1168 = vpop.xlane.xlu0 %1167
        %v1169 = vcvt.f32.s32 %v1168
        %v1170 = vcvt.f32.s32 %v1164
        %v1171 = vshll.u32 %v1170, 16
        %v1172 = vadd.s32 %v1171, %v1169
        %v1173 = vsel %vm927, %v1003, 2147483647
        %v1174 = vand.u32 %v1173, 65535
        %v1175 = vshra.s32 %v1173, 16
        %v1176 = vcvt.s32.f32 %v1174
        %v1177 = vcvt.s32.f32 %v1175
        %1178 = vmin.xlane.f32.xlu0 %v1177
        %v1179 = vpop.xlane.xlu0 %1178
        %vm1180 = vcmp.eq.f32.partialorder %v1177, %v1179
        %v1181 = vsel %vm1180, %v1176, inf
        %1182 = vmin.xlane.f32.xlu0 %v1181
        %v1183 = vpop.xlane.xlu0 %1182
        %v1184 = vcvt.f32.s32 %v1183
        %v1185 = vcvt.f32.s32 %v1179
        %v1186 = vshll.u32 %v1185, 16
        %v1187 = vadd.s32 %v1186, %v1184
        %v1188 = vsel %vm927, %v1004, 2147483647
        %v1189 = vand.u32 %v1188, 65535
        %v1190 = vshra.s32 %v1188, 16
        %v1191 = vcvt.s32.f32 %v1189
        %v1192 = vcvt.s32.f32 %v1190
        %1193 = vmin.xlane.f32.xlu0 %v1192
        %v1194 = vpop.xlane.xlu0 %1193
        %vm1195 = vcmp.eq.f32.partialorder %v1192, %v1194
        %v1196 = vsel %vm1195, %v1191, inf
        %1197 = vmin.xlane.f32.xlu0 %v1196
        %v1198 = vpop.xlane.xlu0 %1197
        %v1199 = vcvt.f32.s32 %v1198
        %v1200 = vcvt.f32.s32 %v1194
        %v1201 = vshll.u32 %v1200, 16
        %v1202 = vadd.s32 %v1201, %v1199
        %v1203 = vsel %vm927, %v1005, 2147483647
        %v1204 = vand.u32 %v1203, 65535
        %v1205 = vshra.s32 %v1203, 16
        %v1206 = vcvt.s32.f32 %v1204
        %v1207 = vcvt.s32.f32 %v1205
        %1208 = vmin.xlane.f32.xlu0 %v1207
        %v1209 = vpop.xlane.xlu0 %1208
        %vm1210 = vcmp.eq.f32.partialorder %v1207, %v1209
        %v1211 = vsel %vm1210, %v1206, inf
        %1212 = vmin.xlane.f32.xlu0 %v1211
        %v1213 = vpop.xlane.xlu0 %1212
        %v1214 = vcvt.f32.s32 %v1213
        %v1215 = vcvt.f32.s32 %v1209
        %v1216 = vshll.u32 %v1215, 16
        %v1217 = vadd.s32 %v1216, %v1214
        %v1218 = vsel %vm927, %v1006, 2147483647
        %v1219 = vand.u32 %v1218, 65535
        %v1220 = vshra.s32 %v1218, 16
        %v1221 = vcvt.s32.f32 %v1219
        %v1222 = vcvt.s32.f32 %v1220
        %1223 = vmin.xlane.f32.xlu0 %v1222
        %v1224 = vpop.xlane.xlu0 %1223
        %vm1225 = vcmp.eq.f32.partialorder %v1222, %v1224
        %v1226 = vsel %vm1225, %v1221, inf
        %1227 = vmin.xlane.f32.xlu0 %v1226
        %v1228 = vpop.xlane.xlu0 %1227
        %v1229 = vcvt.f32.s32 %v1228
        %v1230 = vcvt.f32.s32 %v1224
        %v1231 = vshll.u32 %v1230, 16
        %v1232 = vadd.s32 %v1231, %v1229
        %v1233 = vsel %vm927, %v1007, 2147483647
        %v1234 = vand.u32 %v1233, 65535
        %v1235 = vshra.s32 %v1233, 16
        %v1236 = vcvt.s32.f32 %v1234
        %v1237 = vcvt.s32.f32 %v1235
        %1238 = vmin.xlane.f32.xlu0 %v1237
        %v1239 = vpop.xlane.xlu0 %1238
        %vm1240 = vcmp.eq.f32.partialorder %v1237, %v1239
        %v1241 = vsel %vm1240, %v1236, inf
        %1242 = vmin.xlane.f32.xlu0 %v1241
        %v1243 = vpop.xlane.xlu0 %1242
        %v1244 = vcvt.f32.s32 %v1243
        %v1245 = vcvt.f32.s32 %v1239
        %v1246 = vshll.u32 %v1245, 16
        %v1247 = vadd.s32 %v1246, %v1244
        %vm1248 = vcmp.eq.s32.totalorder %v926, %v1022
        %vm1249 = vcmp.eq.s32.totalorder %v926, %v1037
        %vm1250 = vcmp.eq.s32.totalorder %v926, %v1052
        %vm1251 = vcmp.eq.s32.totalorder %v926, %v1067
        %vm1252 = vcmp.eq.s32.totalorder %v926, %v1082
        %vm1253 = vcmp.eq.s32.totalorder %v926, %v1097
        %vm1254 = vcmp.eq.s32.totalorder %v926, %v1112
        %vm1255 = vcmp.eq.s32.totalorder %v926, %v1127
        %vm1256 = vcmp.eq.s32.totalorder %v926, %v1142
        %vm1257 = vcmp.eq.s32.totalorder %v926, %v1157
        %vm1258 = vcmp.eq.s32.totalorder %v926, %v1172
        %vm1259 = vcmp.eq.s32.totalorder %v926, %v1187
        %vm1260 = vcmp.eq.s32.totalorder %v926, %v1202
        %vm1261 = vcmp.eq.s32.totalorder %v926, %v1217
        %vm1262 = vcmp.eq.s32.totalorder %v926, %v1232
        %vm1263 = vcmp.eq.s32.totalorder %v926, %v1247
        %v1264 = vadd.f32 %v930, %v815
        %v1265 = vadd.f32 %v933, %v820
        %v1266 = vadd.f32 %v936, %v825
        %v1267 = vadd.f32 %v939, %v830
        %v1268 = vadd.f32 %v942, %v835
        %v1269 = vadd.f32 %v945, %v840
        %v1270 = vadd.f32 %v948, %v845
        %v1271 = vadd.f32 %v951, %v850
        %v1272 = vadd.f32 %v954, %v855
        %v1273 = vadd.f32 %v957, %v860
        %v1274 = vadd.f32 %v960, %v865
        %v1275 = vadd.f32 %v963, %v870
        %v1276 = vadd.f32 %v966, %v875
        %v1277 = vadd.f32 %v969, %v880
        %v1278 = vadd.f32 %v972, %v885
        %v1279 = vadd.f32 %v975, %v890
        %v1280 = vmax.f32 %v1264, 0.0
        %v1281 = vmax.f32 %v1265, 0.0
        %v1282 = vmax.f32 %v1266, 0.0
        %v1283 = vmax.f32 %v1267, 0.0
        %v1284 = vmax.f32 %v1268, 0.0
        %v1285 = vmax.f32 %v1269, 0.0
        %v1286 = vmax.f32 %v1270, 0.0
        %v1287 = vmax.f32 %v1271, 0.0
        %v1288 = vmax.f32 %v1272, 0.0
        %v1289 = vmax.f32 %v1273, 0.0
        %v1290 = vmax.f32 %v1274, 0.0
        %v1291 = vmax.f32 %v1275, 0.0
        %v1292 = vmax.f32 %v1276, 0.0
        %v1293 = vmax.f32 %v1277, 0.0
        %v1294 = vmax.f32 %v1278, 0.0
        %v1295 = vmax.f32 %v1279, 0.0
        %v1296 = vrsqrt.pop %v1280
        %v1297 = vmul.f32 %v1280, %v1296
        %vm1298 = vcmp.eq.f32.partialorder %v1280, inf
        %v1299 = vsel %vm1298, %v1280, %v1297
        %vm1300 = vcmp.eq.f32.partialorder %v1280, 0.0
        %v1301 = vand.u32 %v1280, 2147483648
        %v1302 = vsel %vm1300, %v1301, %v1299
        %v1303 = vrsqrt.pop %v1281
        %v1304 = vmul.f32 %v1281, %v1303
        %vm1305 = vcmp.eq.f32.partialorder %v1281, inf
        %v1306 = vsel %vm1305, %v1281, %v1304
        %vm1307 = vcmp.eq.f32.partialorder %v1281, 0.0
        %v1308 = vand.u32 %v1281, 2147483648
        %v1309 = vsel %vm1307, %v1308, %v1306
        %v1310 = vrsqrt.pop %v1282
        %v1311 = vmul.f32 %v1282, %v1310
        %vm1312 = vcmp.eq.f32.partialorder %v1282, inf
        %v1313 = vsel %vm1312, %v1282, %v1311
        %vm1314 = vcmp.eq.f32.partialorder %v1282, 0.0
        %v1315 = vand.u32 %v1282, 2147483648
        %v1316 = vsel %vm1314, %v1315, %v1313
        %v1317 = vrsqrt.pop %v1283
        %v1318 = vmul.f32 %v1283, %v1317
        %vm1319 = vcmp.eq.f32.partialorder %v1283, inf
        %v1320 = vsel %vm1319, %v1283, %v1318
        %vm1321 = vcmp.eq.f32.partialorder %v1283, 0.0
        %v1322 = vand.u32 %v1283, 2147483648
        %v1323 = vsel %vm1321, %v1322, %v1320
        %v1324 = vrsqrt.pop %v1284
        %v1325 = vmul.f32 %v1284, %v1324
        %vm1326 = vcmp.eq.f32.partialorder %v1284, inf
        %v1327 = vsel %vm1326, %v1284, %v1325
        %vm1328 = vcmp.eq.f32.partialorder %v1284, 0.0
        %v1329 = vand.u32 %v1284, 2147483648
        %v1330 = vsel %vm1328, %v1329, %v1327
        %v1331 = vrsqrt.pop %v1285
        %v1332 = vmul.f32 %v1285, %v1331
        %vm1333 = vcmp.eq.f32.partialorder %v1285, inf
        %v1334 = vsel %vm1333, %v1285, %v1332
        %vm1335 = vcmp.eq.f32.partialorder %v1285, 0.0
        %v1336 = vand.u32 %v1285, 2147483648
        %v1337 = vsel %vm1335, %v1336, %v1334
        %v1338 = vrsqrt.pop %v1286
        %v1339 = vmul.f32 %v1286, %v1338
        %vm1340 = vcmp.eq.f32.partialorder %v1286, inf
        %v1341 = vsel %vm1340, %v1286, %v1339
        %vm1342 = vcmp.eq.f32.partialorder %v1286, 0.0
        %v1343 = vand.u32 %v1286, 2147483648
        %v1344 = vsel %vm1342, %v1343, %v1341
        %v1345 = vrsqrt.pop %v1287
        %v1346 = vmul.f32 %v1287, %v1345
        %vm1347 = vcmp.eq.f32.partialorder %v1287, inf
        %v1348 = vsel %vm1347, %v1287, %v1346
        %vm1349 = vcmp.eq.f32.partialorder %v1287, 0.0
        %v1350 = vand.u32 %v1287, 2147483648
        %v1351 = vsel %vm1349, %v1350, %v1348
        %v1352 = vrsqrt.pop %v1288
        %v1353 = vmul.f32 %v1288, %v1352
        %vm1354 = vcmp.eq.f32.partialorder %v1288, inf
        %v1355 = vsel %vm1354, %v1288, %v1353
        %vm1356 = vcmp.eq.f32.partialorder %v1288, 0.0
        %v1357 = vand.u32 %v1288, 2147483648
        %v1358 = vsel %vm1356, %v1357, %v1355
        %v1359 = vrsqrt.pop %v1289
        %v1360 = vmul.f32 %v1289, %v1359
        %vm1361 = vcmp.eq.f32.partialorder %v1289, inf
        %v1362 = vsel %vm1361, %v1289, %v1360
        %vm1363 = vcmp.eq.f32.partialorder %v1289, 0.0
        %v1364 = vand.u32 %v1289, 2147483648
        %v1365 = vsel %vm1363, %v1364, %v1362
        %v1366 = vrsqrt.pop %v1290
        %v1367 = vmul.f32 %v1290, %v1366
        %vm1368 = vcmp.eq.f32.partialorder %v1290, inf
        %v1369 = vsel %vm1368, %v1290, %v1367
        %vm1370 = vcmp.eq.f32.partialorder %v1290, 0.0
        %v1371 = vand.u32 %v1290, 2147483648
        %v1372 = vsel %vm1370, %v1371, %v1369
        %v1373 = vrsqrt.pop %v1291
        %v1374 = vmul.f32 %v1291, %v1373
        %vm1375 = vcmp.eq.f32.partialorder %v1291, inf
        %v1376 = vsel %vm1375, %v1291, %v1374
        %vm1377 = vcmp.eq.f32.partialorder %v1291, 0.0
        %v1378 = vand.u32 %v1291, 2147483648
        %v1379 = vsel %vm1377, %v1378, %v1376
        %v1380 = vrsqrt.pop %v1292
        %v1381 = vmul.f32 %v1292, %v1380
        %vm1382 = vcmp.eq.f32.partialorder %v1292, inf
        %v1383 = vsel %vm1382, %v1292, %v1381
        %vm1384 = vcmp.eq.f32.partialorder %v1292, 0.0
        %v1385 = vand.u32 %v1292, 2147483648
        %v1386 = vsel %vm1384, %v1385, %v1383
        %v1387 = vrsqrt.pop %v1293
        %v1388 = vmul.f32 %v1293, %v1387
        %vm1389 = vcmp.eq.f32.partialorder %v1293, inf
        %v1390 = vsel %vm1389, %v1293, %v1388
        %vm1391 = vcmp.eq.f32.partialorder %v1293, 0.0
        %v1392 = vand.u32 %v1293, 2147483648
        %v1393 = vsel %vm1391, %v1392, %v1390
        %v1394 = vrsqrt.pop %v1294
        %v1395 = vmul.f32 %v1294, %v1394
        %vm1396 = vcmp.eq.f32.partialorder %v1294, inf
        %v1397 = vsel %vm1396, %v1294, %v1395
        %vm1398 = vcmp.eq.f32.partialorder %v1294, 0.0
        %v1399 = vand.u32 %v1294, 2147483648
        %v1400 = vsel %vm1398, %v1399, %v1397
        %v1401 = vrsqrt.pop %v1295
        %v1402 = vmul.f32 %v1295, %v1401
        %vm1403 = vcmp.eq.f32.partialorder %v1295, inf
        %v1404 = vsel %vm1403, %v1295, %v1402
        %vm1405 = vcmp.eq.f32.partialorder %v1295, 0.0
        %v1406 = vand.u32 %v1295, 2147483648
        %v1407 = vsel %vm1405, %v1406, %v1404
        %v1408 = vadd.f32 %v1302, 1e-10
        %v1409 = vadd.f32 %v1309, 1e-10
        %v1410 = vadd.f32 %v1316, 1e-10
        %v1411 = vadd.f32 %v1323, 1e-10
        %v1412 = vadd.f32 %v1330, 1e-10
        %v1413 = vadd.f32 %v1337, 1e-10
        %v1414 = vadd.f32 %v1344, 1e-10
        %v1415 = vadd.f32 %v1351, 1e-10
        %v1416 = vadd.f32 %v1358, 1e-10
        %v1417 = vadd.f32 %v1365, 1e-10
        %v1418 = vadd.f32 %v1372, 1e-10
        %v1419 = vadd.f32 %v1379, 1e-10
        %v1420 = vadd.f32 %v1386, 1e-10
        %v1421 = vadd.f32 %v1393, 1e-10
        %v1422 = vadd.f32 %v1400, 1e-10
        %v1423 = vadd.f32 %v1407, 1e-10
        %v1424 = vrcp.pop %v1408
        %v1425 = vmul.f32 1.0, %v1424
        %v1426 = vrcp.pop %v1409
        %v1427 = vmul.f32 1.0, %v1426
        %v1428 = vrcp.pop %v1410
        %v1429 = vmul.f32 1.0, %v1428
        %v1430 = vrcp.pop %v1411
        %v1431 = vmul.f32 1.0, %v1430
        %v1432 = vrcp.pop %v1412
        %v1433 = vmul.f32 1.0, %v1432
        %v1434 = vrcp.pop %v1413
        %v1435 = vmul.f32 1.0, %v1434
        %v1436 = vrcp.pop %v1414
        %v1437 = vmul.f32 1.0, %v1436
        %v1438 = vrcp.pop %v1415
        %v1439 = vmul.f32 1.0, %v1438
        %v1440 = vrcp.pop %v1416
        %v1441 = vmul.f32 1.0, %v1440
        %v1442 = vrcp.pop %v1417
        %v1443 = vmul.f32 1.0, %v1442
        %v1444 = vrcp.pop %v1418
        %v1445 = vmul.f32 1.0, %v1444
        %v1446 = vrcp.pop %v1419
        %v1447 = vmul.f32 1.0, %v1446
        %v1448 = vrcp.pop %v1420
        %v1449 = vmul.f32 1.0, %v1448
        %v1450 = vrcp.pop %v1421
        %v1451 = vmul.f32 1.0, %v1450
        %v1452 = vrcp.pop %v1422
        %v1453 = vmul.f32 1.0, %v1452
        %v1454 = vrcp.pop %v1423
        %v1455 = vmul.f32 1.0, %v1454
        %1457 = vset.pattern.permute.xlu0 0
        %1458 = vperm.xlu0 %1457, %v1425
        %v1459 = vpop.permute.xlu0 %1458
        %1462 = vset.pattern.permute.xlu0 0
        %1463 = vperm.xlu0 %1462, %v1427
        %v1464 = vpop.permute.xlu0 %1463
        %1467 = vset.pattern.permute.xlu0 0
        %1468 = vperm.xlu0 %1467, %v1429
        %v1469 = vpop.permute.xlu0 %1468
        %1472 = vset.pattern.permute.xlu0 0
        %1473 = vperm.xlu0 %1472, %v1431
        %v1474 = vpop.permute.xlu0 %1473
        %1477 = vset.pattern.permute.xlu0 0
        %1478 = vperm.xlu0 %1477, %v1433
        %v1479 = vpop.permute.xlu0 %1478
        %1482 = vset.pattern.permute.xlu0 0
        %1483 = vperm.xlu0 %1482, %v1435
        %v1484 = vpop.permute.xlu0 %1483
        %1487 = vset.pattern.permute.xlu0 0
        %1488 = vperm.xlu0 %1487, %v1437
        %v1489 = vpop.permute.xlu0 %1488
        %1492 = vset.pattern.permute.xlu0 0
        %1493 = vperm.xlu0 %1492, %v1439
        %v1494 = vpop.permute.xlu0 %1493
        %1497 = vset.pattern.permute.xlu0 0
        %1498 = vperm.xlu0 %1497, %v1441
        %v1499 = vpop.permute.xlu0 %1498
        %1502 = vset.pattern.permute.xlu0 0
        %1503 = vperm.xlu0 %1502, %v1443
        %v1504 = vpop.permute.xlu0 %1503
        %1507 = vset.pattern.permute.xlu0 0
        %1508 = vperm.xlu0 %1507, %v1445
        %v1509 = vpop.permute.xlu0 %1508
        %1512 = vset.pattern.permute.xlu0 0
        %1513 = vperm.xlu0 %1512, %v1447
        %v1514 = vpop.permute.xlu0 %1513
        %1517 = vset.pattern.permute.xlu0 0
        %1518 = vperm.xlu0 %1517, %v1449
        %v1519 = vpop.permute.xlu0 %1518
        %1522 = vset.pattern.permute.xlu0 0
        %1523 = vperm.xlu0 %1522, %v1451
        %v1524 = vpop.permute.xlu0 %1523
        %1527 = vset.pattern.permute.xlu0 0
        %1528 = vperm.xlu0 %1527, %v1453
        %v1529 = vpop.permute.xlu0 %1528
        %1532 = vset.pattern.permute.xlu0 0
        %1533 = vperm.xlu0 %1532, %v1455
        %v1534 = vpop.permute.xlu0 %1533
        %v1536 = vsel %vm1248, %v1459, 0.0
        %v1537 = vsel %vm1249, %v1464, 0.0
        %v1538 = vsel %vm1250, %v1469, 0.0
        %v1539 = vsel %vm1251, %v1474, 0.0
        %v1540 = vsel %vm1252, %v1479, 0.0
        %v1541 = vsel %vm1253, %v1484, 0.0
        %v1542 = vsel %vm1254, %v1489, 0.0
        %v1543 = vsel %vm1255, %v1494, 0.0
        %v1544 = vsel %vm1256, %v1499, 0.0
        %v1545 = vsel %vm1257, %v1504, 0.0
        %v1546 = vsel %vm1258, %v1509, 0.0
        %v1547 = vsel %vm1259, %v1514, 0.0
        %v1548 = vsel %vm1260, %v1519, 0.0
        %v1549 = vsel %vm1261, %v1524, 0.0
        %v1550 = vsel %vm1262, %v1529, 0.0
        %v1551 = vsel %vm1263, %v1534, 0.0
        %v1552 = vadd.f32 %v1536, 0.0
        %v1553 = vadd.f32 %v1537, 0.0
        %v1554 = vadd.f32 %v1538, 0.0
        %v1555 = vadd.f32 %v1539, 0.0
        %v1556 = vadd.f32 %v1540, 0.0
        %v1557 = vadd.f32 %v1541, 0.0
        %v1558 = vadd.f32 %v1542, 0.0
        %v1559 = vadd.f32 %v1543, 0.0
        %v1560 = vadd.f32 %v1544, 0.0
        %v1561 = vadd.f32 %v1545, 0.0
        %v1562 = vadd.f32 %v1546, 0.0
        %v1563 = vadd.f32 %v1547, 0.0
        %v1564 = vadd.f32 %v1548, 0.0
        %v1565 = vadd.f32 %v1549, 0.0
        %v1566 = vadd.f32 %v1550, 0.0
        %v1567 = vadd.f32 %v1551, 0.0
        %v1568 = vadd.f32 %v1425, 0.0
        %v1569 = vadd.f32 %v1427, 0.0
        %v1570 = vadd.f32 %v1429, 0.0
        %v1571 = vadd.f32 %v1431, 0.0
        %v1572 = vadd.f32 %v1433, 0.0
        %v1573 = vadd.f32 %v1435, 0.0
        %v1574 = vadd.f32 %v1437, 0.0
        %v1575 = vadd.f32 %v1439, 0.0
        %v1576 = vadd.f32 %v1441, 0.0
        %v1577 = vadd.f32 %v1443, 0.0
        %v1578 = vadd.f32 %v1445, 0.0
        %v1579 = vadd.f32 %v1447, 0.0
        %v1580 = vadd.f32 %v1449, 0.0
        %v1581 = vadd.f32 %v1451, 0.0
        %v1582 = vadd.f32 %v1453, 0.0
        %v1583 = vadd.f32 %v1455, 0.0
        %v1584 = vsel %vm1248, 3e+38, %v909
        %v1585 = vsel %vm1249, 3e+38, %v910
        %v1586 = vsel %vm1250, 3e+38, %v911
        %v1587 = vsel %vm1251, 3e+38, %v912
        %v1588 = vsel %vm1252, 3e+38, %v913
        %v1589 = vsel %vm1253, 3e+38, %v914
        %v1590 = vsel %vm1254, 3e+38, %v915
        %v1591 = vsel %vm1255, 3e+38, %v916
        %v1592 = vsel %vm1256, 3e+38, %v917
        %v1593 = vsel %vm1257, 3e+38, %v918
        %v1594 = vsel %vm1258, 3e+38, %v919
        %v1595 = vsel %vm1259, 3e+38, %v920
        %v1596 = vsel %vm1260, 3e+38, %v921
        %v1597 = vsel %vm1261, 3e+38, %v922
        %v1598 = vsel %vm1262, 3e+38, %v923
        %v1599 = vsel %vm1263, 3e+38, %v924
        %v1600 = vsel %vm927, %v1584, inf
        %1601 = vmin.xlane.f32.xlu0 %v1600
        %v1602 = vpop.xlane.xlu0 %1601
        %v1603 = vsel %vm927, %v1585, inf
        %1604 = vmin.xlane.f32.xlu0 %v1603
        %v1605 = vpop.xlane.xlu0 %1604
        %v1606 = vsel %vm927, %v1586, inf
        %1607 = vmin.xlane.f32.xlu0 %v1606
        %v1608 = vpop.xlane.xlu0 %1607
        %v1609 = vsel %vm927, %v1587, inf
        %1610 = vmin.xlane.f32.xlu0 %v1609
        %v1611 = vpop.xlane.xlu0 %1610
        %v1612 = vsel %vm927, %v1588, inf
        %1613 = vmin.xlane.f32.xlu0 %v1612
        %v1614 = vpop.xlane.xlu0 %1613
        %v1615 = vsel %vm927, %v1589, inf
        %1616 = vmin.xlane.f32.xlu0 %v1615
        %v1617 = vpop.xlane.xlu0 %1616
        %v1618 = vsel %vm927, %v1590, inf
        %1619 = vmin.xlane.f32.xlu0 %v1618
        %v1620 = vpop.xlane.xlu0 %1619
        %v1621 = vsel %vm927, %v1591, inf
        %1622 = vmin.xlane.f32.xlu0 %v1621
        %v1623 = vpop.xlane.xlu0 %1622
        %v1624 = vsel %vm927, %v1592, inf
        %1625 = vmin.xlane.f32.xlu0 %v1624
        %v1626 = vpop.xlane.xlu0 %1625
        %v1627 = vsel %vm927, %v1593, inf
        %1628 = vmin.xlane.f32.xlu0 %v1627
        %v1629 = vpop.xlane.xlu0 %1628
        %v1630 = vsel %vm927, %v1594, inf
        %1631 = vmin.xlane.f32.xlu0 %v1630
        %v1632 = vpop.xlane.xlu0 %1631
        %v1633 = vsel %vm927, %v1595, inf
        %1634 = vmin.xlane.f32.xlu0 %v1633
        %v1635 = vpop.xlane.xlu0 %1634
        %v1636 = vsel %vm927, %v1596, inf
        %1637 = vmin.xlane.f32.xlu0 %v1636
        %v1638 = vpop.xlane.xlu0 %1637
        %v1639 = vsel %vm927, %v1597, inf
        %1640 = vmin.xlane.f32.xlu0 %v1639
        %v1641 = vpop.xlane.xlu0 %1640
        %v1642 = vsel %vm927, %v1598, inf
        %1643 = vmin.xlane.f32.xlu0 %v1642
        %v1644 = vpop.xlane.xlu0 %1643
        %v1645 = vsel %vm927, %v1599, inf
        %1646 = vmin.xlane.f32.xlu0 %v1645
        %v1647 = vpop.xlane.xlu0 %1646
        %vm1648 = vcmp.eq.f32.partialorder %v1584, %v1602
        %vm1649 = vcmp.eq.f32.partialorder %v1585, %v1605
        %vm1650 = vcmp.eq.f32.partialorder %v1586, %v1608
        %vm1651 = vcmp.eq.f32.partialorder %v1587, %v1611
        %vm1652 = vcmp.eq.f32.partialorder %v1588, %v1614
        %vm1653 = vcmp.eq.f32.partialorder %v1589, %v1617
        %vm1654 = vcmp.eq.f32.partialorder %v1590, %v1620
        %vm1655 = vcmp.eq.f32.partialorder %v1591, %v1623
        %vm1656 = vcmp.eq.f32.partialorder %v1592, %v1626
        %vm1657 = vcmp.eq.f32.partialorder %v1593, %v1629
        %vm1658 = vcmp.eq.f32.partialorder %v1594, %v1632
        %vm1659 = vcmp.eq.f32.partialorder %v1595, %v1635
        %vm1660 = vcmp.eq.f32.partialorder %v1596, %v1638
        %vm1661 = vcmp.eq.f32.partialorder %v1597, %v1641
        %vm1662 = vcmp.eq.f32.partialorder %v1598, %v1644
        %vm1663 = vcmp.eq.f32.partialorder %v1599, %v1647
        %v1664 = vsel %vm1648, %v926, 16
        %v1665 = vsel %vm1649, %v926, 16
        %v1666 = vsel %vm1650, %v926, 16
        %v1667 = vsel %vm1651, %v926, 16
        %v1668 = vsel %vm1652, %v926, 16
        %v1669 = vsel %vm1653, %v926, 16
        %v1670 = vsel %vm1654, %v926, 16
        %v1671 = vsel %vm1655, %v926, 16
        %v1672 = vsel %vm1656, %v926, 16
        %v1673 = vsel %vm1657, %v926, 16
        %v1674 = vsel %vm1658, %v926, 16
        %v1675 = vsel %vm1659, %v926, 16
        %v1676 = vsel %vm1660, %v926, 16
        %v1677 = vsel %vm1661, %v926, 16
        %v1678 = vsel %vm1662, %v926, 16
        %v1679 = vsel %vm1663, %v926, 16
        %v1680 = vsel %vm927, %v1664, 2147483647
        %v1681 = vand.u32 %v1680, 65535
        %v1682 = vshra.s32 %v1680, 16
        %v1683 = vcvt.s32.f32 %v1681
        %v1684 = vcvt.s32.f32 %v1682
        %1685 = vmin.xlane.f32.xlu0 %v1684
        %v1686 = vpop.xlane.xlu0 %1685
        %vm1687 = vcmp.eq.f32.partialorder %v1684, %v1686
        %v1688 = vsel %vm1687, %v1683, inf
        %1689 = vmin.xlane.f32.xlu0 %v1688
        %v1690 = vpop.xlane.xlu0 %1689
        %v1691 = vcvt.f32.s32 %v1690
        %v1692 = vcvt.f32.s32 %v1686
        %v1693 = vshll.u32 %v1692, 16
        %v1694 = vadd.s32 %v1693, %v1691
        %v1695 = vsel %vm927, %v1665, 2147483647
        %v1696 = vand.u32 %v1695, 65535
        %v1697 = vshra.s32 %v1695, 16
        %v1698 = vcvt.s32.f32 %v1696
        %v1699 = vcvt.s32.f32 %v1697
        %1700 = vmin.xlane.f32.xlu0 %v1699
        %v1701 = vpop.xlane.xlu0 %1700
        %vm1702 = vcmp.eq.f32.partialorder %v1699, %v1701
        %v1703 = vsel %vm1702, %v1698, inf
        %1704 = vmin.xlane.f32.xlu0 %v1703
        %v1705 = vpop.xlane.xlu0 %1704
        %v1706 = vcvt.f32.s32 %v1705
        %v1707 = vcvt.f32.s32 %v1701
        %v1708 = vshll.u32 %v1707, 16
        %v1709 = vadd.s32 %v1708, %v1706
        %v1710 = vsel %vm927, %v1666, 2147483647
        %v1711 = vand.u32 %v1710, 65535
        %v1712 = vshra.s32 %v1710, 16
        %v1713 = vcvt.s32.f32 %v1711
        %v1714 = vcvt.s32.f32 %v1712
        %1715 = vmin.xlane.f32.xlu0 %v1714
        %v1716 = vpop.xlane.xlu0 %1715
        %vm1717 = vcmp.eq.f32.partialorder %v1714, %v1716
        %v1718 = vsel %vm1717, %v1713, inf
        %1719 = vmin.xlane.f32.xlu0 %v1718
        %v1720 = vpop.xlane.xlu0 %1719
        %v1721 = vcvt.f32.s32 %v1720
        %v1722 = vcvt.f32.s32 %v1716
        %v1723 = vshll.u32 %v1722, 16
        %v1724 = vadd.s32 %v1723, %v1721
        %v1725 = vsel %vm927, %v1667, 2147483647
        %v1726 = vand.u32 %v1725, 65535
        %v1727 = vshra.s32 %v1725, 16
        %v1728 = vcvt.s32.f32 %v1726
        %v1729 = vcvt.s32.f32 %v1727
        %1730 = vmin.xlane.f32.xlu0 %v1729
        %v1731 = vpop.xlane.xlu0 %1730
        %vm1732 = vcmp.eq.f32.partialorder %v1729, %v1731
        %v1733 = vsel %vm1732, %v1728, inf
        %1734 = vmin.xlane.f32.xlu0 %v1733
        %v1735 = vpop.xlane.xlu0 %1734
        %v1736 = vcvt.f32.s32 %v1735
        %v1737 = vcvt.f32.s32 %v1731
        %v1738 = vshll.u32 %v1737, 16
        %v1739 = vadd.s32 %v1738, %v1736
        %v1740 = vsel %vm927, %v1668, 2147483647
        %v1741 = vand.u32 %v1740, 65535
        %v1742 = vshra.s32 %v1740, 16
        %v1743 = vcvt.s32.f32 %v1741
        %v1744 = vcvt.s32.f32 %v1742
        %1745 = vmin.xlane.f32.xlu0 %v1744
        %v1746 = vpop.xlane.xlu0 %1745
        %vm1747 = vcmp.eq.f32.partialorder %v1744, %v1746
        %v1748 = vsel %vm1747, %v1743, inf
        %1749 = vmin.xlane.f32.xlu0 %v1748
        %v1750 = vpop.xlane.xlu0 %1749
        %v1751 = vcvt.f32.s32 %v1750
        %v1752 = vcvt.f32.s32 %v1746
        %v1753 = vshll.u32 %v1752, 16
        %v1754 = vadd.s32 %v1753, %v1751
        %v1755 = vsel %vm927, %v1669, 2147483647
        %v1756 = vand.u32 %v1755, 65535
        %v1757 = vshra.s32 %v1755, 16
        %v1758 = vcvt.s32.f32 %v1756
        %v1759 = vcvt.s32.f32 %v1757
        %1760 = vmin.xlane.f32.xlu0 %v1759
        %v1761 = vpop.xlane.xlu0 %1760
        %vm1762 = vcmp.eq.f32.partialorder %v1759, %v1761
        %v1763 = vsel %vm1762, %v1758, inf
        %1764 = vmin.xlane.f32.xlu0 %v1763
        %v1765 = vpop.xlane.xlu0 %1764
        %v1766 = vcvt.f32.s32 %v1765
        %v1767 = vcvt.f32.s32 %v1761
        %v1768 = vshll.u32 %v1767, 16
        %v1769 = vadd.s32 %v1768, %v1766
        %v1770 = vsel %vm927, %v1670, 2147483647
        %v1771 = vand.u32 %v1770, 65535
        %v1772 = vshra.s32 %v1770, 16
        %v1773 = vcvt.s32.f32 %v1771
        %v1774 = vcvt.s32.f32 %v1772
        %1775 = vmin.xlane.f32.xlu0 %v1774
        %v1776 = vpop.xlane.xlu0 %1775
        %vm1777 = vcmp.eq.f32.partialorder %v1774, %v1776
        %v1778 = vsel %vm1777, %v1773, inf
        %1779 = vmin.xlane.f32.xlu0 %v1778
        %v1780 = vpop.xlane.xlu0 %1779
        %v1781 = vcvt.f32.s32 %v1780
        %v1782 = vcvt.f32.s32 %v1776
        %v1783 = vshll.u32 %v1782, 16
        %v1784 = vadd.s32 %v1783, %v1781
        %v1785 = vsel %vm927, %v1671, 2147483647
        %v1786 = vand.u32 %v1785, 65535
        %v1787 = vshra.s32 %v1785, 16
        %v1788 = vcvt.s32.f32 %v1786
        %v1789 = vcvt.s32.f32 %v1787
        %1790 = vmin.xlane.f32.xlu0 %v1789
        %v1791 = vpop.xlane.xlu0 %1790
        %vm1792 = vcmp.eq.f32.partialorder %v1789, %v1791
        %v1793 = vsel %vm1792, %v1788, inf
        %1794 = vmin.xlane.f32.xlu0 %v1793
        %v1795 = vpop.xlane.xlu0 %1794
        %v1796 = vcvt.f32.s32 %v1795
        %v1797 = vcvt.f32.s32 %v1791
        %v1798 = vshll.u32 %v1797, 16
        %v1799 = vadd.s32 %v1798, %v1796
        %v1800 = vsel %vm927, %v1672, 2147483647
        %v1801 = vand.u32 %v1800, 65535
        %v1802 = vshra.s32 %v1800, 16
        %v1803 = vcvt.s32.f32 %v1801
        %v1804 = vcvt.s32.f32 %v1802
        %1805 = vmin.xlane.f32.xlu0 %v1804
        %v1806 = vpop.xlane.xlu0 %1805
        %vm1807 = vcmp.eq.f32.partialorder %v1804, %v1806
        %v1808 = vsel %vm1807, %v1803, inf
        %1809 = vmin.xlane.f32.xlu0 %v1808
        %v1810 = vpop.xlane.xlu0 %1809
        %v1811 = vcvt.f32.s32 %v1810
        %v1812 = vcvt.f32.s32 %v1806
        %v1813 = vshll.u32 %v1812, 16
        %v1814 = vadd.s32 %v1813, %v1811
        %v1815 = vsel %vm927, %v1673, 2147483647
        %v1816 = vand.u32 %v1815, 65535
        %v1817 = vshra.s32 %v1815, 16
        %v1818 = vcvt.s32.f32 %v1816
        %v1819 = vcvt.s32.f32 %v1817
        %1820 = vmin.xlane.f32.xlu0 %v1819
        %v1821 = vpop.xlane.xlu0 %1820
        %vm1822 = vcmp.eq.f32.partialorder %v1819, %v1821
        %v1823 = vsel %vm1822, %v1818, inf
        %1824 = vmin.xlane.f32.xlu0 %v1823
        %v1825 = vpop.xlane.xlu0 %1824
        %v1826 = vcvt.f32.s32 %v1825
        %v1827 = vcvt.f32.s32 %v1821
        %v1828 = vshll.u32 %v1827, 16
        %v1829 = vadd.s32 %v1828, %v1826
        %v1830 = vsel %vm927, %v1674, 2147483647
        %v1831 = vand.u32 %v1830, 65535
        %v1832 = vshra.s32 %v1830, 16
        %v1833 = vcvt.s32.f32 %v1831
        %v1834 = vcvt.s32.f32 %v1832
        %1835 = vmin.xlane.f32.xlu0 %v1834
        %v1836 = vpop.xlane.xlu0 %1835
        %vm1837 = vcmp.eq.f32.partialorder %v1834, %v1836
        %v1838 = vsel %vm1837, %v1833, inf
        %1839 = vmin.xlane.f32.xlu0 %v1838
        %v1840 = vpop.xlane.xlu0 %1839
        %v1841 = vcvt.f32.s32 %v1840
        %v1842 = vcvt.f32.s32 %v1836
        %v1843 = vshll.u32 %v1842, 16
        %v1844 = vadd.s32 %v1843, %v1841
        %v1845 = vsel %vm927, %v1675, 2147483647
        %v1846 = vand.u32 %v1845, 65535
        %v1847 = vshra.s32 %v1845, 16
        %v1848 = vcvt.s32.f32 %v1846
        %v1849 = vcvt.s32.f32 %v1847
        %1850 = vmin.xlane.f32.xlu0 %v1849
        %v1851 = vpop.xlane.xlu0 %1850
        %vm1852 = vcmp.eq.f32.partialorder %v1849, %v1851
        %v1853 = vsel %vm1852, %v1848, inf
        %1854 = vmin.xlane.f32.xlu0 %v1853
        %v1855 = vpop.xlane.xlu0 %1854
        %v1856 = vcvt.f32.s32 %v1855
        %v1857 = vcvt.f32.s32 %v1851
        %v1858 = vshll.u32 %v1857, 16
        %v1859 = vadd.s32 %v1858, %v1856
        %v1860 = vsel %vm927, %v1676, 2147483647
        %v1861 = vand.u32 %v1860, 65535
        %v1862 = vshra.s32 %v1860, 16
        %v1863 = vcvt.s32.f32 %v1861
        %v1864 = vcvt.s32.f32 %v1862
        %1865 = vmin.xlane.f32.xlu0 %v1864
        %v1866 = vpop.xlane.xlu0 %1865
        %vm1867 = vcmp.eq.f32.partialorder %v1864, %v1866
        %v1868 = vsel %vm1867, %v1863, inf
        %1869 = vmin.xlane.f32.xlu0 %v1868
        %v1870 = vpop.xlane.xlu0 %1869
        %v1871 = vcvt.f32.s32 %v1870
        %v1872 = vcvt.f32.s32 %v1866
        %v1873 = vshll.u32 %v1872, 16
        %v1874 = vadd.s32 %v1873, %v1871
        %v1875 = vsel %vm927, %v1677, 2147483647
        %v1876 = vand.u32 %v1875, 65535
        %v1877 = vshra.s32 %v1875, 16
        %v1878 = vcvt.s32.f32 %v1876
        %v1879 = vcvt.s32.f32 %v1877
        %1880 = vmin.xlane.f32.xlu0 %v1879
        %v1881 = vpop.xlane.xlu0 %1880
        %vm1882 = vcmp.eq.f32.partialorder %v1879, %v1881
        %v1883 = vsel %vm1882, %v1878, inf
        %1884 = vmin.xlane.f32.xlu0 %v1883
        %v1885 = vpop.xlane.xlu0 %1884
        %v1886 = vcvt.f32.s32 %v1885
        %v1887 = vcvt.f32.s32 %v1881
        %v1888 = vshll.u32 %v1887, 16
        %v1889 = vadd.s32 %v1888, %v1886
        %v1890 = vsel %vm927, %v1678, 2147483647
        %v1891 = vand.u32 %v1890, 65535
        %v1892 = vshra.s32 %v1890, 16
        %v1893 = vcvt.s32.f32 %v1891
        %v1894 = vcvt.s32.f32 %v1892
        %1895 = vmin.xlane.f32.xlu0 %v1894
        %v1896 = vpop.xlane.xlu0 %1895
        %vm1897 = vcmp.eq.f32.partialorder %v1894, %v1896
        %v1898 = vsel %vm1897, %v1893, inf
        %1899 = vmin.xlane.f32.xlu0 %v1898
        %v1900 = vpop.xlane.xlu0 %1899
        %v1901 = vcvt.f32.s32 %v1900
        %v1902 = vcvt.f32.s32 %v1896
        %v1903 = vshll.u32 %v1902, 16
        %v1904 = vadd.s32 %v1903, %v1901
        %v1905 = vsel %vm927, %v1679, 2147483647
        %v1906 = vand.u32 %v1905, 65535
        %v1907 = vshra.s32 %v1905, 16
        %v1908 = vcvt.s32.f32 %v1906
        %v1909 = vcvt.s32.f32 %v1907
        %1910 = vmin.xlane.f32.xlu0 %v1909
        %v1911 = vpop.xlane.xlu0 %1910
        %vm1912 = vcmp.eq.f32.partialorder %v1909, %v1911
        %v1913 = vsel %vm1912, %v1908, inf
        %1914 = vmin.xlane.f32.xlu0 %v1913
        %v1915 = vpop.xlane.xlu0 %1914
        %v1916 = vcvt.f32.s32 %v1915
        %v1917 = vcvt.f32.s32 %v1911
        %v1918 = vshll.u32 %v1917, 16
        %v1919 = vadd.s32 %v1918, %v1916
        %vm1920 = vcmp.eq.s32.totalorder %v926, %v1694
        %vm1921 = vcmp.eq.s32.totalorder %v926, %v1709
        %vm1922 = vcmp.eq.s32.totalorder %v926, %v1724
        %vm1923 = vcmp.eq.s32.totalorder %v926, %v1739
        %vm1924 = vcmp.eq.s32.totalorder %v926, %v1754
        %vm1925 = vcmp.eq.s32.totalorder %v926, %v1769
        %vm1926 = vcmp.eq.s32.totalorder %v926, %v1784
        %vm1927 = vcmp.eq.s32.totalorder %v926, %v1799
        %vm1928 = vcmp.eq.s32.totalorder %v926, %v1814
        %vm1929 = vcmp.eq.s32.totalorder %v926, %v1829
        %vm1930 = vcmp.eq.s32.totalorder %v926, %v1844
        %vm1931 = vcmp.eq.s32.totalorder %v926, %v1859
        %vm1932 = vcmp.eq.s32.totalorder %v926, %v1874
        %vm1933 = vcmp.eq.s32.totalorder %v926, %v1889
        %vm1934 = vcmp.eq.s32.totalorder %v926, %v1904
        %vm1935 = vcmp.eq.s32.totalorder %v926, %v1919
        %v1936 = vadd.f32 %v1602, %v815
        %v1937 = vadd.f32 %v1605, %v820
        %v1938 = vadd.f32 %v1608, %v825
        %v1939 = vadd.f32 %v1611, %v830
        %v1940 = vadd.f32 %v1614, %v835
        %v1941 = vadd.f32 %v1617, %v840
        %v1942 = vadd.f32 %v1620, %v845
        %v1943 = vadd.f32 %v1623, %v850
        %v1944 = vadd.f32 %v1626, %v855
        %v1945 = vadd.f32 %v1629, %v860
        %v1946 = vadd.f32 %v1632, %v865
        %v1947 = vadd.f32 %v1635, %v870
        %v1948 = vadd.f32 %v1638, %v875
        %v1949 = vadd.f32 %v1641, %v880
        %v1950 = vadd.f32 %v1644, %v885
        %v1951 = vadd.f32 %v1647, %v890
        %v1952 = vmax.f32 %v1936, 0.0
        %v1953 = vmax.f32 %v1937, 0.0
        %v1954 = vmax.f32 %v1938, 0.0
        %v1955 = vmax.f32 %v1939, 0.0
        %v1956 = vmax.f32 %v1940, 0.0
        %v1957 = vmax.f32 %v1941, 0.0
        %v1958 = vmax.f32 %v1942, 0.0
        %v1959 = vmax.f32 %v1943, 0.0
        %v1960 = vmax.f32 %v1944, 0.0
        %v1961 = vmax.f32 %v1945, 0.0
        %v1962 = vmax.f32 %v1946, 0.0
        %v1963 = vmax.f32 %v1947, 0.0
        %v1964 = vmax.f32 %v1948, 0.0
        %v1965 = vmax.f32 %v1949, 0.0
        %v1966 = vmax.f32 %v1950, 0.0
        %v1967 = vmax.f32 %v1951, 0.0
        %v1968 = vrsqrt.pop %v1952
        %v1969 = vmul.f32 %v1952, %v1968
        %vm1970 = vcmp.eq.f32.partialorder %v1952, inf
        %v1971 = vsel %vm1970, %v1952, %v1969
        %vm1972 = vcmp.eq.f32.partialorder %v1952, 0.0
        %v1973 = vand.u32 %v1952, 2147483648
        %v1974 = vsel %vm1972, %v1973, %v1971
        %v1975 = vrsqrt.pop %v1953
        %v1976 = vmul.f32 %v1953, %v1975
        %vm1977 = vcmp.eq.f32.partialorder %v1953, inf
        %v1978 = vsel %vm1977, %v1953, %v1976
        %vm1979 = vcmp.eq.f32.partialorder %v1953, 0.0
        %v1980 = vand.u32 %v1953, 2147483648
        %v1981 = vsel %vm1979, %v1980, %v1978
        %v1982 = vrsqrt.pop %v1954
        %v1983 = vmul.f32 %v1954, %v1982
        %vm1984 = vcmp.eq.f32.partialorder %v1954, inf
        %v1985 = vsel %vm1984, %v1954, %v1983
        %vm1986 = vcmp.eq.f32.partialorder %v1954, 0.0
        %v1987 = vand.u32 %v1954, 2147483648
        %v1988 = vsel %vm1986, %v1987, %v1985
        %v1989 = vrsqrt.pop %v1955
        %v1990 = vmul.f32 %v1955, %v1989
        %vm1991 = vcmp.eq.f32.partialorder %v1955, inf
        %v1992 = vsel %vm1991, %v1955, %v1990
        %vm1993 = vcmp.eq.f32.partialorder %v1955, 0.0
        %v1994 = vand.u32 %v1955, 2147483648
        %v1995 = vsel %vm1993, %v1994, %v1992
        %v1996 = vrsqrt.pop %v1956
        %v1997 = vmul.f32 %v1956, %v1996
        %vm1998 = vcmp.eq.f32.partialorder %v1956, inf
        %v1999 = vsel %vm1998, %v1956, %v1997
        %vm2000 = vcmp.eq.f32.partialorder %v1956, 0.0
        %v2001 = vand.u32 %v1956, 2147483648
        %v2002 = vsel %vm2000, %v2001, %v1999
        %v2003 = vrsqrt.pop %v1957
        %v2004 = vmul.f32 %v1957, %v2003
        %vm2005 = vcmp.eq.f32.partialorder %v1957, inf
        %v2006 = vsel %vm2005, %v1957, %v2004
        %vm2007 = vcmp.eq.f32.partialorder %v1957, 0.0
        %v2008 = vand.u32 %v1957, 2147483648
        %v2009 = vsel %vm2007, %v2008, %v2006
        %v2010 = vrsqrt.pop %v1958
        %v2011 = vmul.f32 %v1958, %v2010
        %vm2012 = vcmp.eq.f32.partialorder %v1958, inf
        %v2013 = vsel %vm2012, %v1958, %v2011
        %vm2014 = vcmp.eq.f32.partialorder %v1958, 0.0
        %v2015 = vand.u32 %v1958, 2147483648
        %v2016 = vsel %vm2014, %v2015, %v2013
        %v2017 = vrsqrt.pop %v1959
        %v2018 = vmul.f32 %v1959, %v2017
        %vm2019 = vcmp.eq.f32.partialorder %v1959, inf
        %v2020 = vsel %vm2019, %v1959, %v2018
        %vm2021 = vcmp.eq.f32.partialorder %v1959, 0.0
        %v2022 = vand.u32 %v1959, 2147483648
        %v2023 = vsel %vm2021, %v2022, %v2020
        %v2024 = vrsqrt.pop %v1960
        %v2025 = vmul.f32 %v1960, %v2024
        %vm2026 = vcmp.eq.f32.partialorder %v1960, inf
        %v2027 = vsel %vm2026, %v1960, %v2025
        %vm2028 = vcmp.eq.f32.partialorder %v1960, 0.0
        %v2029 = vand.u32 %v1960, 2147483648
        %v2030 = vsel %vm2028, %v2029, %v2027
        %v2031 = vrsqrt.pop %v1961
        %v2032 = vmul.f32 %v1961, %v2031
        %vm2033 = vcmp.eq.f32.partialorder %v1961, inf
        %v2034 = vsel %vm2033, %v1961, %v2032
        %vm2035 = vcmp.eq.f32.partialorder %v1961, 0.0
        %v2036 = vand.u32 %v1961, 2147483648
        %v2037 = vsel %vm2035, %v2036, %v2034
        %v2038 = vrsqrt.pop %v1962
        %v2039 = vmul.f32 %v1962, %v2038
        %vm2040 = vcmp.eq.f32.partialorder %v1962, inf
        %v2041 = vsel %vm2040, %v1962, %v2039
        %vm2042 = vcmp.eq.f32.partialorder %v1962, 0.0
        %v2043 = vand.u32 %v1962, 2147483648
        %v2044 = vsel %vm2042, %v2043, %v2041
        %v2045 = vrsqrt.pop %v1963
        %v2046 = vmul.f32 %v1963, %v2045
        %vm2047 = vcmp.eq.f32.partialorder %v1963, inf
        %v2048 = vsel %vm2047, %v1963, %v2046
        %vm2049 = vcmp.eq.f32.partialorder %v1963, 0.0
        %v2050 = vand.u32 %v1963, 2147483648
        %v2051 = vsel %vm2049, %v2050, %v2048
        %v2052 = vrsqrt.pop %v1964
        %v2053 = vmul.f32 %v1964, %v2052
        %vm2054 = vcmp.eq.f32.partialorder %v1964, inf
        %v2055 = vsel %vm2054, %v1964, %v2053
        %vm2056 = vcmp.eq.f32.partialorder %v1964, 0.0
        %v2057 = vand.u32 %v1964, 2147483648
        %v2058 = vsel %vm2056, %v2057, %v2055
        %v2059 = vrsqrt.pop %v1965
        %v2060 = vmul.f32 %v1965, %v2059
        %vm2061 = vcmp.eq.f32.partialorder %v1965, inf
        %v2062 = vsel %vm2061, %v1965, %v2060
        %vm2063 = vcmp.eq.f32.partialorder %v1965, 0.0
        %v2064 = vand.u32 %v1965, 2147483648
        %v2065 = vsel %vm2063, %v2064, %v2062
        %v2066 = vrsqrt.pop %v1966
        %v2067 = vmul.f32 %v1966, %v2066
        %vm2068 = vcmp.eq.f32.partialorder %v1966, inf
        %v2069 = vsel %vm2068, %v1966, %v2067
        %vm2070 = vcmp.eq.f32.partialorder %v1966, 0.0
        %v2071 = vand.u32 %v1966, 2147483648
        %v2072 = vsel %vm2070, %v2071, %v2069
        %v2073 = vrsqrt.pop %v1967
        %v2074 = vmul.f32 %v1967, %v2073
        %vm2075 = vcmp.eq.f32.partialorder %v1967, inf
        %v2076 = vsel %vm2075, %v1967, %v2074
        %vm2077 = vcmp.eq.f32.partialorder %v1967, 0.0
        %v2078 = vand.u32 %v1967, 2147483648
        %v2079 = vsel %vm2077, %v2078, %v2076
        %v2080 = vadd.f32 %v1974, 1e-10
        %v2081 = vadd.f32 %v1981, 1e-10
        %v2082 = vadd.f32 %v1988, 1e-10
        %v2083 = vadd.f32 %v1995, 1e-10
        %v2084 = vadd.f32 %v2002, 1e-10
        %v2085 = vadd.f32 %v2009, 1e-10
        %v2086 = vadd.f32 %v2016, 1e-10
        %v2087 = vadd.f32 %v2023, 1e-10
        %v2088 = vadd.f32 %v2030, 1e-10
        %v2089 = vadd.f32 %v2037, 1e-10
        %v2090 = vadd.f32 %v2044, 1e-10
        %v2091 = vadd.f32 %v2051, 1e-10
        %v2092 = vadd.f32 %v2058, 1e-10
        %v2093 = vadd.f32 %v2065, 1e-10
        %v2094 = vadd.f32 %v2072, 1e-10
        %v2095 = vadd.f32 %v2079, 1e-10
        %v2096 = vrcp.pop %v2080
        %v2097 = vmul.f32 1.0, %v2096
        %v2098 = vrcp.pop %v2081
        %v2099 = vmul.f32 1.0, %v2098
        %v2100 = vrcp.pop %v2082
        %v2101 = vmul.f32 1.0, %v2100
        %v2102 = vrcp.pop %v2083
        %v2103 = vmul.f32 1.0, %v2102
        %v2104 = vrcp.pop %v2084
        %v2105 = vmul.f32 1.0, %v2104
        %v2106 = vrcp.pop %v2085
        %v2107 = vmul.f32 1.0, %v2106
        %v2108 = vrcp.pop %v2086
        %v2109 = vmul.f32 1.0, %v2108
        %v2110 = vrcp.pop %v2087
        %v2111 = vmul.f32 1.0, %v2110
        %v2112 = vrcp.pop %v2088
        %v2113 = vmul.f32 1.0, %v2112
        %v2114 = vrcp.pop %v2089
        %v2115 = vmul.f32 1.0, %v2114
        %v2116 = vrcp.pop %v2090
        %v2117 = vmul.f32 1.0, %v2116
        %v2118 = vrcp.pop %v2091
        %v2119 = vmul.f32 1.0, %v2118
        %v2120 = vrcp.pop %v2092
        %v2121 = vmul.f32 1.0, %v2120
        %v2122 = vrcp.pop %v2093
        %v2123 = vmul.f32 1.0, %v2122
        %v2124 = vrcp.pop %v2094
        %v2125 = vmul.f32 1.0, %v2124
        %v2126 = vrcp.pop %v2095
        %v2127 = vmul.f32 1.0, %v2126
        %2129 = vset.pattern.permute.xlu0 0
        %2130 = vperm.xlu0 %2129, %v2097
        %v2131 = vpop.permute.xlu0 %2130
        %2134 = vset.pattern.permute.xlu0 0
        %2135 = vperm.xlu0 %2134, %v2099
        %v2136 = vpop.permute.xlu0 %2135
        %2139 = vset.pattern.permute.xlu0 0
        %2140 = vperm.xlu0 %2139, %v2101
        %v2141 = vpop.permute.xlu0 %2140
        %2144 = vset.pattern.permute.xlu0 0
        %2145 = vperm.xlu0 %2144, %v2103
        %v2146 = vpop.permute.xlu0 %2145
        %2149 = vset.pattern.permute.xlu0 0
        %2150 = vperm.xlu0 %2149, %v2105
        %v2151 = vpop.permute.xlu0 %2150
        %2154 = vset.pattern.permute.xlu0 0
        %2155 = vperm.xlu0 %2154, %v2107
        %v2156 = vpop.permute.xlu0 %2155
        %2159 = vset.pattern.permute.xlu0 0
        %2160 = vperm.xlu0 %2159, %v2109
        %v2161 = vpop.permute.xlu0 %2160
        %2164 = vset.pattern.permute.xlu0 0
        %2165 = vperm.xlu0 %2164, %v2111
        %v2166 = vpop.permute.xlu0 %2165
        %2169 = vset.pattern.permute.xlu0 0
        %2170 = vperm.xlu0 %2169, %v2113
        %v2171 = vpop.permute.xlu0 %2170
        %2174 = vset.pattern.permute.xlu0 0
        %2175 = vperm.xlu0 %2174, %v2115
        %v2176 = vpop.permute.xlu0 %2175
        %2179 = vset.pattern.permute.xlu0 0
        %2180 = vperm.xlu0 %2179, %v2117
        %v2181 = vpop.permute.xlu0 %2180
        %2184 = vset.pattern.permute.xlu0 0
        %2185 = vperm.xlu0 %2184, %v2119
        %v2186 = vpop.permute.xlu0 %2185
        %2189 = vset.pattern.permute.xlu0 0
        %2190 = vperm.xlu0 %2189, %v2121
        %v2191 = vpop.permute.xlu0 %2190
        %2194 = vset.pattern.permute.xlu0 0
        %2195 = vperm.xlu0 %2194, %v2123
        %v2196 = vpop.permute.xlu0 %2195
        %2199 = vset.pattern.permute.xlu0 0
        %2200 = vperm.xlu0 %2199, %v2125
        %v2201 = vpop.permute.xlu0 %2200
        %2204 = vset.pattern.permute.xlu0 0
        %2205 = vperm.xlu0 %2204, %v2127
        %v2206 = vpop.permute.xlu0 %2205
        %v2208 = vsel %vm1920, %v2131, 0.0
        %v2209 = vsel %vm1921, %v2136, 0.0
        %v2210 = vsel %vm1922, %v2141, 0.0
        %v2211 = vsel %vm1923, %v2146, 0.0
        %v2212 = vsel %vm1924, %v2151, 0.0
        %v2213 = vsel %vm1925, %v2156, 0.0
        %v2214 = vsel %vm1926, %v2161, 0.0
        %v2215 = vsel %vm1927, %v2166, 0.0
        %v2216 = vsel %vm1928, %v2171, 0.0
        %v2217 = vsel %vm1929, %v2176, 0.0
        %v2218 = vsel %vm1930, %v2181, 0.0
        %v2219 = vsel %vm1931, %v2186, 0.0
        %v2220 = vsel %vm1932, %v2191, 0.0
        %v2221 = vsel %vm1933, %v2196, 0.0
        %v2222 = vsel %vm1934, %v2201, 0.0
        %v2223 = vsel %vm1935, %v2206, 0.0
        %v2224 = vadd.f32 %v1552, %v2208
        %v2225 = vadd.f32 %v1553, %v2209
        %v2226 = vadd.f32 %v1554, %v2210
        %v2227 = vadd.f32 %v1555, %v2211
        %v2228 = vadd.f32 %v1556, %v2212
        %v2229 = vadd.f32 %v1557, %v2213
        %v2230 = vadd.f32 %v1558, %v2214
        %v2231 = vadd.f32 %v1559, %v2215
        %v2232 = vadd.f32 %v1560, %v2216
        %v2233 = vadd.f32 %v1561, %v2217
        %v2234 = vadd.f32 %v1562, %v2218
        %v2235 = vadd.f32 %v1563, %v2219
        %v2236 = vadd.f32 %v1564, %v2220
        %v2237 = vadd.f32 %v1565, %v2221
        %v2238 = vadd.f32 %v1566, %v2222
        %v2239 = vadd.f32 %v1567, %v2223
        %v2240 = vadd.f32 %v1568, %v2097
        %v2241 = vadd.f32 %v1569, %v2099
        %v2242 = vadd.f32 %v1570, %v2101
        %v2243 = vadd.f32 %v1571, %v2103
        %v2244 = vadd.f32 %v1572, %v2105
        %v2245 = vadd.f32 %v1573, %v2107
        %v2246 = vadd.f32 %v1574, %v2109
        %v2247 = vadd.f32 %v1575, %v2111
        %v2248 = vadd.f32 %v1576, %v2113
        %v2249 = vadd.f32 %v1577, %v2115
        %v2250 = vadd.f32 %v1578, %v2117
        %v2251 = vadd.f32 %v1579, %v2119
        %v2252 = vadd.f32 %v1580, %v2121
        %v2253 = vadd.f32 %v1581, %v2123
        %v2254 = vadd.f32 %v1582, %v2125
        %v2255 = vadd.f32 %v1583, %v2127
        %v2256 = vsel %vm1920, 3e+38, %v1584
        %v2257 = vsel %vm1921, 3e+38, %v1585
        %v2258 = vsel %vm1922, 3e+38, %v1586
        %v2259 = vsel %vm1923, 3e+38, %v1587
        %v2260 = vsel %vm1924, 3e+38, %v1588
        %v2261 = vsel %vm1925, 3e+38, %v1589
        %v2262 = vsel %vm1926, 3e+38, %v1590
        %v2263 = vsel %vm1927, 3e+38, %v1591
        %v2264 = vsel %vm1928, 3e+38, %v1592
        %v2265 = vsel %vm1929, 3e+38, %v1593
        %v2266 = vsel %vm1930, 3e+38, %v1594
        %v2267 = vsel %vm1931, 3e+38, %v1595
        %v2268 = vsel %vm1932, 3e+38, %v1596
        %v2269 = vsel %vm1933, 3e+38, %v1597
        %v2270 = vsel %vm1934, 3e+38, %v1598
        %v2271 = vsel %vm1935, 3e+38, %v1599
        %v2272 = vsel %vm927, %v2256, inf
        %2273 = vmin.xlane.f32.xlu0 %v2272
        %v2274 = vpop.xlane.xlu0 %2273
        %v2275 = vsel %vm927, %v2257, inf
        %2276 = vmin.xlane.f32.xlu0 %v2275
        %v2277 = vpop.xlane.xlu0 %2276
        %v2278 = vsel %vm927, %v2258, inf
        %2279 = vmin.xlane.f32.xlu0 %v2278
        %v2280 = vpop.xlane.xlu0 %2279
        %v2281 = vsel %vm927, %v2259, inf
        %2282 = vmin.xlane.f32.xlu0 %v2281
        %v2283 = vpop.xlane.xlu0 %2282
        %v2284 = vsel %vm927, %v2260, inf
        %2285 = vmin.xlane.f32.xlu0 %v2284
        %v2286 = vpop.xlane.xlu0 %2285
        %v2287 = vsel %vm927, %v2261, inf
        %2288 = vmin.xlane.f32.xlu0 %v2287
        %v2289 = vpop.xlane.xlu0 %2288
        %v2290 = vsel %vm927, %v2262, inf
        %2291 = vmin.xlane.f32.xlu0 %v2290
        %v2292 = vpop.xlane.xlu0 %2291
        %v2293 = vsel %vm927, %v2263, inf
        %2294 = vmin.xlane.f32.xlu0 %v2293
        %v2295 = vpop.xlane.xlu0 %2294
        %v2296 = vsel %vm927, %v2264, inf
        %2297 = vmin.xlane.f32.xlu0 %v2296
        %v2298 = vpop.xlane.xlu0 %2297
        %v2299 = vsel %vm927, %v2265, inf
        %2300 = vmin.xlane.f32.xlu0 %v2299
        %v2301 = vpop.xlane.xlu0 %2300
        %v2302 = vsel %vm927, %v2266, inf
        %2303 = vmin.xlane.f32.xlu0 %v2302
        %v2304 = vpop.xlane.xlu0 %2303
        %v2305 = vsel %vm927, %v2267, inf
        %2306 = vmin.xlane.f32.xlu0 %v2305
        %v2307 = vpop.xlane.xlu0 %2306
        %v2308 = vsel %vm927, %v2268, inf
        %2309 = vmin.xlane.f32.xlu0 %v2308
        %v2310 = vpop.xlane.xlu0 %2309
        %v2311 = vsel %vm927, %v2269, inf
        %2312 = vmin.xlane.f32.xlu0 %v2311
        %v2313 = vpop.xlane.xlu0 %2312
        %v2314 = vsel %vm927, %v2270, inf
        %2315 = vmin.xlane.f32.xlu0 %v2314
        %v2316 = vpop.xlane.xlu0 %2315
        %v2317 = vsel %vm927, %v2271, inf
        %2318 = vmin.xlane.f32.xlu0 %v2317
        %v2319 = vpop.xlane.xlu0 %2318
        %vm2320 = vcmp.eq.f32.partialorder %v2256, %v2274
        %vm2321 = vcmp.eq.f32.partialorder %v2257, %v2277
        %vm2322 = vcmp.eq.f32.partialorder %v2258, %v2280
        %vm2323 = vcmp.eq.f32.partialorder %v2259, %v2283
        %vm2324 = vcmp.eq.f32.partialorder %v2260, %v2286
        %vm2325 = vcmp.eq.f32.partialorder %v2261, %v2289
        %vm2326 = vcmp.eq.f32.partialorder %v2262, %v2292
        %vm2327 = vcmp.eq.f32.partialorder %v2263, %v2295
        %vm2328 = vcmp.eq.f32.partialorder %v2264, %v2298
        %vm2329 = vcmp.eq.f32.partialorder %v2265, %v2301
        %vm2330 = vcmp.eq.f32.partialorder %v2266, %v2304
        %vm2331 = vcmp.eq.f32.partialorder %v2267, %v2307
        %vm2332 = vcmp.eq.f32.partialorder %v2268, %v2310
        %vm2333 = vcmp.eq.f32.partialorder %v2269, %v2313
        %vm2334 = vcmp.eq.f32.partialorder %v2270, %v2316
        %vm2335 = vcmp.eq.f32.partialorder %v2271, %v2319
        %v2336 = vsel %vm2320, %v926, 16
        %v2337 = vsel %vm2321, %v926, 16
        %v2338 = vsel %vm2322, %v926, 16
        %v2339 = vsel %vm2323, %v926, 16
        %v2340 = vsel %vm2324, %v926, 16
        %v2341 = vsel %vm2325, %v926, 16
        %v2342 = vsel %vm2326, %v926, 16
        %v2343 = vsel %vm2327, %v926, 16
        %v2344 = vsel %vm2328, %v926, 16
        %v2345 = vsel %vm2329, %v926, 16
        %v2346 = vsel %vm2330, %v926, 16
        %v2347 = vsel %vm2331, %v926, 16
        %v2348 = vsel %vm2332, %v926, 16
        %v2349 = vsel %vm2333, %v926, 16
        %v2350 = vsel %vm2334, %v926, 16
        %v2351 = vsel %vm2335, %v926, 16
        %v2352 = vsel %vm927, %v2336, 2147483647
        %v2353 = vand.u32 %v2352, 65535
        %v2354 = vshra.s32 %v2352, 16
        %v2355 = vcvt.s32.f32 %v2353
        %v2356 = vcvt.s32.f32 %v2354
        %2357 = vmin.xlane.f32.xlu0 %v2356
        %v2358 = vpop.xlane.xlu0 %2357
        %vm2359 = vcmp.eq.f32.partialorder %v2356, %v2358
        %v2360 = vsel %vm2359, %v2355, inf
        %2361 = vmin.xlane.f32.xlu0 %v2360
        %v2362 = vpop.xlane.xlu0 %2361
        %v2363 = vcvt.f32.s32 %v2362
        %v2364 = vcvt.f32.s32 %v2358
        %v2365 = vshll.u32 %v2364, 16
        %v2366 = vadd.s32 %v2365, %v2363
        %v2367 = vsel %vm927, %v2337, 2147483647
        %v2368 = vand.u32 %v2367, 65535
        %v2369 = vshra.s32 %v2367, 16
        %v2370 = vcvt.s32.f32 %v2368
        %v2371 = vcvt.s32.f32 %v2369
        %2372 = vmin.xlane.f32.xlu0 %v2371
        %v2373 = vpop.xlane.xlu0 %2372
        %vm2374 = vcmp.eq.f32.partialorder %v2371, %v2373
        %v2375 = vsel %vm2374, %v2370, inf
        %2376 = vmin.xlane.f32.xlu0 %v2375
        %v2377 = vpop.xlane.xlu0 %2376
        %v2378 = vcvt.f32.s32 %v2377
        %v2379 = vcvt.f32.s32 %v2373
        %v2380 = vshll.u32 %v2379, 16
        %v2381 = vadd.s32 %v2380, %v2378
        %v2382 = vsel %vm927, %v2338, 2147483647
        %v2383 = vand.u32 %v2382, 65535
        %v2384 = vshra.s32 %v2382, 16
        %v2385 = vcvt.s32.f32 %v2383
        %v2386 = vcvt.s32.f32 %v2384
        %2387 = vmin.xlane.f32.xlu0 %v2386
        %v2388 = vpop.xlane.xlu0 %2387
        %vm2389 = vcmp.eq.f32.partialorder %v2386, %v2388
        %v2390 = vsel %vm2389, %v2385, inf
        %2391 = vmin.xlane.f32.xlu0 %v2390
        %v2392 = vpop.xlane.xlu0 %2391
        %v2393 = vcvt.f32.s32 %v2392
        %v2394 = vcvt.f32.s32 %v2388
        %v2395 = vshll.u32 %v2394, 16
        %v2396 = vadd.s32 %v2395, %v2393
        %v2397 = vsel %vm927, %v2339, 2147483647
        %v2398 = vand.u32 %v2397, 65535
        %v2399 = vshra.s32 %v2397, 16
        %v2400 = vcvt.s32.f32 %v2398
        %v2401 = vcvt.s32.f32 %v2399
        %2402 = vmin.xlane.f32.xlu0 %v2401
        %v2403 = vpop.xlane.xlu0 %2402
        %vm2404 = vcmp.eq.f32.partialorder %v2401, %v2403
        %v2405 = vsel %vm2404, %v2400, inf
        %2406 = vmin.xlane.f32.xlu0 %v2405
        %v2407 = vpop.xlane.xlu0 %2406
        %v2408 = vcvt.f32.s32 %v2407
        %v2409 = vcvt.f32.s32 %v2403
        %v2410 = vshll.u32 %v2409, 16
        %v2411 = vadd.s32 %v2410, %v2408
        %v2412 = vsel %vm927, %v2340, 2147483647
        %v2413 = vand.u32 %v2412, 65535
        %v2414 = vshra.s32 %v2412, 16
        %v2415 = vcvt.s32.f32 %v2413
        %v2416 = vcvt.s32.f32 %v2414
        %2417 = vmin.xlane.f32.xlu0 %v2416
        %v2418 = vpop.xlane.xlu0 %2417
        %vm2419 = vcmp.eq.f32.partialorder %v2416, %v2418
        %v2420 = vsel %vm2419, %v2415, inf
        %2421 = vmin.xlane.f32.xlu0 %v2420
        %v2422 = vpop.xlane.xlu0 %2421
        %v2423 = vcvt.f32.s32 %v2422
        %v2424 = vcvt.f32.s32 %v2418
        %v2425 = vshll.u32 %v2424, 16
        %v2426 = vadd.s32 %v2425, %v2423
        %v2427 = vsel %vm927, %v2341, 2147483647
        %v2428 = vand.u32 %v2427, 65535
        %v2429 = vshra.s32 %v2427, 16
        %v2430 = vcvt.s32.f32 %v2428
        %v2431 = vcvt.s32.f32 %v2429
        %2432 = vmin.xlane.f32.xlu0 %v2431
        %v2433 = vpop.xlane.xlu0 %2432
        %vm2434 = vcmp.eq.f32.partialorder %v2431, %v2433
        %v2435 = vsel %vm2434, %v2430, inf
        %2436 = vmin.xlane.f32.xlu0 %v2435
        %v2437 = vpop.xlane.xlu0 %2436
        %v2438 = vcvt.f32.s32 %v2437
        %v2439 = vcvt.f32.s32 %v2433
        %v2440 = vshll.u32 %v2439, 16
        %v2441 = vadd.s32 %v2440, %v2438
        %v2442 = vsel %vm927, %v2342, 2147483647
        %v2443 = vand.u32 %v2442, 65535
        %v2444 = vshra.s32 %v2442, 16
        %v2445 = vcvt.s32.f32 %v2443
        %v2446 = vcvt.s32.f32 %v2444
        %2447 = vmin.xlane.f32.xlu0 %v2446
        %v2448 = vpop.xlane.xlu0 %2447
        %vm2449 = vcmp.eq.f32.partialorder %v2446, %v2448
        %v2450 = vsel %vm2449, %v2445, inf
        %2451 = vmin.xlane.f32.xlu0 %v2450
        %v2452 = vpop.xlane.xlu0 %2451
        %v2453 = vcvt.f32.s32 %v2452
        %v2454 = vcvt.f32.s32 %v2448
        %v2455 = vshll.u32 %v2454, 16
        %v2456 = vadd.s32 %v2455, %v2453
        %v2457 = vsel %vm927, %v2343, 2147483647
        %v2458 = vand.u32 %v2457, 65535
        %v2459 = vshra.s32 %v2457, 16
        %v2460 = vcvt.s32.f32 %v2458
        %v2461 = vcvt.s32.f32 %v2459
        %2462 = vmin.xlane.f32.xlu0 %v2461
        %v2463 = vpop.xlane.xlu0 %2462
        %vm2464 = vcmp.eq.f32.partialorder %v2461, %v2463
        %v2465 = vsel %vm2464, %v2460, inf
        %2466 = vmin.xlane.f32.xlu0 %v2465
        %v2467 = vpop.xlane.xlu0 %2466
        %v2468 = vcvt.f32.s32 %v2467
        %v2469 = vcvt.f32.s32 %v2463
        %v2470 = vshll.u32 %v2469, 16
        %v2471 = vadd.s32 %v2470, %v2468
        %v2472 = vsel %vm927, %v2344, 2147483647
        %v2473 = vand.u32 %v2472, 65535
        %v2474 = vshra.s32 %v2472, 16
        %v2475 = vcvt.s32.f32 %v2473
        %v2476 = vcvt.s32.f32 %v2474
        %2477 = vmin.xlane.f32.xlu0 %v2476
        %v2478 = vpop.xlane.xlu0 %2477
        %vm2479 = vcmp.eq.f32.partialorder %v2476, %v2478
        %v2480 = vsel %vm2479, %v2475, inf
        %2481 = vmin.xlane.f32.xlu0 %v2480
        %v2482 = vpop.xlane.xlu0 %2481
        %v2483 = vcvt.f32.s32 %v2482
        %v2484 = vcvt.f32.s32 %v2478
        %v2485 = vshll.u32 %v2484, 16
        %v2486 = vadd.s32 %v2485, %v2483
        %v2487 = vsel %vm927, %v2345, 2147483647
        %v2488 = vand.u32 %v2487, 65535
        %v2489 = vshra.s32 %v2487, 16
        %v2490 = vcvt.s32.f32 %v2488
        %v2491 = vcvt.s32.f32 %v2489
        %2492 = vmin.xlane.f32.xlu0 %v2491
        %v2493 = vpop.xlane.xlu0 %2492
        %vm2494 = vcmp.eq.f32.partialorder %v2491, %v2493
        %v2495 = vsel %vm2494, %v2490, inf
        %2496 = vmin.xlane.f32.xlu0 %v2495
        %v2497 = vpop.xlane.xlu0 %2496
        %v2498 = vcvt.f32.s32 %v2497
        %v2499 = vcvt.f32.s32 %v2493
        %v2500 = vshll.u32 %v2499, 16
        %v2501 = vadd.s32 %v2500, %v2498
        %v2502 = vsel %vm927, %v2346, 2147483647
        %v2503 = vand.u32 %v2502, 65535
        %v2504 = vshra.s32 %v2502, 16
        %v2505 = vcvt.s32.f32 %v2503
        %v2506 = vcvt.s32.f32 %v2504
        %2507 = vmin.xlane.f32.xlu0 %v2506
        %v2508 = vpop.xlane.xlu0 %2507
        %vm2509 = vcmp.eq.f32.partialorder %v2506, %v2508
        %v2510 = vsel %vm2509, %v2505, inf
        %2511 = vmin.xlane.f32.xlu0 %v2510
        %v2512 = vpop.xlane.xlu0 %2511
        %v2513 = vcvt.f32.s32 %v2512
        %v2514 = vcvt.f32.s32 %v2508
        %v2515 = vshll.u32 %v2514, 16
        %v2516 = vadd.s32 %v2515, %v2513
        %v2517 = vsel %vm927, %v2347, 2147483647
        %v2518 = vand.u32 %v2517, 65535
        %v2519 = vshra.s32 %v2517, 16
        %v2520 = vcvt.s32.f32 %v2518
        %v2521 = vcvt.s32.f32 %v2519
        %2522 = vmin.xlane.f32.xlu0 %v2521
        %v2523 = vpop.xlane.xlu0 %2522
        %vm2524 = vcmp.eq.f32.partialorder %v2521, %v2523
        %v2525 = vsel %vm2524, %v2520, inf
        %2526 = vmin.xlane.f32.xlu0 %v2525
        %v2527 = vpop.xlane.xlu0 %2526
        %v2528 = vcvt.f32.s32 %v2527
        %v2529 = vcvt.f32.s32 %v2523
        %v2530 = vshll.u32 %v2529, 16
        %v2531 = vadd.s32 %v2530, %v2528
        %v2532 = vsel %vm927, %v2348, 2147483647
        %v2533 = vand.u32 %v2532, 65535
        %v2534 = vshra.s32 %v2532, 16
        %v2535 = vcvt.s32.f32 %v2533
        %v2536 = vcvt.s32.f32 %v2534
        %2537 = vmin.xlane.f32.xlu0 %v2536
        %v2538 = vpop.xlane.xlu0 %2537
        %vm2539 = vcmp.eq.f32.partialorder %v2536, %v2538
        %v2540 = vsel %vm2539, %v2535, inf
        %2541 = vmin.xlane.f32.xlu0 %v2540
        %v2542 = vpop.xlane.xlu0 %2541
        %v2543 = vcvt.f32.s32 %v2542
        %v2544 = vcvt.f32.s32 %v2538
        %v2545 = vshll.u32 %v2544, 16
        %v2546 = vadd.s32 %v2545, %v2543
        %v2547 = vsel %vm927, %v2349, 2147483647
        %v2548 = vand.u32 %v2547, 65535
        %v2549 = vshra.s32 %v2547, 16
        %v2550 = vcvt.s32.f32 %v2548
        %v2551 = vcvt.s32.f32 %v2549
        %2552 = vmin.xlane.f32.xlu0 %v2551
        %v2553 = vpop.xlane.xlu0 %2552
        %vm2554 = vcmp.eq.f32.partialorder %v2551, %v2553
        %v2555 = vsel %vm2554, %v2550, inf
        %2556 = vmin.xlane.f32.xlu0 %v2555
        %v2557 = vpop.xlane.xlu0 %2556
        %v2558 = vcvt.f32.s32 %v2557
        %v2559 = vcvt.f32.s32 %v2553
        %v2560 = vshll.u32 %v2559, 16
        %v2561 = vadd.s32 %v2560, %v2558
        %v2562 = vsel %vm927, %v2350, 2147483647
        %v2563 = vand.u32 %v2562, 65535
        %v2564 = vshra.s32 %v2562, 16
        %v2565 = vcvt.s32.f32 %v2563
        %v2566 = vcvt.s32.f32 %v2564
        %2567 = vmin.xlane.f32.xlu0 %v2566
        %v2568 = vpop.xlane.xlu0 %2567
        %vm2569 = vcmp.eq.f32.partialorder %v2566, %v2568
        %v2570 = vsel %vm2569, %v2565, inf
        %2571 = vmin.xlane.f32.xlu0 %v2570
        %v2572 = vpop.xlane.xlu0 %2571
        %v2573 = vcvt.f32.s32 %v2572
        %v2574 = vcvt.f32.s32 %v2568
        %v2575 = vshll.u32 %v2574, 16
        %v2576 = vadd.s32 %v2575, %v2573
        %v2577 = vsel %vm927, %v2351, 2147483647
        %v2578 = vand.u32 %v2577, 65535
        %v2579 = vshra.s32 %v2577, 16
        %v2580 = vcvt.s32.f32 %v2578
        %v2581 = vcvt.s32.f32 %v2579
        %2582 = vmin.xlane.f32.xlu0 %v2581
        %v2583 = vpop.xlane.xlu0 %2582
        %vm2584 = vcmp.eq.f32.partialorder %v2581, %v2583
        %v2585 = vsel %vm2584, %v2580, inf
        %2586 = vmin.xlane.f32.xlu0 %v2585
        %v2587 = vpop.xlane.xlu0 %2586
        %v2588 = vcvt.f32.s32 %v2587
        %v2589 = vcvt.f32.s32 %v2583
        %v2590 = vshll.u32 %v2589, 16
        %v2591 = vadd.s32 %v2590, %v2588
        %vm2592 = vcmp.eq.s32.totalorder %v926, %v2366
        %vm2593 = vcmp.eq.s32.totalorder %v926, %v2381
        %vm2594 = vcmp.eq.s32.totalorder %v926, %v2396
        %vm2595 = vcmp.eq.s32.totalorder %v926, %v2411
        %vm2596 = vcmp.eq.s32.totalorder %v926, %v2426
        %vm2597 = vcmp.eq.s32.totalorder %v926, %v2441
        %vm2598 = vcmp.eq.s32.totalorder %v926, %v2456
        %vm2599 = vcmp.eq.s32.totalorder %v926, %v2471
        %vm2600 = vcmp.eq.s32.totalorder %v926, %v2486
        %vm2601 = vcmp.eq.s32.totalorder %v926, %v2501
        %vm2602 = vcmp.eq.s32.totalorder %v926, %v2516
        %vm2603 = vcmp.eq.s32.totalorder %v926, %v2531
        %vm2604 = vcmp.eq.s32.totalorder %v926, %v2546
        %vm2605 = vcmp.eq.s32.totalorder %v926, %v2561
        %vm2606 = vcmp.eq.s32.totalorder %v926, %v2576
        %vm2607 = vcmp.eq.s32.totalorder %v926, %v2591
        %v2608 = vadd.f32 %v2274, %v815
        %v2609 = vadd.f32 %v2277, %v820
        %v2610 = vadd.f32 %v2280, %v825
        %v2611 = vadd.f32 %v2283, %v830
        %v2612 = vadd.f32 %v2286, %v835
        %v2613 = vadd.f32 %v2289, %v840
        %v2614 = vadd.f32 %v2292, %v845
        %v2615 = vadd.f32 %v2295, %v850
        %v2616 = vadd.f32 %v2298, %v855
        %v2617 = vadd.f32 %v2301, %v860
        %v2618 = vadd.f32 %v2304, %v865
        %v2619 = vadd.f32 %v2307, %v870
        %v2620 = vadd.f32 %v2310, %v875
        %v2621 = vadd.f32 %v2313, %v880
        %v2622 = vadd.f32 %v2316, %v885
        %v2623 = vadd.f32 %v2319, %v890
        %v2624 = vmax.f32 %v2608, 0.0
        %v2625 = vmax.f32 %v2609, 0.0
        %v2626 = vmax.f32 %v2610, 0.0
        %v2627 = vmax.f32 %v2611, 0.0
        %v2628 = vmax.f32 %v2612, 0.0
        %v2629 = vmax.f32 %v2613, 0.0
        %v2630 = vmax.f32 %v2614, 0.0
        %v2631 = vmax.f32 %v2615, 0.0
        %v2632 = vmax.f32 %v2616, 0.0
        %v2633 = vmax.f32 %v2617, 0.0
        %v2634 = vmax.f32 %v2618, 0.0
        %v2635 = vmax.f32 %v2619, 0.0
        %v2636 = vmax.f32 %v2620, 0.0
        %v2637 = vmax.f32 %v2621, 0.0
        %v2638 = vmax.f32 %v2622, 0.0
        %v2639 = vmax.f32 %v2623, 0.0
        %v2640 = vrsqrt.pop %v2624
        %v2641 = vmul.f32 %v2624, %v2640
        %vm2642 = vcmp.eq.f32.partialorder %v2624, inf
        %v2643 = vsel %vm2642, %v2624, %v2641
        %vm2644 = vcmp.eq.f32.partialorder %v2624, 0.0
        %v2645 = vand.u32 %v2624, 2147483648
        %v2646 = vsel %vm2644, %v2645, %v2643
        %v2647 = vrsqrt.pop %v2625
        %v2648 = vmul.f32 %v2625, %v2647
        %vm2649 = vcmp.eq.f32.partialorder %v2625, inf
        %v2650 = vsel %vm2649, %v2625, %v2648
        %vm2651 = vcmp.eq.f32.partialorder %v2625, 0.0
        %v2652 = vand.u32 %v2625, 2147483648
        %v2653 = vsel %vm2651, %v2652, %v2650
        %v2654 = vrsqrt.pop %v2626
        %v2655 = vmul.f32 %v2626, %v2654
        %vm2656 = vcmp.eq.f32.partialorder %v2626, inf
        %v2657 = vsel %vm2656, %v2626, %v2655
        %vm2658 = vcmp.eq.f32.partialorder %v2626, 0.0
        %v2659 = vand.u32 %v2626, 2147483648
        %v2660 = vsel %vm2658, %v2659, %v2657
        %v2661 = vrsqrt.pop %v2627
        %v2662 = vmul.f32 %v2627, %v2661
        %vm2663 = vcmp.eq.f32.partialorder %v2627, inf
        %v2664 = vsel %vm2663, %v2627, %v2662
        %vm2665 = vcmp.eq.f32.partialorder %v2627, 0.0
        %v2666 = vand.u32 %v2627, 2147483648
        %v2667 = vsel %vm2665, %v2666, %v2664
        %v2668 = vrsqrt.pop %v2628
        %v2669 = vmul.f32 %v2628, %v2668
        %vm2670 = vcmp.eq.f32.partialorder %v2628, inf
        %v2671 = vsel %vm2670, %v2628, %v2669
        %vm2672 = vcmp.eq.f32.partialorder %v2628, 0.0
        %v2673 = vand.u32 %v2628, 2147483648
        %v2674 = vsel %vm2672, %v2673, %v2671
        %v2675 = vrsqrt.pop %v2629
        %v2676 = vmul.f32 %v2629, %v2675
        %vm2677 = vcmp.eq.f32.partialorder %v2629, inf
        %v2678 = vsel %vm2677, %v2629, %v2676
        %vm2679 = vcmp.eq.f32.partialorder %v2629, 0.0
        %v2680 = vand.u32 %v2629, 2147483648
        %v2681 = vsel %vm2679, %v2680, %v2678
        %v2682 = vrsqrt.pop %v2630
        %v2683 = vmul.f32 %v2630, %v2682
        %vm2684 = vcmp.eq.f32.partialorder %v2630, inf
        %v2685 = vsel %vm2684, %v2630, %v2683
        %vm2686 = vcmp.eq.f32.partialorder %v2630, 0.0
        %v2687 = vand.u32 %v2630, 2147483648
        %v2688 = vsel %vm2686, %v2687, %v2685
        %v2689 = vrsqrt.pop %v2631
        %v2690 = vmul.f32 %v2631, %v2689
        %vm2691 = vcmp.eq.f32.partialorder %v2631, inf
        %v2692 = vsel %vm2691, %v2631, %v2690
        %vm2693 = vcmp.eq.f32.partialorder %v2631, 0.0
        %v2694 = vand.u32 %v2631, 2147483648
        %v2695 = vsel %vm2693, %v2694, %v2692
        %v2696 = vrsqrt.pop %v2632
        %v2697 = vmul.f32 %v2632, %v2696
        %vm2698 = vcmp.eq.f32.partialorder %v2632, inf
        %v2699 = vsel %vm2698, %v2632, %v2697
        %vm2700 = vcmp.eq.f32.partialorder %v2632, 0.0
        %v2701 = vand.u32 %v2632, 2147483648
        %v2702 = vsel %vm2700, %v2701, %v2699
        %v2703 = vrsqrt.pop %v2633
        %v2704 = vmul.f32 %v2633, %v2703
        %vm2705 = vcmp.eq.f32.partialorder %v2633, inf
        %v2706 = vsel %vm2705, %v2633, %v2704
        %vm2707 = vcmp.eq.f32.partialorder %v2633, 0.0
        %v2708 = vand.u32 %v2633, 2147483648
        %v2709 = vsel %vm2707, %v2708, %v2706
        %v2710 = vrsqrt.pop %v2634
        %v2711 = vmul.f32 %v2634, %v2710
        %vm2712 = vcmp.eq.f32.partialorder %v2634, inf
        %v2713 = vsel %vm2712, %v2634, %v2711
        %vm2714 = vcmp.eq.f32.partialorder %v2634, 0.0
        %v2715 = vand.u32 %v2634, 2147483648
        %v2716 = vsel %vm2714, %v2715, %v2713
        %v2717 = vrsqrt.pop %v2635
        %v2718 = vmul.f32 %v2635, %v2717
        %vm2719 = vcmp.eq.f32.partialorder %v2635, inf
        %v2720 = vsel %vm2719, %v2635, %v2718
        %vm2721 = vcmp.eq.f32.partialorder %v2635, 0.0
        %v2722 = vand.u32 %v2635, 2147483648
        %v2723 = vsel %vm2721, %v2722, %v2720
        %v2724 = vrsqrt.pop %v2636
        %v2725 = vmul.f32 %v2636, %v2724
        %vm2726 = vcmp.eq.f32.partialorder %v2636, inf
        %v2727 = vsel %vm2726, %v2636, %v2725
        %vm2728 = vcmp.eq.f32.partialorder %v2636, 0.0
        %v2729 = vand.u32 %v2636, 2147483648
        %v2730 = vsel %vm2728, %v2729, %v2727
        %v2731 = vrsqrt.pop %v2637
        %v2732 = vmul.f32 %v2637, %v2731
        %vm2733 = vcmp.eq.f32.partialorder %v2637, inf
        %v2734 = vsel %vm2733, %v2637, %v2732
        %vm2735 = vcmp.eq.f32.partialorder %v2637, 0.0
        %v2736 = vand.u32 %v2637, 2147483648
        %v2737 = vsel %vm2735, %v2736, %v2734
        %v2738 = vrsqrt.pop %v2638
        %v2739 = vmul.f32 %v2638, %v2738
        %vm2740 = vcmp.eq.f32.partialorder %v2638, inf
        %v2741 = vsel %vm2740, %v2638, %v2739
        %vm2742 = vcmp.eq.f32.partialorder %v2638, 0.0
        %v2743 = vand.u32 %v2638, 2147483648
        %v2744 = vsel %vm2742, %v2743, %v2741
        %v2745 = vrsqrt.pop %v2639
        %v2746 = vmul.f32 %v2639, %v2745
        %vm2747 = vcmp.eq.f32.partialorder %v2639, inf
        %v2748 = vsel %vm2747, %v2639, %v2746
        %vm2749 = vcmp.eq.f32.partialorder %v2639, 0.0
        %v2750 = vand.u32 %v2639, 2147483648
        %v2751 = vsel %vm2749, %v2750, %v2748
        %v2752 = vadd.f32 %v2646, 1e-10
        %v2753 = vadd.f32 %v2653, 1e-10
        %v2754 = vadd.f32 %v2660, 1e-10
        %v2755 = vadd.f32 %v2667, 1e-10
        %v2756 = vadd.f32 %v2674, 1e-10
        %v2757 = vadd.f32 %v2681, 1e-10
        %v2758 = vadd.f32 %v2688, 1e-10
        %v2759 = vadd.f32 %v2695, 1e-10
        %v2760 = vadd.f32 %v2702, 1e-10
        %v2761 = vadd.f32 %v2709, 1e-10
        %v2762 = vadd.f32 %v2716, 1e-10
        %v2763 = vadd.f32 %v2723, 1e-10
        %v2764 = vadd.f32 %v2730, 1e-10
        %v2765 = vadd.f32 %v2737, 1e-10
        %v2766 = vadd.f32 %v2744, 1e-10
        %v2767 = vadd.f32 %v2751, 1e-10
        %v2768 = vrcp.pop %v2752
        %v2769 = vmul.f32 1.0, %v2768
        %v2770 = vrcp.pop %v2753
        %v2771 = vmul.f32 1.0, %v2770
        %v2772 = vrcp.pop %v2754
        %v2773 = vmul.f32 1.0, %v2772
        %v2774 = vrcp.pop %v2755
        %v2775 = vmul.f32 1.0, %v2774
        %v2776 = vrcp.pop %v2756
        %v2777 = vmul.f32 1.0, %v2776
        %v2778 = vrcp.pop %v2757
        %v2779 = vmul.f32 1.0, %v2778
        %v2780 = vrcp.pop %v2758
        %v2781 = vmul.f32 1.0, %v2780
        %v2782 = vrcp.pop %v2759
        %v2783 = vmul.f32 1.0, %v2782
        %v2784 = vrcp.pop %v2760
        %v2785 = vmul.f32 1.0, %v2784
        %v2786 = vrcp.pop %v2761
        %v2787 = vmul.f32 1.0, %v2786
        %v2788 = vrcp.pop %v2762
        %v2789 = vmul.f32 1.0, %v2788
        %v2790 = vrcp.pop %v2763
        %v2791 = vmul.f32 1.0, %v2790
        %v2792 = vrcp.pop %v2764
        %v2793 = vmul.f32 1.0, %v2792
        %v2794 = vrcp.pop %v2765
        %v2795 = vmul.f32 1.0, %v2794
        %v2796 = vrcp.pop %v2766
        %v2797 = vmul.f32 1.0, %v2796
        %v2798 = vrcp.pop %v2767
        %v2799 = vmul.f32 1.0, %v2798
        %2801 = vset.pattern.permute.xlu0 0
        %2802 = vperm.xlu0 %2801, %v2769
        %v2803 = vpop.permute.xlu0 %2802
        %2806 = vset.pattern.permute.xlu0 0
        %2807 = vperm.xlu0 %2806, %v2771
        %v2808 = vpop.permute.xlu0 %2807
        %2811 = vset.pattern.permute.xlu0 0
        %2812 = vperm.xlu0 %2811, %v2773
        %v2813 = vpop.permute.xlu0 %2812
        %2816 = vset.pattern.permute.xlu0 0
        %2817 = vperm.xlu0 %2816, %v2775
        %v2818 = vpop.permute.xlu0 %2817
        %2821 = vset.pattern.permute.xlu0 0
        %2822 = vperm.xlu0 %2821, %v2777
        %v2823 = vpop.permute.xlu0 %2822
        %2826 = vset.pattern.permute.xlu0 0
        %2827 = vperm.xlu0 %2826, %v2779
        %v2828 = vpop.permute.xlu0 %2827
        %2831 = vset.pattern.permute.xlu0 0
        %2832 = vperm.xlu0 %2831, %v2781
        %v2833 = vpop.permute.xlu0 %2832
        %2836 = vset.pattern.permute.xlu0 0
        %2837 = vperm.xlu0 %2836, %v2783
        %v2838 = vpop.permute.xlu0 %2837
        %2841 = vset.pattern.permute.xlu0 0
        %2842 = vperm.xlu0 %2841, %v2785
        %v2843 = vpop.permute.xlu0 %2842
        %2846 = vset.pattern.permute.xlu0 0
        %2847 = vperm.xlu0 %2846, %v2787
        %v2848 = vpop.permute.xlu0 %2847
        %2851 = vset.pattern.permute.xlu0 0
        %2852 = vperm.xlu0 %2851, %v2789
        %v2853 = vpop.permute.xlu0 %2852
        %2856 = vset.pattern.permute.xlu0 0
        %2857 = vperm.xlu0 %2856, %v2791
        %v2858 = vpop.permute.xlu0 %2857
        %2861 = vset.pattern.permute.xlu0 0
        %2862 = vperm.xlu0 %2861, %v2793
        %v2863 = vpop.permute.xlu0 %2862
        %2866 = vset.pattern.permute.xlu0 0
        %2867 = vperm.xlu0 %2866, %v2795
        %v2868 = vpop.permute.xlu0 %2867
        %2871 = vset.pattern.permute.xlu0 0
        %2872 = vperm.xlu0 %2871, %v2797
        %v2873 = vpop.permute.xlu0 %2872
        %2876 = vset.pattern.permute.xlu0 0
        %2877 = vperm.xlu0 %2876, %v2799
        %v2878 = vpop.permute.xlu0 %2877
        %v2880 = vsel %vm2592, %v2803, 0.0
        %v2881 = vsel %vm2593, %v2808, 0.0
        %v2882 = vsel %vm2594, %v2813, 0.0
        %v2883 = vsel %vm2595, %v2818, 0.0
        %v2884 = vsel %vm2596, %v2823, 0.0
        %v2885 = vsel %vm2597, %v2828, 0.0
        %v2886 = vsel %vm2598, %v2833, 0.0
        %v2887 = vsel %vm2599, %v2838, 0.0
        %v2888 = vsel %vm2600, %v2843, 0.0
        %v2889 = vsel %vm2601, %v2848, 0.0
        %v2890 = vsel %vm2602, %v2853, 0.0
        %v2891 = vsel %vm2603, %v2858, 0.0
        %v2892 = vsel %vm2604, %v2863, 0.0
        %v2893 = vsel %vm2605, %v2868, 0.0
        %v2894 = vsel %vm2606, %v2873, 0.0
        %v2895 = vsel %vm2607, %v2878, 0.0
        %v2896 = vadd.f32 %v2224, %v2880
        %v2897 = vadd.f32 %v2225, %v2881
        %v2898 = vadd.f32 %v2226, %v2882
        %v2899 = vadd.f32 %v2227, %v2883
        %v2900 = vadd.f32 %v2228, %v2884
        %v2901 = vadd.f32 %v2229, %v2885
        %v2902 = vadd.f32 %v2230, %v2886
        %v2903 = vadd.f32 %v2231, %v2887
        %v2904 = vadd.f32 %v2232, %v2888
        %v2905 = vadd.f32 %v2233, %v2889
        %v2906 = vadd.f32 %v2234, %v2890
        %v2907 = vadd.f32 %v2235, %v2891
        %v2908 = vadd.f32 %v2236, %v2892
        %v2909 = vadd.f32 %v2237, %v2893
        %v2910 = vadd.f32 %v2238, %v2894
        %v2911 = vadd.f32 %v2239, %v2895
        %v2912 = vadd.f32 %v2240, %v2769
        %v2913 = vadd.f32 %v2241, %v2771
        %v2914 = vadd.f32 %v2242, %v2773
        %v2915 = vadd.f32 %v2243, %v2775
        %v2916 = vadd.f32 %v2244, %v2777
        %v2917 = vadd.f32 %v2245, %v2779
        %v2918 = vadd.f32 %v2246, %v2781
        %v2919 = vadd.f32 %v2247, %v2783
        %v2920 = vadd.f32 %v2248, %v2785
        %v2921 = vadd.f32 %v2249, %v2787
        %v2922 = vadd.f32 %v2250, %v2789
        %v2923 = vadd.f32 %v2251, %v2791
        %v2924 = vadd.f32 %v2252, %v2793
        %v2925 = vadd.f32 %v2253, %v2795
        %v2926 = vadd.f32 %v2254, %v2797
        %v2927 = vadd.f32 %v2255, %v2799
        %v2928 = vrcp.pop %v2912
        %v2929 = vmul.f32 1.0, %v2928
        %v2930 = vrcp.pop %v2913
        %v2931 = vmul.f32 1.0, %v2930
        %v2932 = vrcp.pop %v2914
        %v2933 = vmul.f32 1.0, %v2932
        %v2934 = vrcp.pop %v2915
        %v2935 = vmul.f32 1.0, %v2934
        %v2936 = vrcp.pop %v2916
        %v2937 = vmul.f32 1.0, %v2936
        %v2938 = vrcp.pop %v2917
        %v2939 = vmul.f32 1.0, %v2938
        %v2940 = vrcp.pop %v2918
        %v2941 = vmul.f32 1.0, %v2940
        %v2942 = vrcp.pop %v2919
        %v2943 = vmul.f32 1.0, %v2942
        %v2944 = vrcp.pop %v2920
        %v2945 = vmul.f32 1.0, %v2944
        %v2946 = vrcp.pop %v2921
        %v2947 = vmul.f32 1.0, %v2946
        %v2948 = vrcp.pop %v2922
        %v2949 = vmul.f32 1.0, %v2948
        %v2950 = vrcp.pop %v2923
        %v2951 = vmul.f32 1.0, %v2950
        %v2952 = vrcp.pop %v2924
        %v2953 = vmul.f32 1.0, %v2952
        %v2954 = vrcp.pop %v2925
        %v2955 = vmul.f32 1.0, %v2954
        %v2956 = vrcp.pop %v2926
        %v2957 = vmul.f32 1.0, %v2956
        %v2958 = vrcp.pop %v2927
        %v2959 = vmul.f32 1.0, %v2958
        %2961 = vset.pattern.permute.xlu0 0
        %2962 = vperm.xlu0 %2961, %v2929
        %v2963 = vpop.permute.xlu0 %2962
        %2966 = vset.pattern.permute.xlu0 0
        %2967 = vperm.xlu0 %2966, %v2931
        %v2968 = vpop.permute.xlu0 %2967
        %2971 = vset.pattern.permute.xlu0 0
        %2972 = vperm.xlu0 %2971, %v2933
        %v2973 = vpop.permute.xlu0 %2972
        %2976 = vset.pattern.permute.xlu0 0
        %2977 = vperm.xlu0 %2976, %v2935
        %v2978 = vpop.permute.xlu0 %2977
        %2981 = vset.pattern.permute.xlu0 0
        %2982 = vperm.xlu0 %2981, %v2937
        %v2983 = vpop.permute.xlu0 %2982
        %2986 = vset.pattern.permute.xlu0 0
        %2987 = vperm.xlu0 %2986, %v2939
        %v2988 = vpop.permute.xlu0 %2987
        %2991 = vset.pattern.permute.xlu0 0
        %2992 = vperm.xlu0 %2991, %v2941
        %v2993 = vpop.permute.xlu0 %2992
        %2996 = vset.pattern.permute.xlu0 0
        %2997 = vperm.xlu0 %2996, %v2943
        %v2998 = vpop.permute.xlu0 %2997
        %3001 = vset.pattern.permute.xlu0 0
        %3002 = vperm.xlu0 %3001, %v2945
        %v3003 = vpop.permute.xlu0 %3002
        %3006 = vset.pattern.permute.xlu0 0
        %3007 = vperm.xlu0 %3006, %v2947
        %v3008 = vpop.permute.xlu0 %3007
        %3011 = vset.pattern.permute.xlu0 0
        %3012 = vperm.xlu0 %3011, %v2949
        %v3013 = vpop.permute.xlu0 %3012
        %3016 = vset.pattern.permute.xlu0 0
        %3017 = vperm.xlu0 %3016, %v2951
        %v3018 = vpop.permute.xlu0 %3017
        %3021 = vset.pattern.permute.xlu0 0
        %3022 = vperm.xlu0 %3021, %v2953
        %v3023 = vpop.permute.xlu0 %3022
        %3026 = vset.pattern.permute.xlu0 0
        %3027 = vperm.xlu0 %3026, %v2955
        %v3028 = vpop.permute.xlu0 %3027
        %3031 = vset.pattern.permute.xlu0 0
        %3032 = vperm.xlu0 %3031, %v2957
        %v3033 = vpop.permute.xlu0 %3032
        %3036 = vset.pattern.permute.xlu0 0
        %3037 = vperm.xlu0 %3036, %v2959
        %v3038 = vpop.permute.xlu0 %3037
        %v3040 = vmul.f32 %v2896, %v2963
        %v3041 = vmul.f32 %v2897, %v2968
        %v3042 = vmul.f32 %v2898, %v2973
        %v3043 = vmul.f32 %v2899, %v2978
        %v3044 = vmul.f32 %v2900, %v2983
        %v3045 = vmul.f32 %v2901, %v2988
        %v3046 = vmul.f32 %v2902, %v2993
        %v3047 = vmul.f32 %v2903, %v2998
        %v3048 = vmul.f32 %v2904, %v3003
        %v3049 = vmul.f32 %v2905, %v3008
        %v3050 = vmul.f32 %v2906, %v3013
        %v3051 = vmul.f32 %v2907, %v3018
        %v3052 = vmul.f32 %v2908, %v3023
        %v3053 = vmul.f32 %v2909, %v3028
        %v3054 = vmul.f32 %v2910, %v3033
        %v3055 = vmul.f32 %v2911, %v3038
        %v3057 = vsel %vm927, %v422, 0
        %v3060 = vsel %vm927, %v3040, 0
        %v3063 = vsel %vm927, %v3041, 0
        %v3066 = vsel %vm927, %v3042, 0
        %v3069 = vsel %vm927, %v3043, 0
        %v3072 = vsel %vm927, %v3044, 0
        %v3075 = vsel %vm927, %v3045, 0
        %v3078 = vsel %vm927, %v3046, 0
        %v3081 = vsel %vm927, %v3047, 0
        %v3084 = vsel %vm927, %v3048, 0
        %v3087 = vsel %vm927, %v3049, 0
        %v3090 = vsel %vm927, %v3050, 0
        %v3093 = vsel %vm927, %v3051, 0
        %v3096 = vsel %vm927, %v3052, 0
        %v3099 = vsel %vm927, %v3053, 0
        %v3102 = vsel %vm927, %v3054, 0
        %v3105 = vsel %vm927, %v3055, 0
        %3107 = vmatprep.subr.mxu0 0.0
        %3108 = vmatpush1.xpose.msra.mxu0 %v3105
        %3109 = vmatprep.subr.mxu0 0.0
        %3110 = vmatpush1.xpose.msra.mxu0 %v3102
        %3111 = vmatprep.subr.mxu0 0.0
        %3112 = vmatpush1.xpose.msra.mxu0 %v3099
        %3113 = vmatprep.subr.mxu0 0.0
        %3114 = vmatpush1.xpose.msra.mxu0 %v3096
        %3115 = vmatprep.subr.mxu0 0.0
        %3116 = vmatpush1.xpose.msra.mxu0 %v3093
        %3117 = vmatprep.subr.mxu0 0.0
        %3118 = vmatpush1.xpose.msra.mxu0 %v3090
        %3119 = vmatprep.subr.mxu0 0.0
        %3120 = vmatpush1.xpose.msra.mxu0 %v3087
        %3121 = vmatprep.subr.mxu0 0.0
        %3122 = vmatpush1.xpose.msra.mxu0 %v3084
        %3123 = vmatprep.subr.mxu0 0.0
        %3124 = vmatpush1.xpose.msra.mxu0 %v3081
        %3125 = vmatprep.subr.mxu0 0.0
        %3126 = vmatpush1.xpose.msra.mxu0 %v3078
        %3127 = vmatprep.subr.mxu0 0.0
        %3128 = vmatpush1.xpose.msra.mxu0 %v3075
        %3129 = vmatprep.subr.mxu0 0.0
        %3130 = vmatpush1.xpose.msra.mxu0 %v3072
        %3131 = vmatprep.subr.mxu0 0.0
        %3132 = vmatpush1.xpose.msra.mxu0 %v3069
        %3133 = vmatprep.subr.mxu0 0.0
        %3134 = vmatpush1.xpose.msra.mxu0 %v3066
        %3135 = vmatprep.subr.mxu0 0.0
        %3136 = vmatpush1.xpose.msra.mxu0 %v3063
        %3137 = vmatprep.subr.mxu0 0.0
        %3138 = vmatpush1.xpose.msra.mxu0 %v3060
        %3139 = vmatprep.subr.mxu0 0.0
        %3140 = vmatpush2.xpose.msra.mxu0 0.0
        %3141 = vmatprep.subr.mxu0 0.0
        %3142 = vmatpush2.xpose.msra.mxu0 0.0
        %3143 = vmatprep.subr.mxu0 0.0
        %3144 = vmatpush2.xpose.msra.mxu0 0.0
        %3145 = vmatprep.subr.mxu0 0.0
        %3146 = vmatpush2.xpose.msra.mxu0 0.0
        %3147 = vmatprep.subr.mxu0 0.0
        %3148 = vmatpush2.xpose.msra.mxu0 0.0
        %3149 = vmatprep.subr.mxu0 0.0
        %3150 = vmatpush2.xpose.msra.mxu0 0.0
        %3151 = vmatprep.subr.mxu0 0.0
        %3152 = vmatpush2.xpose.msra.mxu0 0.0
        %3153 = vmatprep.subr.mxu0 0.0
        %3154 = vmatpush2.xpose.msra.mxu0 0.0
        %3155 = vmatprep.subr.mxu0 0.0
        %3156 = vmatpush2.xpose.msra.mxu0 0.0
        %3157 = vmatprep.subr.mxu0 0.0
        %3158 = vmatpush2.xpose.msra.mxu0 0.0
        %3159 = vmatprep.subr.mxu0 0.0
        %3160 = vmatpush2.xpose.msra.mxu0 0.0
        %3161 = vmatprep.subr.mxu0 0.0
        %3162 = vmatpush2.xpose.msra.mxu0 0.0
        %3163 = vmatprep.subr.mxu0 0.0
        %3164 = vmatpush2.xpose.msra.mxu0 0.0
        %3165 = vmatprep.subr.mxu0 0.0
        %3166 = vmatpush2.xpose.msra.mxu0 0.0
        %3167 = vmatprep.subr.mxu0 0.0
        %3168 = vmatpush2.xpose.msra.mxu0 0.0
        %3169 = vmatprep.subr.mxu0 0.0
        %3170 = vmatpush2.xpose.msra.mxu0 0.0
        %3171 = vmatprep.mubr.f32.mxu0 0.0
        %3172 = vmatmul.mubr.f32.gmra.mxu0 %v3057
        %v3173 = vpop.f32.mrf.mxu0
        %v3174 = vadd.f32 0.0, %v3173
        %v3175 = vpop.f32.mrf.mxu0
        %3176 = vdwg.mxu0
        %v3177 = vld [vmem:[%s4] sm:$0xff]
        %v3178 = vld [vmem:[%s4 + $0x8] sm:$0xff]
        %v3179 = vld [vmem:[%s4 + $0x10] sm:$0xff]
        %v3180 = vld [vmem:[%s4 + $0x18] sm:$0xff]
        %v3181 = vld [vmem:[%s5] sm:$0xff]
        %v3182 = vld [vmem:[%s5 + $0x8] sm:$0xff]
        %v3183 = vld [vmem:[%s5 + $0x10] sm:$0xff]
        %v3184 = vld [vmem:[%s5 + $0x18] sm:$0xff]
        %v3185 = vld [vmem:[%s6] sm:$0xff]
        %v3186 = vld [vmem:[%s6 + $0x8] sm:$0xff]
        %v3187 = vld [vmem:[%s6 + $0x10] sm:$0xff]
        %v3188 = vld [vmem:[%s6 + $0x18] sm:$0xff]
        %vm3189 = vcmask 64512
        %v3191 = vsel %vm3189, %v3181, 0
        %v3194 = vsel %vm3189, %v3182, 0
        %v3197 = vsel %vm3189, %v3183, 0
        %v3200 = vsel %vm3189, %v3184, 0
        %3202 = vmatprep.subr.mxu0 0.0
        %3203 = vmatpush1.msra.mxu0 0.0
        %3204 = vmatprep.subr.mxu0 0.0
        %3205 = vmatpush1.msra.mxu0 0.0
        %3206 = vmatprep.subr.mxu0 0.0
        %3207 = vmatpush1.msra.mxu0 0.0
        %3208 = vmatprep.subr.mxu0 0.0
        %3209 = vmatpush1.msra.mxu0 0.0
        %3210 = vmatprep.subr.mxu0 0.0
        %3211 = vmatpush1.msra.mxu0 0.0
        %3212 = vmatprep.subr.mxu0 0.0
        %3213 = vmatpush1.msra.mxu0 0.0
        %3214 = vmatprep.subr.mxu0 0.0
        %3215 = vmatpush1.msra.mxu0 0.0
        %3216 = vmatprep.subr.mxu0 0.0
        %3217 = vmatpush1.msra.mxu0 0.0
        %3218 = vmatprep.subr.mxu0 0.0
        %3219 = vmatpush1.msra.mxu0 0.0
        %3220 = vmatprep.subr.mxu0 0.0
        %3221 = vmatpush1.msra.mxu0 0.0
        %3222 = vmatprep.subr.mxu0 0.0
        %3223 = vmatpush1.msra.mxu0 0.0
        %3224 = vmatprep.subr.mxu0 0.0
        %3225 = vmatpush1.msra.mxu0 0.0
        %3226 = vmatprep.subr.mxu0 0.0
        %3227 = vmatpush1.msra.mxu0 0.0
        %3228 = vmatprep.subr.mxu0 0.0
        %3229 = vmatpush1.msra.mxu0 0.0
        %3230 = vmatprep.subr.mxu0 0.0
        %3231 = vmatpush1.msra.mxu0 0.0
        %3232 = vmatprep.subr.mxu0 0.0
        %3233 = vmatpush1.msra.mxu0 %v3174
        %3234 = vmatprep.subr.mxu0 0.0
        %3235 = vmatpush2.msra.mxu0 0.0
        %3236 = vmatprep.subr.mxu0 0.0
        %3237 = vmatpush2.msra.mxu0 0.0
        %3238 = vmatprep.subr.mxu0 0.0
        %3239 = vmatpush2.msra.mxu0 0.0
        %3240 = vmatprep.subr.mxu0 0.0
        %3241 = vmatpush2.msra.mxu0 0.0
        %3242 = vmatprep.subr.mxu0 0.0
        %3243 = vmatpush2.msra.mxu0 0.0
        %3244 = vmatprep.subr.mxu0 0.0
        %3245 = vmatpush2.msra.mxu0 0.0
        %3246 = vmatprep.subr.mxu0 0.0
        %3247 = vmatpush2.msra.mxu0 0.0
        %3248 = vmatprep.subr.mxu0 0.0
        %3249 = vmatpush2.msra.mxu0 0.0
        %3250 = vmatprep.subr.mxu0 0.0
        %3251 = vmatpush2.msra.mxu0 0.0
        %3252 = vmatprep.subr.mxu0 0.0
        %3253 = vmatpush2.msra.mxu0 0.0
        %3254 = vmatprep.subr.mxu0 0.0
        %3255 = vmatpush2.msra.mxu0 0.0
        %3256 = vmatprep.subr.mxu0 0.0
        %3257 = vmatpush2.msra.mxu0 0.0
        %3258 = vmatprep.subr.mxu0 0.0
        %3259 = vmatpush2.msra.mxu0 0.0
        %3260 = vmatprep.subr.mxu0 0.0
        %3261 = vmatpush2.msra.mxu0 0.0
        %3262 = vmatprep.subr.mxu0 0.0
        %3263 = vmatpush2.msra.mxu0 0.0
        %3264 = vmatprep.subr.mxu0 0.0
        %3265 = vmatpush2.msra.mxu0 0.0
        %3266 = vmatprep.mubr.f32.mxu0 0.0
        %3267 = vmatmul.mubr.f32.gmra.mxu0 %v3191
        %v3268 = vpop.f32.mrf.mxu0
        %v3269 = vadd.f32 0.0, %v3268
        %v3270 = vpop.f32.mrf.mxu0
        %3271 = vmatprep.mubr.f32.mxu0 0.0
        %3272 = vmatmul.mubr.f32.gmra.mxu0 %v3194
        %v3273 = vpop.f32.mrf.mxu0
        %v3274 = vadd.f32 0.0, %v3273
        %v3275 = vpop.f32.mrf.mxu0
        %3276 = vmatprep.mubr.f32.mxu0 0.0
        %3277 = vmatmul.mubr.f32.gmra.mxu0 %v3197
        %v3278 = vpop.f32.mrf.mxu0
        %v3279 = vadd.f32 0.0, %v3278
        %v3280 = vpop.f32.mrf.mxu0
        %3281 = vmatprep.mubr.f32.mxu0 0.0
        %3282 = vmatmul.mubr.f32.gmra.mxu0 %v3200
        %v3283 = vpop.f32.mrf.mxu0
        %v3284 = vadd.f32 0.0, %v3283
        %v3285 = vpop.f32.mrf.mxu0
        %3286 = vdwg.mxu0
        %v3288 = vsel %vm3189, %v3177, 0
        %v3291 = vsel %vm3189, %v3178, 0
        %v3294 = vsel %vm3189, %v3179, 0
        %v3297 = vsel %vm3189, %v3180, 0
        %3299 = vmatprep.subr.mxu0 0.0
        %3300 = vmatpush1.msra.mxu0 0.0
        %3301 = vmatprep.subr.mxu0 0.0
        %3302 = vmatpush1.msra.mxu0 0.0
        %3303 = vmatprep.subr.mxu0 0.0
        %3304 = vmatpush1.msra.mxu0 0.0
        %3305 = vmatprep.subr.mxu0 0.0
        %3306 = vmatpush1.msra.mxu0 0.0
        %3307 = vmatprep.subr.mxu0 0.0
        %3308 = vmatpush1.msra.mxu0 0.0
        %3309 = vmatprep.subr.mxu0 0.0
        %3310 = vmatpush1.msra.mxu0 0.0
        %3311 = vmatprep.subr.mxu0 0.0
        %3312 = vmatpush1.msra.mxu0 0.0
        %3313 = vmatprep.subr.mxu0 0.0
        %3314 = vmatpush1.msra.mxu0 0.0
        %3315 = vmatprep.subr.mxu0 0.0
        %3316 = vmatpush1.msra.mxu0 0.0
        %3317 = vmatprep.subr.mxu0 0.0
        %3318 = vmatpush1.msra.mxu0 0.0
        %3319 = vmatprep.subr.mxu0 0.0
        %3320 = vmatpush1.msra.mxu0 0.0
        %3321 = vmatprep.subr.mxu0 0.0
        %3322 = vmatpush1.msra.mxu0 0.0
        %3323 = vmatprep.subr.mxu0 0.0
        %3324 = vmatpush1.msra.mxu0 0.0
        %3325 = vmatprep.subr.mxu0 0.0
        %3326 = vmatpush1.msra.mxu0 0.0
        %3327 = vmatprep.subr.mxu0 0.0
        %3328 = vmatpush1.msra.mxu0 0.0
        %3329 = vmatprep.subr.mxu0 0.0
        %3330 = vmatpush1.msra.mxu0 %v421
        %3331 = vmatprep.subr.mxu0 0.0
        %3332 = vmatpush2.msra.mxu0 0.0
        %3333 = vmatprep.subr.mxu0 0.0
        %3334 = vmatpush2.msra.mxu0 0.0
        %3335 = vmatprep.subr.mxu0 0.0
        %3336 = vmatpush2.msra.mxu0 0.0
        %3337 = vmatprep.subr.mxu0 0.0
        %3338 = vmatpush2.msra.mxu0 0.0
        %3339 = vmatprep.subr.mxu0 0.0
        %3340 = vmatpush2.msra.mxu0 0.0
        %3341 = vmatprep.subr.mxu0 0.0
        %3342 = vmatpush2.msra.mxu0 0.0
        %3343 = vmatprep.subr.mxu0 0.0
        %3344 = vmatpush2.msra.mxu0 0.0
        %3345 = vmatprep.subr.mxu0 0.0
        %3346 = vmatpush2.msra.mxu0 0.0
        %3347 = vmatprep.subr.mxu0 0.0
        %3348 = vmatpush2.msra.mxu0 0.0
        %3349 = vmatprep.subr.mxu0 0.0
        %3350 = vmatpush2.msra.mxu0 0.0
        %3351 = vmatprep.subr.mxu0 0.0
        %3352 = vmatpush2.msra.mxu0 0.0
        %3353 = vmatprep.subr.mxu0 0.0
        %3354 = vmatpush2.msra.mxu0 0.0
        %3355 = vmatprep.subr.mxu0 0.0
        %3356 = vmatpush2.msra.mxu0 0.0
        %3357 = vmatprep.subr.mxu0 0.0
        %3358 = vmatpush2.msra.mxu0 0.0
        %3359 = vmatprep.subr.mxu0 0.0
        %3360 = vmatpush2.msra.mxu0 0.0
        %3361 = vmatprep.subr.mxu0 0.0
        %3362 = vmatpush2.msra.mxu0 0.0
        %3363 = vmatprep.mubr.f32.mxu0 0.0
        %3364 = vmatmul.mubr.f32.gmra.mxu0 %v3288
        %v3365 = vpop.f32.mrf.mxu0
        %v3366 = vadd.f32 %v3269, %v3365
        %v3367 = vpop.f32.mrf.mxu0
        %3368 = vmatprep.mubr.f32.mxu0 0.0
        %3369 = vmatmul.mubr.f32.gmra.mxu0 %v3291
        %v3370 = vpop.f32.mrf.mxu0
        %v3371 = vadd.f32 %v3274, %v3370
        %v3372 = vpop.f32.mrf.mxu0
        %3373 = vmatprep.mubr.f32.mxu0 0.0
        %3374 = vmatmul.mubr.f32.gmra.mxu0 %v3294
        %v3375 = vpop.f32.mrf.mxu0
        %v3376 = vadd.f32 %v3279, %v3375
        %v3377 = vpop.f32.mrf.mxu0
        %3378 = vmatprep.mubr.f32.mxu0 0.0
        %3379 = vmatmul.mubr.f32.gmra.mxu0 %v3297
        %v3380 = vpop.f32.mrf.mxu0
        %v3381 = vadd.f32 %v3284, %v3380
        %v3382 = vpop.f32.mrf.mxu0
        %3383 = vdwg.mxu0
        %3385 = vset.pattern.permute.xlu0 0
        %3386 = vperm.xlu0 %3385, %v3185
        %v3387 = vpop.permute.xlu0 %3386
        %3390 = vset.pattern.permute.xlu0 0
        %3391 = vperm.xlu0 %3390, %v3186
        %v3392 = vpop.permute.xlu0 %3391
        %3395 = vset.pattern.permute.xlu0 0
        %3396 = vperm.xlu0 %3395, %v3187
        %v3397 = vpop.permute.xlu0 %3396
        %3400 = vset.pattern.permute.xlu0 0
        %3401 = vperm.xlu0 %3400, %v3188
        %v3402 = vpop.permute.xlu0 %3401
        %v3404 = vadd.f32 %v3366, %v3387
        %v3405 = vadd.f32 %v3371, %v3392
        %v3406 = vadd.f32 %v3376, %v3397
        %v3407 = vadd.f32 %v3381, %v3402
        %v3408 = vmax.f32 %v3404, 0.0
        %v3409 = vmax.f32 %v3405, 0.0
        %v3410 = vmax.f32 %v3406, 0.0
        %v3411 = vmax.f32 %v3407, 0.0
        %v3412 = vld [vmem:[%s7] sm:$0xff]
        %v3413 = vld [vmem:[%s7 + $0x8] sm:$0xff]
        %v3414 = vld [vmem:[%s8] sm:$0xff]
        %v3415 = vld [vmem:[%s8 + $0x8] sm:$0xff]
        %3417 = vset.pattern.permute.xlu0 0
        %3418 = vperm.xlu0 %3417, %v3414
        %v3419 = vpop.permute.xlu0 %3418
        %3422 = vset.pattern.permute.xlu0 0
        %3423 = vperm.xlu0 %3422, %v3415
        %v3424 = vpop.permute.xlu0 %3423
        %vm3426 = vcmask 261120
        %v3428 = vsel %vm3426, %v3412, 0
        %v3431 = vsel %vm3426, %v3413, 0
        %3433 = vmatprep.subr.mxu0 0.0
        %3434 = vmatpush1.msra.mxu0 0.0
        %3435 = vmatprep.subr.mxu0 0.0
        %3436 = vmatpush1.msra.mxu0 0.0
        %3437 = vmatprep.subr.mxu0 0.0
        %3438 = vmatpush1.msra.mxu0 0.0
        %3439 = vmatprep.subr.mxu0 0.0
        %3440 = vmatpush1.msra.mxu0 0.0
        %3441 = vmatprep.subr.mxu0 0.0
        %3442 = vmatpush1.msra.mxu0 0.0
        %3443 = vmatprep.subr.mxu0 0.0
        %3444 = vmatpush1.msra.mxu0 0.0
        %3445 = vmatprep.subr.mxu0 0.0
        %3446 = vmatpush1.msra.mxu0 0.0
        %3447 = vmatprep.subr.mxu0 0.0
        %3448 = vmatpush1.msra.mxu0 0.0
        %3449 = vmatprep.subr.mxu0 0.0
        %3450 = vmatpush1.msra.mxu0 0.0
        %3451 = vmatprep.subr.mxu0 0.0
        %3452 = vmatpush1.msra.mxu0 0.0
        %3453 = vmatprep.subr.mxu0 0.0
        %3454 = vmatpush1.msra.mxu0 0.0
        %3455 = vmatprep.subr.mxu0 0.0
        %3456 = vmatpush1.msra.mxu0 0.0
        %3457 = vmatprep.subr.mxu0 0.0
        %3458 = vmatpush1.msra.mxu0 %v3411
        %3459 = vmatprep.subr.mxu0 0.0
        %3460 = vmatpush1.msra.mxu0 %v3410
        %3461 = vmatprep.subr.mxu0 0.0
        %3462 = vmatpush1.msra.mxu0 %v3409
        %3463 = vmatprep.subr.mxu0 0.0
        %3464 = vmatpush1.msra.mxu0 %v3408
        %3465 = vmatprep.subr.mxu0 0.0
        %3466 = vmatpush2.msra.mxu0 0.0
        %3467 = vmatprep.subr.mxu0 0.0
        %3468 = vmatpush2.msra.mxu0 0.0
        %3469 = vmatprep.subr.mxu0 0.0
        %3470 = vmatpush2.msra.mxu0 0.0
        %3471 = vmatprep.subr.mxu0 0.0
        %3472 = vmatpush2.msra.mxu0 0.0
        %3473 = vmatprep.subr.mxu0 0.0
        %3474 = vmatpush2.msra.mxu0 0.0
        %3475 = vmatprep.subr.mxu0 0.0
        %3476 = vmatpush2.msra.mxu0 0.0
        %3477 = vmatprep.subr.mxu0 0.0
        %3478 = vmatpush2.msra.mxu0 0.0
        %3479 = vmatprep.subr.mxu0 0.0
        %3480 = vmatpush2.msra.mxu0 0.0
        %3481 = vmatprep.subr.mxu0 0.0
        %3482 = vmatpush2.msra.mxu0 0.0
        %3483 = vmatprep.subr.mxu0 0.0
        %3484 = vmatpush2.msra.mxu0 0.0
        %3485 = vmatprep.subr.mxu0 0.0
        %3486 = vmatpush2.msra.mxu0 0.0
        %3487 = vmatprep.subr.mxu0 0.0
        %3488 = vmatpush2.msra.mxu0 0.0
        %3489 = vmatprep.subr.mxu0 0.0
        %3490 = vmatpush2.msra.mxu0 0.0
        %3491 = vmatprep.subr.mxu0 0.0
        %3492 = vmatpush2.msra.mxu0 0.0
        %3493 = vmatprep.subr.mxu0 0.0
        %3494 = vmatpush2.msra.mxu0 0.0
        %3495 = vmatprep.subr.mxu0 0.0
        %3496 = vmatpush2.msra.mxu0 0.0
        %3497 = vmatprep.mubr.f32.mxu0 0.0
        %3498 = vmatmul.mubr.f32.gmra.mxu0 %v3428
        %v3499 = vpop.f32.mrf.mxu0
        %v3500 = vadd.f32 %v3419, %v3499
        %v3501 = vpop.f32.mrf.mxu0
        %3502 = vmatprep.mubr.f32.mxu0 0.0
        %3503 = vmatmul.mubr.f32.gmra.mxu0 %v3431
        %v3504 = vpop.f32.mrf.mxu0
        %v3505 = vadd.f32 %v3424, %v3504
        %v3506 = vpop.f32.mrf.mxu0
        %3507 = vdwg.mxu0
        %v3508 = vmax.f32 %v3500, 0.0
        %v3509 = vmax.f32 %v3505, 0.0
        %3510 = vst [vmem:[%s396] sm:$0xff] %v3508
        %3511 = vst [vmem:[%s396 + $0x8] sm:$0xff] %v3509
        %s3512 = sand.u32 %s258, 1
        %s3513 = scalar_lea.sflag [#allocation3], %s3512
        %s3514 = sand.u32 %s258, 1
        %s3515 = smul.addr %s3514, 16
        %s3516 = scalar_lea.vmem [#allocation2], %s3515
        // Predicated region
        $region57: #{tpu_custom_call.1} parent=55 // pred_check
          %p3517 = pneg %p268
        $region58: #{tpu_custom_call.1} parent=55 // pred_check_branch
          %3519 = sbr.rel (%p3517) target = $region60
        $region59: #{tpu_custom_call.1} parent=55 // pred_region
          %s3521 = ssub.s32 256, 256
          %3522 = vsyncadd %s3513, %s3521
          %s3523 = smul.addr %s27, 4
          %s3524 = sadd.s32 %s28, %s3523
          %s3525 = smul.addr %s3524, 128
          %s3526 = scalar_lea.hbm %s9, %s3525
          %s3527 = sshll.u32 %s3516, 4
          %s3528 = int_to_ptr.vmem [resolvable:$true] %s3527
          %3533 = dma.vmem_to_hbm [thread:$0]  %s3528, 256, %s3526, %s3513, 128, 256, 8
        $region60: #{tpu_custom_call.1} parent=55 // pred_fallthru
          _
      $region56: #{tpu_custom_call.1} parent=5 // pred_fallthru
        _
      %p3534 = scmp.le.s32.totalorder 2, %s18
      // Predicated region
      $region61: #{tpu_custom_call.1} parent=5 // pred_check
        %p3535 = pneg %p3534
      $region62: #{tpu_custom_call.1} parent=5 // pred_check_branch
        %3537 = sbr.rel (%p3535) target = $region64
      $region63: #{tpu_custom_call.1} parent=5 // pred_region
        %s3538 = ssub.s32 %s18, 2
        // Predicated region
        $region65: #{tpu_custom_call.1} parent=63 // pred_check
          %p3539 = pneg %p274
        $region66: #{tpu_custom_call.1} parent=63 // pred_check_branch
          %3541 = sbr.rel (%p3539) target = $region68
        $region67: #{tpu_custom_call.1} parent=63 // pred_region
          %s3542 = sand.u32 %s259, 1
          %s3543 = scalar_lea.sflag [#allocation3], %s3542
          %s3544 = sand.u32 %s259, 1
          %s3545 = smul.addr %s3544, 16
          %s3546 = scalar_lea.vmem [#allocation2], %s3545
          %3547 = dma.done %s3543, 256
        $region68: #{tpu_custom_call.1} parent=63 // pred_fallthru
          _
      $region64: #{tpu_custom_call.1} parent=5 // pred_fallthru
        _
    $region6: #{tpu_custom_call.1} parent=1 // loop_footer
      %s22 = sadd.s32 1, %s18
    $region7: #{tpu_custom_call.1} parent=1 // loop_footer_branch
      %17 = sbr.rel target = $region3
    $region8: #{tpu_custom_call.1} parent=1 // loop_exit
      _
    %3548 = vsyncpa [#allocation3], 1
    %s3549 = scalar_lea.sflag [#allocation3], 1
    %3550 = vsyncpa %s3549, 1

</llo_original>
